<compile_context>
chip_gen: v7x
topology: tpu7x:2x2x1
jax: 0.10.0
libtpu: 0.0.40
codegen_flags: <defaults>
</compile_context>

<pallas_src>
import functools

import jax
import jax.numpy as jnp
from jax.experimental import pallas as pl
from jax.experimental.pallas import tpu as pltpu


def _round_up(x, m):
    return (x + m - 1) // m * m


# ---------------------------------------------------------------------------
# In-kernel helpers
# ---------------------------------------------------------------------------
def _mxu(a, b):
    """a @ b on the MXU (bf16 operands, f32 accumulation).

    Weights are pre-cast to bf16 in the wrapper, so the astype is a no-op on
    them; it only converts f32 activation accumulators.
    """
    return jax.lax.dot_general(
        a.astype(jnp.bfloat16), b.astype(jnp.bfloat16),
        dimension_numbers=(((1,), (0,)), ((), ())),
        preferred_element_type=jnp.float32)


def _mxu_nt(a, b):
    """a @ b.T (contract last dims of both) without an explicit transpose."""
    return jax.lax.dot_general(
        a.astype(jnp.bfloat16), b.astype(jnp.bfloat16),
        dimension_numbers=(((1,), (1,)), ((), ())),
        preferred_element_type=jnp.float32)


def _attend(q, k, v, *, softmax_bf16):
    """q + softmax(q k^T / sqrt(d)) v.

    The 1/sum normalization is applied to the (rows, d) PV result instead of
    the (rows, S) probability matrix (same math, far fewer VPU ops).

    TODO(synk): for real RT-DETR token counts (S >= ~4k) the (S, S) score
    matrix must be KV-tiled with an online softmax (flash-style) to stay
    inside VMEM (v7x: 64 MiB); at S=256 it is only 256 KiB so the simple
    materialized form is kept.
    """
    scale = 1.0 / float(q.shape[-1]) ** 0.5
    s = _mxu_nt(q, k) * scale
    s = s - jnp.max(s, axis=-1, keepdims=True)
    if softmax_bf16:
        p = jnp.exp(s.astype(jnp.bfloat16))      # bf16 EUP path (v6e / v7x)
    else:
        p = jnp.exp(s)                           # f32 (v5e has no bf16 EUP/VPU)
    l = jnp.sum(p, axis=-1, keepdims=True).astype(jnp.float32)
    o = _mxu(p, v)
    return q + o * pl.reciprocal(l, approx=True)


# ---------------------------------------------------------------------------
# Fused RTDETR forward kernel (bb images per grid step)
# ---------------------------------------------------------------------------
def _rtdetr_kernel(x_ref, wk_ref, wd_ref, bias_ref, out_ref, *,
                   S, cmid, d, dff, nq, ncls, softmax_bf16):
    bb = x_ref.shape[0]          # images handled by this grid step
    KC = x_ref.shape[2]          # im2col contraction (9*Cin padded to mult of 8)

    # ---- static slices of the packed weight slabs (views of resident VMEM) --
    r0 = 0
    bb_w = wk_ref[r0:r0 + KC, 0:cmid];    r0 += KC
    proj_w = wk_ref[r0:r0 + cmid, 0:d];   r0 += cmid
    ffn2_w = wk_ref[r0:r0 + dff, 0:d];    r0 += dff
    query = wk_ref[r0:r0 + nq, 0:d]

    c0 = 0
    qkv_w = wd_ref[:, c0:c0 + 3 * d];     c0 += 3 * d
    ffn1_w = wd_ref[:, c0:c0 + dff];      c0 += dff
    dec_q_w = wd_ref[:, c0:c0 + d];       c0 += d
    dec_kv_w = wd_ref[:, c0:c0 + 2 * d];  c0 += 2 * d
    head_w = wd_ref[:, c0:c0 + ncls + 4]

    b0 = 0

    def _bias(n):
        nonlocal b0
        b = bias_ref[:, b0:b0 + n]
        b0 += n
        return b

    bb_b, proj_b, qkv_b = _bias(cmid), _bias(d), _bias(3 * d)
    ffn1_b, ffn2_b = _bias(dff), _bias(d)
    dec_q_b, dec_kv_b, head_b = _bias(d), _bias(2 * d), _bias(ncls + 4)

    # ---- backbone: 3x3 'same' conv == ONE (bb*S, KC) x (KC, cmid) matmul ----
    x = x_ref[...].reshape(bb * S, KC)                       # bf16 im2col rows
    feat = jnp.maximum(_mxu(x, bb_w) + bb_b, 0.0)            # (bb*S, cmid)

    # ---- encoder: projection + fused QKV over ALL images in one pass -------
    mem = _mxu(feat, proj_w) + proj_b                        # (bb*S, d)
    qkv = _mxu(mem, qkv_w) + qkv_b                           # (bb*S, 3d)

    mems = []
    for i in range(bb):                                      # per-image attention
        r = slice(i * S, (i + 1) * S)
        mems.append(_attend(qkv[r, 0:d], qkv[r, d:2 * d], qkv[r, 2 * d:3 * d],
                            softmax_bf16=softmax_bf16))
    mem = mems[0] if bb == 1 else jnp.concatenate(mems, axis=0)

    hid = jnp.maximum(_mxu(mem, ffn1_w) + ffn1_b, 0.0)       # (bb*S, dff)
    mem = mem + _mxu(hid, ffn2_w) + ffn2_b                   # (bb*S, d)

    # ---- decoder: shared queries cross-attend to per-image memory ----------
    dq = _mxu(query, dec_q_w) + dec_q_b                      # (nq, d)
    dkv = _mxu(mem, dec_kv_w) + dec_kv_b                     # (bb*S, 2d)

    decs = []
    for i in range(bb):
        r = slice(i * S, (i + 1) * S)
        decs.append(_attend(dq, dkv[r, 0:d], dkv[r, d:2 * d],
                            softmax_bf16=softmax_bf16))
    dec = decs[0] if bb == 1 else jnp.concatenate(decs, axis=0)   # (bb*nq, d)

    # ---- fused class/box heads; sigmoid only on the 4 box columns ----------
    y = _mxu(dec, head_w) + head_b                           # (bb*nq, ncls+4)
    col = jax.lax.broadcasted_iota(jnp.int32, y.shape, 1)
    y = jnp.where(col >= ncls, jax.nn.sigmoid(y), y)
    out_ref[...] = y.reshape(bb, nq, ncls + 4).astype(out_ref.dtype)


# ---------------------------------------------------------------------------
# Parameters & wrapper
# ---------------------------------------------------------------------------
def init_params(key, cin=4, cmid=32, d=32, dff=128, nq=8, ncls=4):
    ks = jax.random.split(key, 16)

    def w(k, shape, scale=0.1):
        return (jax.random.normal(k, shape) * scale).astype(jnp.float32)

    z = lambda n: jnp.zeros((1, n), jnp.float32)      # biases pre-shaped (1, N)
    return {
        # backbone 3x3 conv, per-tap weight layout (9, cin, cmid)
        "bb_w": w(ks[0], (9, cin, cmid)), "bb_b": z(cmid),
        # encoder (Q/K/V fused into one (d, 3d) projection)
        "enc_proj_w": w(ks[1], (cmid, d)), "enc_proj_b": z(d),
        "enc_qkv_w": w(ks[2], (d, 3 * d)), "enc_qkv_b": z(3 * d),
        "ffn1_w": w(ks[3], (d, dff)), "ffn1_b": z(dff),
        "ffn2_w": w(ks[4], (dff, d)), "ffn2_b": z(d),
        # decoder (K/V fused; class + box heads fused into (d, ncls+4))
        "query_embed": w(ks[5], (nq, d), 1.0),
        "dec_q_w": w(ks[6], (d, d)), "dec_q_b": z(d),
        "dec_kv_w": w(ks[7], (d, 2 * d)), "dec_kv_b": z(2 * d),
        "head_w": w(ks[8], (d, ncls + 4)), "head_b": z(ncls + 4),
        # nn.Parameter(torch.randn(1)) -- defined but unused in forward()
        "temper_param": jax.random.normal(ks[9], (1,)).astype(jnp.float32),
    }


def rtdetr_forward(params, x_nchw, targets=None):
    """Mirrors RTDETR.forward in eval mode: backbone -> encoder -> decoder."""
    # TODO(synk): training-only multi_scale F.interpolate branch not implemented.
    x = jnp.transpose(x_nchw, (0, 2, 3, 1)).astype(jnp.float32)   # NCHW -> NHWC
    B, H, W, Cin = x.shape
    S = H * W

    cmid = params["bb_w"].shape[-1]
    d = params["enc_proj_w"].shape[-1]
    dff = params["ffn1_w"].shape[-1]
    nq = params["query_embed"].shape[0]
    ncls = params["head_w"].shape[1] - 4

    # ---- wrapper-side im2col (tens of KiB; fused by XLA with the transpose /
    # pad) so the in-kernel conv is ONE matmul with K = 9*Cin.  Contraction
    # dim padded to a multiple of 8 so all weight-slab row offsets are aligned.
    KC = _round_up(9 * Cin, 8)
    xp = jnp.pad(x, ((0, 0), (1, 1), (1, 1), (0, 0)))
    cols = jnp.concatenate(
        [xp[:, dh:dh + H, dw:dw + W, :] for dh in range(3) for dw in range(3)],
        axis=-1).reshape(B, S, 9 * Cin)
    cols = jnp.pad(cols, ((0, 0), (0, 0), (0, KC - 9 * Cin)))
    cols = cols.astype(jnp.bfloat16)

    # ---- pack the 17 tiny weight/bias operands into 3 lane-dense slabs
    # (pre-cast weight matrices to bf16 once; biases stay f32).
    wkc = max(cmid, d)

    def _pad2(a, rows, cols_):
        return jnp.pad(a, ((0, rows - a.shape[0]), (0, cols_ - a.shape[1])))

    wk = jnp.concatenate([                       # matrices NOT keyed on d rows
        _pad2(params["bb_w"].reshape(9 * Cin, cmid), KC, wkc),
        _pad2(params["enc_proj_w"], cmid, wkc),
        _pad2(params["ffn2_w"], dff, wkc),
        _pad2(params["query_embed"], nq, wkc),
    ], axis=0).astype(jnp.bfloat16)              # (KC + cmid + dff + nq, wkc)

    wd = jnp.concatenate([                       # all (d, .) matrices, by cols
        params["enc_qkv_w"], params["ffn1_w"], params["dec_q_w"],
        params["dec_kv_w"], params["head_w"]], axis=1)
    wd = jnp.pad(wd, ((0, 0), (0, _round_up(wd.shape[1], 128) - wd.shape[1])))
    wd = wd.astype(jnp.bfloat16)                 # (d, 384)

    bias = jnp.concatenate([                     # all biases, f32, (1, total)
        params["bb_b"], params["enc_proj_b"], params["enc_qkv_b"],
        params["ffn1_b"], params["ffn2_b"], params["dec_q_b"],
        params["dec_kv_b"], params["head_b"]], axis=1)

    # ---- grid strategy: single-TC chips (v5e/v6e) merge the whole batch into
    # one grid step (B*S rows per shared-weight matmul, no per-step overhead);
    # multi-TC chips (v7x) keep a parallel batch axis so both cores are busy.
    kind = jax.devices()[0].device_kind.lower()
    single_tc = ("v5" in kind) or ("v6" in kind)
    softmax_bf16 = ("v6" in kind) or ("v7" in kind) or ("7x" in kind)
    bb = B if single_tc else 1
    nsteps = B // bb

    kernel = functools.partial(
        _rtdetr_kernel, S=S, cmid=cmid, d=d, dff=dff, nq=nq, ncls=ncls,
        softmax_bf16=softmax_bf16)

    head = pl.pallas_call(
        kernel,
        out_shape=jax.ShapeDtypeStruct((B, nq, ncls + 4), jnp.float32),
        grid=(nsteps,),
        in_specs=[
            pl.BlockSpec((bb, S, KC), lambda i: (i, 0, 0)),
            pl.BlockSpec(wk.shape, lambda i: (0, 0)),
            pl.BlockSpec(wd.shape, lambda i: (0, 0)),
            pl.BlockSpec(bias.shape, lambda i: (0, 0)),
        ],
        out_specs=pl.BlockSpec((bb, nq, ncls + 4), lambda i: (i, 0, 0)),
        compiler_params=pltpu.CompilerParams(
            dimension_semantics=("parallel",)),
    )(cols, wk, wd, bias)

    return {"pred_logits": head[..., :ncls], "pred_boxes": head[..., ncls:]}


if __name__ == "__main__":
    key = jax.random.PRNGKey(0)
    k_x, k_p = jax.random.split(key)
    x = jax.random.normal(k_x, (2, 4, 16, 16), dtype=jnp.float32)  # NCHW input
    params = init_params(k_p)

    out = jax.jit(rtdetr_forward)(params, x)
    out = jax.block_until_ready(out)

    assert out["pred_logits"].shape == (2, 8, 4)
    assert out["pred_boxes"].shape == (2, 8, 4)
    assert bool(jnp.all(jnp.isfinite(out["pred_logits"])))
    assert bool(jnp.all((out["pred_boxes"] >= 0.0) & (out["pred_boxes"] <= 1.0)))
    print("KERNEL_OK")
</pallas_src>

<mosaic_0001>
module attributes {stable_mosaic.version = 11 : i64} {
  func.func @_rtdetr_kernel(%arg0: i32, %arg1: memref<1x256x40xbf16, #tpu.memory_space<vmem>>, %arg2: memref<208x32xbf16, #tpu.memory_space<vmem>>, %arg3: memref<32x384xbf16, #tpu.memory_space<vmem>>, %arg4: memref<1x424xf32, #tpu.memory_space<vmem>>, %arg5: memref<1x8x8xf32, #tpu.memory_space<vmem>>) attributes {dimension_semantics = [#tpu.dimension_semantics<parallel>], iteration_bounds = array<i64: 2>, scalar_prefetch = 0 : i64, scratch_operands = 0 : i64, tpu.core_type = #tpu.core_type<tc>, window_params = [{transform_indices = @transform_0, window_bounds = array<i64: 1, 256, 40>}, {pipeline_mode = #tpu.pipeline_mode<synchronous>, transform_indices = @transform_1, window_bounds = array<i64: 208, 32>}, {pipeline_mode = #tpu.pipeline_mode<synchronous>, transform_indices = @transform_2, window_bounds = array<i64: 32, 384>}, {pipeline_mode = #tpu.pipeline_mode<synchronous>, transform_indices = @transform_3, window_bounds = array<i64: 1, 424>}, {transform_indices = @transform_4, window_bounds = array<i64: 1, 8, 8>}]} {
    %c0 = arith.constant 0 : index
    %c0_0 = arith.constant 0 : index
    %0 = vector.load %arg2[%c0, %c0_0] : memref<208x32xbf16, #tpu.memory_space<vmem>>, vector<40x32xbf16>
    %c40 = arith.constant 40 : index
    %c0_1 = arith.constant 0 : index
    %1 = vector.load %arg2[%c40, %c0_1] : memref<208x32xbf16, #tpu.memory_space<vmem>>, vector<32x32xbf16>
    %c72 = arith.constant 72 : index
    %c0_2 = arith.constant 0 : index
    %2 = vector.load %arg2[%c72, %c0_2] : memref<208x32xbf16, #tpu.memory_space<vmem>>, vector<128x32xbf16>
    %c200 = arith.constant 200 : index
    %c0_3 = arith.constant 0 : index
    %3 = vector.load %arg2[%c200, %c0_3] : memref<208x32xbf16, #tpu.memory_space<vmem>>, vector<8x32xbf16>
    %c0_4 = arith.constant 0 : index
    %c0_5 = arith.constant 0 : index
    %4 = vector.load %arg3[%c0_4, %c0_5] : memref<32x384xbf16, #tpu.memory_space<vmem>>, vector<32x96xbf16>
    %c0_6 = arith.constant 0 : index
    %c96 = arith.constant 96 : index
    %5 = vector.load %arg3[%c0_6, %c96] : memref<32x384xbf16, #tpu.memory_space<vmem>>, vector<32x128xbf16>
    %c0_7 = arith.constant 0 : index
    %c224 = arith.constant 224 : index
    %6 = vector.load %arg3[%c0_7, %c224] : memref<32x384xbf16, #tpu.memory_space<vmem>>, vector<32x32xbf16>
    %c0_8 = arith.constant 0 : index
    %c256 = arith.constant 256 : index
    %7 = vector.load %arg3[%c0_8, %c256] : memref<32x384xbf16, #tpu.memory_space<vmem>>, vector<32x64xbf16>
    %c0_9 = arith.constant 0 : index
    %c320 = arith.constant 320 : index
    %8 = vector.load %arg3[%c0_9, %c320] : memref<32x384xbf16, #tpu.memory_space<vmem>>, vector<32x8xbf16>
    %c0_10 = arith.constant 0 : index
    %c0_11 = arith.constant 0 : index
    %9 = vector.load %arg4[%c0_10, %c0_11] : memref<1x424xf32, #tpu.memory_space<vmem>>, vector<1x32xf32>
    %c0_12 = arith.constant 0 : index
    %c32 = arith.constant 32 : index
    %10 = vector.load %arg4[%c0_12, %c32] : memref<1x424xf32, #tpu.memory_space<vmem>>, vector<1x32xf32>
    %c0_13 = arith.constant 0 : index
    %c64 = arith.constant 64 : index
    %11 = vector.load %arg4[%c0_13, %c64] : memref<1x424xf32, #tpu.memory_space<vmem>>, vector<1x96xf32>
    %c0_14 = arith.constant 0 : index
    %c160 = arith.constant 160 : index
    %12 = vector.load %arg4[%c0_14, %c160] : memref<1x424xf32, #tpu.memory_space<vmem>>, vector<1x128xf32>
    %c0_15 = arith.constant 0 : index
    %c288 = arith.constant 288 : index
    %13 = vector.load %arg4[%c0_15, %c288] : memref<1x424xf32, #tpu.memory_space<vmem>>, vector<1x32xf32>
    %c0_16 = arith.constant 0 : index
    %c320_17 = arith.constant 320 : index
    %14 = vector.load %arg4[%c0_16, %c320_17] : memref<1x424xf32, #tpu.memory_space<vmem>>, vector<1x32xf32>
    %c0_18 = arith.constant 0 : index
    %c352 = arith.constant 352 : index
    %15 = vector.load %arg4[%c0_18, %c352] : memref<1x424xf32, #tpu.memory_space<vmem>>, vector<1x64xf32>
    %c0_19 = arith.constant 0 : index
    %c416 = arith.constant 416 : index
    %16 = vector.load %arg4[%c0_19, %c416] : memref<1x424xf32, #tpu.memory_space<vmem>>, vector<1x8xf32>
    %c0_20 = arith.constant 0 : index
    %c0_21 = arith.constant 0 : index
    %c0_22 = arith.constant 0 : index
    %17 = vector.load %arg1[%c0_20, %c0_21, %c0_22] : memref<1x256x40xbf16, #tpu.memory_space<vmem>>, vector<1x256x40xbf16>
    %18 = vector.shape_cast %17 : vector<1x256x40xbf16> to vector<256x40xbf16>
    %cst = arith.constant dense<0.000000e+00> : vector<256x32xf32>
    %19 = tpu.matmul %18, %0, %cst {dimension_numbers = #tpu.dot_dimension_numbers<[1], [0], [0], [1], [0, 0, 1, 1], [], []>} : vector<256x40xbf16>, vector<40x32xbf16>, vector<256x32xf32> -> vector<256x32xf32>
    %20 = vector.broadcast %9 : vector<1x32xf32> to vector<256x32xf32>
    %21 = arith.addf %19, %20 : vector<256x32xf32>
    %cst_23 = arith.constant 0.000000e+00 : f32
    %22 = vector.broadcast %cst_23 : f32 to vector<256x32xf32>
    %23 = arith.maximumf %21, %22 : vector<256x32xf32>
    %24 = arith.truncf %23 : vector<256x32xf32> to vector<256x32xbf16>
    %cst_24 = arith.constant dense<0.000000e+00> : vector<256x32xf32>
    %25 = tpu.matmul %24, %1, %cst_24 {dimension_numbers = #tpu.dot_dimension_numbers<[1], [0], [0], [1], [0, 0, 1, 1], [], []>} : vector<256x32xbf16>, vector<32x32xbf16>, vector<256x32xf32> -> vector<256x32xf32>
    %26 = vector.broadcast %10 : vector<1x32xf32> to vector<256x32xf32>
    %27 = arith.addf %25, %26 : vector<256x32xf32>
    %28 = arith.truncf %27 : vector<256x32xf32> to vector<256x32xbf16>
    %cst_25 = arith.constant dense<0.000000e+00> : vector<256x96xf32>
    %29 = tpu.matmul %28, %4, %cst_25 {dimension_numbers = #tpu.dot_dimension_numbers<[1], [0], [0], [1], [0, 0, 1, 1], [], []>} : vector<256x32xbf16>, vector<32x96xbf16>, vector<256x96xf32> -> vector<256x96xf32>
    %30 = vector.broadcast %11 : vector<1x96xf32> to vector<256x96xf32>
    %31 = arith.addf %29, %30 : vector<256x96xf32>
    %32 = vector.extract_strided_slice %31 {offsets = [0, 0], sizes = [256, 32], strides = [1, 1]} : vector<256x96xf32> to vector<256x32xf32>
    %33 = vector.extract_strided_slice %31 {offsets = [0, 32], sizes = [256, 32], strides = [1, 1]} : vector<256x96xf32> to vector<256x32xf32>
    %34 = vector.extract_strided_slice %31 {offsets = [0, 64], sizes = [256, 32], strides = [1, 1]} : vector<256x96xf32> to vector<256x32xf32>
    %35 = arith.truncf %32 : vector<256x32xf32> to vector<256x32xbf16>
    %36 = arith.truncf %33 : vector<256x32xf32> to vector<256x32xbf16>
    %cst_26 = arith.constant dense<0.000000e+00> : vector<256x256xf32>
    %37 = tpu.matmul %35, %36, %cst_26 {dimension_numbers = #tpu.dot_dimension_numbers<[1], [1], [0], [0], [0, 0, 1, 0], [], []>} : vector<256x32xbf16>, vector<256x32xbf16>, vector<256x256xf32> -> vector<256x256xf32>
    %cst_27 = arith.constant 0.176776692 : f32
    %38 = vector.broadcast %cst_27 : f32 to vector<256x256xf32>
    %39 = arith.mulf %37, %38 : vector<256x256xf32>
    %cst_28 = arith.constant dense<0xFF800000> : vector<256xf32>
    %40 = vector.multi_reduction <maximumf>, %39, %cst_28 [1] : vector<256x256xf32> to vector<256xf32>
    %41 = vector.shape_cast %40 : vector<256xf32> to vector<256x1xf32>
    %42 = vector.broadcast %41 : vector<256x1xf32> to vector<256x256xf32>
    %43 = arith.subf %39, %42 : vector<256x256xf32>
    %44 = math.exp %43 : vector<256x256xf32>
    %cst_29 = arith.constant dense<0.000000e+00> : vector<256xf32>
    %45 = vector.multi_reduction <add>, %44, %cst_29 [1] : vector<256x256xf32> to vector<256xf32>
    %46 = vector.shape_cast %45 : vector<256xf32> to vector<256x1xf32>
    %47 = arith.truncf %44 : vector<256x256xf32> to vector<256x256xbf16>
    %48 = arith.truncf %34 : vector<256x32xf32> to vector<256x32xbf16>
    %cst_30 = arith.constant dense<0.000000e+00> : vector<256x32xf32>
    %49 = tpu.matmul %47, %48, %cst_30 {dimension_numbers = #tpu.dot_dimension_numbers<[1], [0], [0], [1], [0, 0, 1, 1], [], []>} : vector<256x256xbf16>, vector<256x32xbf16>, vector<256x32xf32> -> vector<256x32xf32>
    %50 = tpu.reciprocal %46 {approx = true} : vector<256x1xf32> -> vector<256x1xf32>
    %51 = vector.broadcast %50 : vector<256x1xf32> to vector<256x32xf32>
    %52 = arith.mulf %49, %51 : vector<256x32xf32>
    %53 = arith.addf %32, %52 : vector<256x32xf32>
    %54 = arith.truncf %53 : vector<256x32xf32> to vector<256x32xbf16>
    %cst_31 = arith.constant dense<0.000000e+00> : vector<256x128xf32>
    %55 = tpu.matmul %54, %5, %cst_31 {dimension_numbers = #tpu.dot_dimension_numbers<[1], [0], [0], [1], [0, 0, 1, 1], [], []>} : vector<256x32xbf16>, vector<32x128xbf16>, vector<256x128xf32> -> vector<256x128xf32>
    %56 = vector.broadcast %12 : vector<1x128xf32> to vector<256x128xf32>
    %57 = arith.addf %55, %56 : vector<256x128xf32>
    %cst_32 = arith.constant 0.000000e+00 : f32
    %58 = vector.broadcast %cst_32 : f32 to vector<256x128xf32>
    %59 = arith.maximumf %57, %58 : vector<256x128xf32>
    %60 = arith.truncf %59 : vector<256x128xf32> to vector<256x128xbf16>
    %cst_33 = arith.constant dense<0.000000e+00> : vector<256x32xf32>
    %61 = tpu.matmul %60, %2, %cst_33 {dimension_numbers = #tpu.dot_dimension_numbers<[1], [0], [0], [1], [0, 0, 1, 1], [], []>} : vector<256x128xbf16>, vector<128x32xbf16>, vector<256x32xf32> -> vector<256x32xf32>
    %62 = arith.addf %53, %61 : vector<256x32xf32>
    %63 = vector.broadcast %13 : vector<1x32xf32> to vector<256x32xf32>
    %64 = arith.addf %62, %63 : vector<256x32xf32>
    %cst_34 = arith.constant dense<0.000000e+00> : vector<8x32xf32>
    %65 = tpu.matmul %3, %6, %cst_34 {dimension_numbers = #tpu.dot_dimension_numbers<[1], [0], [0], [1], [0, 0, 1, 1], [], []>} : vector<8x32xbf16>, vector<32x32xbf16>, vector<8x32xf32> -> vector<8x32xf32>
    %66 = vector.broadcast %14 : vector<1x32xf32> to vector<8x32xf32>
    %67 = arith.addf %65, %66 : vector<8x32xf32>
    %68 = arith.truncf %64 : vector<256x32xf32> to vector<256x32xbf16>
    %cst_35 = arith.constant dense<0.000000e+00> : vector<256x64xf32>
    %69 = tpu.matmul %68, %7, %cst_35 {dimension_numbers = #tpu.dot_dimension_numbers<[1], [0], [0], [1], [0, 0, 1, 1], [], []>} : vector<256x32xbf16>, vector<32x64xbf16>, vector<256x64xf32> -> vector<256x64xf32>
    %70 = vector.broadcast %15 : vector<1x64xf32> to vector<256x64xf32>
    %71 = arith.addf %69, %70 : vector<256x64xf32>
    %72 = vector.extract_strided_slice %71 {offsets = [0, 0], sizes = [256, 32], strides = [1, 1]} : vector<256x64xf32> to vector<256x32xf32>
    %73 = vector.extract_strided_slice %71 {offsets = [0, 32], sizes = [256, 32], strides = [1, 1]} : vector<256x64xf32> to vector<256x32xf32>
    %74 = arith.truncf %67 : vector<8x32xf32> to vector<8x32xbf16>
    %75 = arith.truncf %72 : vector<256x32xf32> to vector<256x32xbf16>
    %cst_36 = arith.constant dense<0.000000e+00> : vector<8x256xf32>
    %76 = tpu.matmul %74, %75, %cst_36 {dimension_numbers = #tpu.dot_dimension_numbers<[1], [1], [0], [0], [0, 0, 1, 0], [], []>} : vector<8x32xbf16>, vector<256x32xbf16>, vector<8x256xf32> -> vector<8x256xf32>
    %cst_37 = arith.constant 0.176776692 : f32
    %77 = vector.broadcast %cst_37 : f32 to vector<8x256xf32>
    %78 = arith.mulf %76, %77 : vector<8x256xf32>
    %cst_38 = arith.constant dense<0xFF800000> : vector<8xf32>
    %79 = vector.multi_reduction <maximumf>, %78, %cst_38 [1] : vector<8x256xf32> to vector<8xf32>
    %80 = vector.shape_cast %79 : vector<8xf32> to vector<8x1xf32>
    %81 = vector.broadcast %80 : vector<8x1xf32> to vector<8x256xf32>
    %82 = arith.subf %78, %81 : vector<8x256xf32>
    %83 = math.exp %82 : vector<8x256xf32>
    %cst_39 = arith.constant dense<0.000000e+00> : vector<8xf32>
    %84 = vector.multi_reduction <add>, %83, %cst_39 [1] : vector<8x256xf32> to vector<8xf32>
    %85 = vector.shape_cast %84 : vector<8xf32> to vector<8x1xf32>
    %86 = arith.truncf %83 : vector<8x256xf32> to vector<8x256xbf16>
    %87 = arith.truncf %73 : vector<256x32xf32> to vector<256x32xbf16>
    %cst_40 = arith.constant dense<0.000000e+00> : vector<8x32xf32>
    %88 = tpu.matmul %86, %87, %cst_40 {dimension_numbers = #tpu.dot_dimension_numbers<[1], [0], [0], [1], [0, 0, 1, 1], [], []>} : vector<8x256xbf16>, vector<256x32xbf16>, vector<8x32xf32> -> vector<8x32xf32>
    %89 = tpu.reciprocal %85 {approx = true} : vector<8x1xf32> -> vector<8x1xf32>
    %90 = vector.broadcast %89 : vector<8x1xf32> to vector<8x32xf32>
    %91 = arith.mulf %88, %90 : vector<8x32xf32>
    %92 = arith.addf %67, %91 : vector<8x32xf32>
    %93 = arith.truncf %92 : vector<8x32xf32> to vector<8x32xbf16>
    %cst_41 = arith.constant dense<0.000000e+00> : vector<8x8xf32>
    %94 = tpu.matmul %93, %8, %cst_41 {dimension_numbers = #tpu.dot_dimension_numbers<[1], [0], [0], [1], [0, 0, 1, 1], [], []>} : vector<8x32xbf16>, vector<32x8xbf16>, vector<8x8xf32> -> vector<8x8xf32>
    %95 = vector.broadcast %16 : vector<1x8xf32> to vector<8x8xf32>
    %96 = arith.addf %94, %95 : vector<8x8xf32>
    %97 = tpu.iota {dimensions = array<i32: 1>} : vector<8x8xi32>
    %c4_i32 = arith.constant 4 : i32
    %98 = vector.broadcast %c4_i32 : i32 to vector<8x8xi32>
    %99 = arith.cmpi sge, %97, %98 : vector<8x8xi32>
    %100 = arith.negf %96 : vector<8x8xf32>
    %101 = math.exp %100 : vector<8x8xf32>
    %cst_42 = arith.constant 1.000000e+00 : f32
    %102 = vector.broadcast %cst_42 : f32 to vector<8x8xf32>
    %103 = arith.addf %102, %101 : vector<8x8xf32>
    %104 = arith.divf %102, %103 : vector<8x8xf32>
    %105 = arith.select %99, %104, %96 : vector<8x8xi1>, vector<8x8xf32>
    %106 = vector.shape_cast %105 : vector<8x8xf32> to vector<1x8x8xf32>
    %c0_43 = arith.constant 0 : index
    %c0_44 = arith.constant 0 : index
    %c0_45 = arith.constant 0 : index
    %107 = vector.load %arg5[%c0_43, %c0_44, %c0_45] : memref<1x8x8xf32, #tpu.memory_space<vmem>>, vector<1x8x8xf32>
    tpu.vector_store %arg5[%c0_43, %c0_44, %c0_45], %106 {strides = array<i32>} : memref<1x8x8xf32, #tpu.memory_space<vmem>>, vector<1x8x8xf32>,
    return
  }
  func.func @transform_0(%arg0: i32) -> (i32, i32, i32) {
    %c0_i32 = arith.constant 0 : i32
    %c0_i32_0 = arith.constant 0 : i32
    %c0_i32_1 = arith.constant 0 : i32
    return %arg0, %c0_i32, %c0_i32_0 : i32, i32, i32
  }
  func.func @transform_1(%arg0: i32) -> (i32, i32) {
    %c0_i32 = arith.constant 0 : i32
    %c0_i32_0 = arith.constant 0 : i32
    %c0_i32_1 = arith.constant 0 : i32
    return %c0_i32, %c0_i32_0 : i32, i32
  }
  func.func @transform_2(%arg0: i32) -> (i32, i32) {
    %c0_i32 = arith.constant 0 : i32
    %c0_i32_0 = arith.constant 0 : i32
    %c0_i32_1 = arith.constant 0 : i32
    return %c0_i32, %c0_i32_0 : i32, i32
  }
  func.func @transform_3(%arg0: i32) -> (i32, i32) {
    %c0_i32 = arith.constant 0 : i32
    %c0_i32_0 = arith.constant 0 : i32
    %c0_i32_1 = arith.constant 0 : i32
    return %c0_i32, %c0_i32_0 : i32, i32
  }
  func.func @transform_4(%arg0: i32) -> (i32, i32, i32) {
    %c0_i32 = arith.constant 0 : i32
    %c0_i32_0 = arith.constant 0 : i32
    %c0_i32_1 = arith.constant 0 : i32
    return %arg0, %c0_i32, %c0_i32_0 : i32, i32, i32
  }
}

</mosaic_0001>

<llo_original>
// kernel: rtdetr_forward.1
$region0: #{rtdetr_forward.1}
  #allocation0 [shape = 'u32[]', space=smem, size = 0x4, offset = 0x4, fixed_abs, tag = 'smem constant byte address 0x4 - core index']
  #allocation1 [shape = 'u32[144,128]{1,0:T(1,128)}', space=vmem, size = 0x12000, scoped, tag = 'internal scratch']
  %s0 = inlined_call_operand.vmem [shape: bf16[2,256,40], index: 0, kind: input, shape index: {}]
  %s1 = inlined_call_operand.vmem [shape: bf16[208,32], index: 1, kind: input, shape index: {}]
  %s2 = inlined_call_operand.vmem [shape: bf16[32,384], index: 2, kind: input, shape index: {}]
  %s3 = inlined_call_operand.vmem [shape: f32[1,424], index: 3, kind: input, shape index: {}]
  %s4 = inlined_call_operand.vmem [shape: f32[2,8,8], index: 4, kind: output, shape index: {}]
  %s5 = sld [smem:[#allocation0]]
  $region49: #{rtdetr_forward.1} parent=0
    _
  %s7 = ssub.s32 1, %s5
  %s8 = scalar_select 0, %s7, %s5
  loop: start=0, step=1, limit=4
  $region2: #{rtdetr_forward.1} parent=0 // loop_pre_header
    _
  $region3: #{rtdetr_forward.1} parent=0 // loop_header
    %s10 = sphi 0, %s14
    %p11 = scmp.ge.s32.totalorder %s10, 4
    %s20 = sphi 0, %s22
    %s23 = sphi 0, %s20
    %s24 = sphi 0, %s23
    %s40 = sphi 0, %s24
    %s44 = sphi 0, %s44
    %s46 = sphi 0, %s44
    %s47 = sphi 0, %s46
    %s61 = sphi 0, %s47
    %s65 = sphi 0, %s65
    %s67 = sphi 0, %s65
    %s68 = sphi 0, %s67
    %s82 = sphi 0, %s68
    %s86 = sphi 0, %s86
    %s88 = sphi 0, %s86
    %s89 = sphi 0, %s88
    %s103 = sphi 0, %s89
    %s109 = sphi 0, %s111
    %s112 = sphi 0, %s109
    %s113 = sphi 0, %s112
    %s129 = sphi 0, %s113
  $region4: #{rtdetr_forward.1} parent=0 // loop_header_branch
    %13 = sbr.rel (%p11) target = $region8
  $region5: #{rtdetr_forward.1} parent=0 // loop_body
    %s15 = ssub.s32 %s10, 1
    %s16 = ssub.s32 %s10, 2
    %s17 = sadd.s32 %s10, 1
    %s18 = ssub.s32 %s10, %s17
    %p19 = scmp.eq.s32.totalorder %s18, 0
    %s21 = sadd.s32 %s20, 1
    %s22 = scalar_select %p19, %s20, %s21
    %p25 = pneg %p19
    %p26 = scmp.eq.s32.totalorder %s10, 1
    %p27 = por %p25, %p26
    %p28 = scmp.ne.s32.totalorder %s20, %s23
    %p29 = scmp.eq.s32.totalorder %s10, 0
    %p30 = por %p28, %p29
    %p31 = scmp.ne.s32.totalorder %s20, %s23
    %p32 = scmp.eq.s32.totalorder %s15, 1
    %p33 = por %p31, %p32
    %p34 = scmp.ne.s32.totalorder %s23, %s24
    %p35 = scmp.eq.s32.totalorder %s15, 0
    %p36 = por %p34, %p35
    %p37 = scmp.ne.s32.totalorder %s23, %s24
    %p38 = scmp.eq.s32.totalorder %s16, 1
    %p39 = por %p37, %p38
    %p41 = scmp.ne.s32.totalorder %s24, %s40
    %p42 = scmp.eq.s32.totalorder %s16, 0
    %p43 = por %p41, %p42
    %s45 = sadd.s32 %s44, 1
    %p48 = scmp.eq.s32.totalorder %s10, 1
    %p49 = scmp.ne.s32.totalorder %s44, %s46
    %p50 = scmp.eq.s32.totalorder %s10, 0
    %p51 = por %p49, %p50
    %p52 = scmp.ne.s32.totalorder %s44, %s46
    %p53 = scmp.eq.s32.totalorder %s15, 1
    %p54 = por %p52, %p53
    %p55 = scmp.ne.s32.totalorder %s46, %s47
    %p56 = scmp.eq.s32.totalorder %s15, 0
    %p57 = por %p55, %p56
    %p58 = scmp.ne.s32.totalorder %s46, %s47
    %p59 = scmp.eq.s32.totalorder %s16, 1
    %p60 = por %p58, %p59
    %p62 = scmp.ne.s32.totalorder %s47, %s61
    %p63 = scmp.eq.s32.totalorder %s16, 0
    %p64 = por %p62, %p63
    %s66 = sadd.s32 %s65, 1
    %p69 = scmp.eq.s32.totalorder %s10, 1
    %p70 = scmp.ne.s32.totalorder %s65, %s67
    %p71 = scmp.eq.s32.totalorder %s10, 0
    %p72 = por %p70, %p71
    %p73 = scmp.ne.s32.totalorder %s65, %s67
    %p74 = scmp.eq.s32.totalorder %s15, 1
    %p75 = por %p73, %p74
    %p76 = scmp.ne.s32.totalorder %s67, %s68
    %p77 = scmp.eq.s32.totalorder %s15, 0
    %p78 = por %p76, %p77
    %p79 = scmp.ne.s32.totalorder %s67, %s68
    %p80 = scmp.eq.s32.totalorder %s16, 1
    %p81 = por %p79, %p80
    %p83 = scmp.ne.s32.totalorder %s68, %s82
    %p84 = scmp.eq.s32.totalorder %s16, 0
    %p85 = por %p83, %p84
    %s87 = sadd.s32 %s86, 1
    %p90 = scmp.eq.s32.totalorder %s10, 1
    %p91 = scmp.ne.s32.totalorder %s86, %s88
    %p92 = scmp.eq.s32.totalorder %s10, 0
    %p93 = por %p91, %p92
    %p94 = scmp.ne.s32.totalorder %s86, %s88
    %p95 = scmp.eq.s32.totalorder %s15, 1
    %p96 = por %p94, %p95
    %p97 = scmp.ne.s32.totalorder %s88, %s89
    %p98 = scmp.eq.s32.totalorder %s15, 0
    %p99 = por %p97, %p98
    %p100 = scmp.ne.s32.totalorder %s88, %s89
    %p101 = scmp.eq.s32.totalorder %s16, 1
    %p102 = por %p100, %p101
    %p104 = scmp.ne.s32.totalorder %s89, %s103
    %p105 = scmp.eq.s32.totalorder %s16, 0
    %p106 = por %p104, %p105
    %s107 = ssub.s32 %s10, %s17
    %p108 = scmp.eq.s32.totalorder %s107, 0
    %s110 = sadd.s32 %s109, 1
    %s111 = scalar_select %p108, %s109, %s110
    %p114 = pneg %p108
    %p115 = scmp.eq.s32.totalorder %s10, 1
    %p116 = por %p114, %p115
    %p117 = scmp.ne.s32.totalorder %s109, %s112
    %p118 = scmp.eq.s32.totalorder %s10, 0
    %p119 = por %p117, %p118
    %p120 = scmp.ne.s32.totalorder %s109, %s112
    %p121 = scmp.eq.s32.totalorder %s15, 1
    %p122 = por %p120, %p121
    %p123 = scmp.ne.s32.totalorder %s112, %s113
    %p124 = scmp.eq.s32.totalorder %s15, 0
    %p125 = por %p123, %p124
    %p126 = scmp.ne.s32.totalorder %s112, %s113
    %p127 = scmp.eq.s32.totalorder %s16, 1
    %p128 = por %p126, %p127
    %p130 = scmp.ne.s32.totalorder %s113, %s129
    %p131 = scmp.eq.s32.totalorder %s16, 0
    %p132 = por %p130, %p131
    %p133 = scmp.le.s32.totalorder 1, %s10
    %p134 = scmp.lt.s32.totalorder %s10, 3
    %p135 = pnand %p133, %p134
    %p136 = pneg %p135
    // Predicated region
    $region9: #{rtdetr_forward.1} parent=5 // pred_check
      _
    $region10: #{rtdetr_forward.1} parent=5 // pred_check_branch
      %138 = sbr.rel (%p135) target = $region12
    $region11: #{rtdetr_forward.1} parent=5 // pred_region
      %s139 = ssub.s32 %s10, 1
      // Predicated region
      $region13: #{rtdetr_forward.1} parent=11 // pred_check
        %p140 = pneg %p57
      $region14: #{rtdetr_forward.1} parent=11 // pred_check_branch
        %142 = sbr.rel (%p140) target = $region16
      $region15: #{rtdetr_forward.1} parent=11 // pred_region
        _
      $region16: #{rtdetr_forward.1} parent=11 // pred_fallthru
        _
      // Predicated region
      $region17: #{rtdetr_forward.1} parent=11 // pred_check
        %p143 = pneg %p78
      $region18: #{rtdetr_forward.1} parent=11 // pred_check_branch
        %145 = sbr.rel (%p143) target = $region20
      $region19: #{rtdetr_forward.1} parent=11 // pred_region
        _
      $region20: #{rtdetr_forward.1} parent=11 // pred_fallthru
        _
      // Predicated region
      $region21: #{rtdetr_forward.1} parent=11 // pred_check
        %p146 = pneg %p99
      $region22: #{rtdetr_forward.1} parent=11 // pred_check_branch
        %148 = sbr.rel (%p146) target = $region24
      $region23: #{rtdetr_forward.1} parent=11 // pred_region
        _
      $region24: #{rtdetr_forward.1} parent=11 // pred_fallthru
        _
    $region12: #{rtdetr_forward.1} parent=5 // pred_fallthru
      _
    %p149 = scmp.lt.s32.totalorder %s10, 2
    // Predicated region
    $region25: #{rtdetr_forward.1} parent=5 // pred_check
      %p150 = pneg %p149
    $region26: #{rtdetr_forward.1} parent=5 // pred_check_branch
      %152 = sbr.rel (%p150) target = $region28
    $region27: #{rtdetr_forward.1} parent=5 // pred_region
      // Predicated region
      $region29: #{rtdetr_forward.1} parent=27 // pred_check
        %p153 = pneg %p30
      $region30: #{rtdetr_forward.1} parent=27 // pred_check_branch
        %155 = sbr.rel (%p153) target = $region32
      $region31: #{rtdetr_forward.1} parent=27 // pred_region
        %p156 = scmp.lt.s32.totalorder %s10, 1
        %s157 = scalar_select %p156, %s10, 1
        %s158 = smul.addr %s157, 32
        %s159 = smul.addr %s158, 4
        %s160 = scalar_lea.vmem %s0, %s159
      $region32: #{rtdetr_forward.1} parent=27 // pred_fallthru
        _
    $region28: #{rtdetr_forward.1} parent=5 // pred_fallthru
      _
    %p161 = scmp.le.s32.totalorder 1, %s10
    %p162 = scmp.lt.s32.totalorder %s10, 3
    %p163 = pnand %p161, %p162
    %p164 = pneg %p163
    // Predicated region
    $region33: #{rtdetr_forward.1} parent=5 // pred_check
      _
    $region34: #{rtdetr_forward.1} parent=5 // pred_check_branch
      %166 = sbr.rel (%p163) target = $region36
    $region35: #{rtdetr_forward.1} parent=5 // pred_region
      %s167 = ssub.s32 %s10, 1
      %p168 = scmp.lt.s32.totalorder %s15, 1
      %s169 = scalar_select %p168, %s15, 1
      %s170 = smul.addr %s169, 32
      %s171 = smul.addr %s170, 4
      %s172 = scalar_lea.vmem %s0, %s171
      %p173 = pneg %p36
      %p174 = pneg %p33
      %p175 = pneg %p57
      %p176 = pneg %p54
      %p177 = pneg %p78
      %p178 = pneg %p75
      %p179 = pneg %p99
      %p180 = pneg %p96
      %p181 = pneg %p125
      %p182 = pneg %p122
      %p183 = scmp.lt.s32.totalorder %s15, 1
      %s184 = scalar_select %p183, %s15, 1
      %s185 = smul.addr %s184, 8
      %s186 = scalar_lea.vmem %s4, %s185
      %p187 = scmp.lt.s32.totalorder %s15, 1
      %s188 = scalar_select %p187, %s15, 1
      %s189 = smul.addr %s188, 32
      %s190 = smul.addr %s189, 4
      %s191 = scalar_lea.vmem %s0, %s190
      %p192 = scmp.lt.s32.totalorder %s15, 1
      %s193 = scalar_select %p192, %s15, 1
      %s194 = smul.addr %s193, 8
      %s195 = scalar_lea.vmem %s4, %s194
      %v197 = vld [vmem:[%s1] sm:$0xf]
      %v198 = vld [vmem:[%s1 + $0x4] sm:$0xf]
      %v199 = vld [vmem:[%s1 + $0x8] sm:$0xf]
      %v200 = vld [vmem:[%s1 + $0xc] sm:$0xf]
      %v201 = vld [vmem:[%s1 + $0x10] sm:$0xf]
      %v202 = vld [vmem:[%s1 + $0x14] sm:$0xf]
      %v203 = vld [vmem:[%s1 + $0x18] sm:$0xf]
      %v204 = vld [vmem:[%s1 + $0x1c] sm:$0xf]
      %v205 = vld [vmem:[%s1 + $0x20] sm:$0xf]
      %v206 = vld [vmem:[%s1 + $0x24] sm:$0xf]
      %v207 = vld [vmem:[%s1 + $0x28] sm:$0xf]
      %v208 = vld [vmem:[%s1 + $0x2c] sm:$0xf]
      %v209 = vld [vmem:[%s1 + $0x30] sm:$0xf]
      %v210 = vld [vmem:[%s1 + $0x34] sm:$0xf]
      %v211 = vld [vmem:[%s1 + $0x38] sm:$0xf]
      %v212 = vld [vmem:[%s1 + $0x3c] sm:$0xf]
      %v213 = vld [vmem:[%s1 + $0x40] sm:$0xf]
      %v214 = vld [vmem:[%s1 + $0x44] sm:$0xf]
      %v215 = vld [vmem:[%s1 + $0x48] sm:$0xf]
      %v216 = vld [vmem:[%s1 + $0x4c] sm:$0xf]
      %v217 = vld [vmem:[%s1 + $0x50] sm:$0xf]
      %v218 = vld [vmem:[%s1 + $0x54] sm:$0xf]
      %v219 = vld [vmem:[%s1 + $0x58] sm:$0xf]
      %v220 = vld [vmem:[%s1 + $0x5c] sm:$0xf]
      %v221 = vld [vmem:[%s1 + $0x60] sm:$0xf]
      %v222 = vld [vmem:[%s1 + $0x64] sm:$0xf]
      %v223 = vld [vmem:[%s2] sm:$0xf]
      %v224 = vld [vmem:[%s2 + $0xc] sm:$0xf]
      %v225 = vld [vmem:[%s2 + $0x18] sm:$0xf]
      %v226 = vld [vmem:[%s2 + $0x24] sm:$0xf]
      %v227 = vld [vmem:[%s2] sm:$0xff]
      %v228 = vld [vmem:[%s2 + $0xc] sm:$0xff]
      %v229 = vld [vmem:[%s2 + $0x18] sm:$0xff]
      %v230 = vld [vmem:[%s2 + $0x24] sm:$0xff]
      %v231 = vld [vmem:[%s2 + $0x4] sm:$0xf]
      %v232 = vld [vmem:[%s2 + $0x10] sm:$0xf]
      %v233 = vld [vmem:[%s2 + $0x1c] sm:$0xf]
      %v234 = vld [vmem:[%s2 + $0x28] sm:$0xf]
      %v235 = vld [vmem:[%s2 + $0x8] sm:$0xf]
      %v236 = vld [vmem:[%s2 + $0x14] sm:$0xf]
      %v237 = vld [vmem:[%s2 + $0x20] sm:$0xf]
      %v238 = vld [vmem:[%s2 + $0x2c] sm:$0xf]
      %v239 = vld [vmem:[%s3] sm:$0x1]
      %v240 = vld [vmem:[%s3] sm:$0x3]
      %v241 = vld [vmem:[%s3 + $0x1] sm:$0x3]
      %v242 = vld [vmem:[%s3 + $0x2] sm:$0x1]
      %v243 = vld [vmem:[%s3 + $0x2] sm:$0x3]
      %v244 = vld [vmem:[%s3 + $0x3] sm:$0x1]
      %v245 = vld [vmem:[%s191] sm:$0xf]
      %v246 = vld [vmem:[%s191 + $0x4] sm:$0xf]
      %v247 = vld [vmem:[%s191 + $0x8] sm:$0xf]
      %v248 = vld [vmem:[%s191 + $0xc] sm:$0xf]
      %v249 = vld [vmem:[%s191 + $0x10] sm:$0xf]
      %v250 = vld [vmem:[%s191 + $0x14] sm:$0xf]
      %v251 = vld [vmem:[%s191 + $0x18] sm:$0xf]
      %v252 = vld [vmem:[%s191 + $0x1c] sm:$0xf]
      %v253 = vld [vmem:[%s191 + $0x20] sm:$0xf]
      %v254 = vld [vmem:[%s191 + $0x24] sm:$0xf]
      %v255 = vld [vmem:[%s191 + $0x28] sm:$0xf]
      %v256 = vld [vmem:[%s191 + $0x2c] sm:$0xf]
      %v257 = vld [vmem:[%s191 + $0x30] sm:$0xf]
      %v258 = vld [vmem:[%s191 + $0x34] sm:$0xf]
      %v259 = vld [vmem:[%s191 + $0x38] sm:$0xf]
      %v260 = vld [vmem:[%s191 + $0x3c] sm:$0xf]
      %v261 = vld [vmem:[%s191 + $0x40] sm:$0xf]
      %v262 = vld [vmem:[%s191 + $0x44] sm:$0xf]
      %v263 = vld [vmem:[%s191 + $0x48] sm:$0xf]
      %v264 = vld [vmem:[%s191 + $0x4c] sm:$0xf]
      %v265 = vld [vmem:[%s191 + $0x50] sm:$0xf]
      %v266 = vld [vmem:[%s191 + $0x54] sm:$0xf]
      %v267 = vld [vmem:[%s191 + $0x58] sm:$0xf]
      %v268 = vld [vmem:[%s191 + $0x5c] sm:$0xf]
      %v269 = vld [vmem:[%s191 + $0x60] sm:$0xf]
      %v270 = vld [vmem:[%s191 + $0x64] sm:$0xf]
      %v271 = vld [vmem:[%s191 + $0x68] sm:$0xf]
      %v272 = vld [vmem:[%s191 + $0x6c] sm:$0xf]
      %v273 = vld [vmem:[%s191 + $0x70] sm:$0xf]
      %v274 = vld [vmem:[%s191 + $0x74] sm:$0xf]
      %v275 = vld [vmem:[%s191 + $0x78] sm:$0xf]
      %v276 = vld [vmem:[%s191 + $0x7c] sm:$0xf]
      %v278 = vlaneseq
      %v279 = vshrl.u32 %v278, 7
      %v280 = vsub.s32 0, %v279
      %v281 = vrot.slane %v239, %v280
      %v315 = vunpack.c.l.b16 %v245
      %v316 = vunpack.c.l.b16 %v246
      %v317 = vunpack.c.l.b16 %v247
      %v318 = vunpack.c.l.b16 %v248
      %v319 = vunpack.c.l.b16 %v249
      %v320 = vunpack.c.l.b16 %v250
      %v321 = vunpack.c.l.b16 %v251
      %v322 = vunpack.c.l.b16 %v252
      %v323 = vunpack.c.l.b16 %v253
      %v324 = vunpack.c.l.b16 %v254
      %v325 = vunpack.c.l.b16 %v255
      %v326 = vunpack.c.l.b16 %v256
      %v327 = vunpack.c.l.b16 %v257
      %v328 = vunpack.c.l.b16 %v258
      %v329 = vunpack.c.l.b16 %v259
      %v330 = vunpack.c.l.b16 %v260
      %v331 = vunpack.c.l.b16 %v261
      %v332 = vunpack.c.l.b16 %v262
      %v333 = vunpack.c.l.b16 %v263
      %v334 = vunpack.c.l.b16 %v264
      %v335 = vunpack.c.l.b16 %v265
      %v336 = vunpack.c.l.b16 %v266
      %v337 = vunpack.c.l.b16 %v267
      %v338 = vunpack.c.l.b16 %v268
      %v339 = vunpack.c.l.b16 %v269
      %v340 = vunpack.c.l.b16 %v270
      %v341 = vunpack.c.l.b16 %v271
      %v342 = vunpack.c.l.b16 %v272
      %v343 = vunpack.c.l.b16 %v273
      %v344 = vunpack.c.l.b16 %v274
      %v345 = vunpack.c.l.b16 %v275
      %v346 = vunpack.c.l.b16 %v276
      %v347 = vpack.c.b16 %v316, %v315
      %v348 = vpack.c.b16 %v318, %v317
      %v349 = vpack.c.b16 %v320, %v319
      %v350 = vpack.c.b16 %v322, %v321
      %v351 = vpack.c.b16 %v324, %v323
      %v352 = vpack.c.b16 %v326, %v325
      %v353 = vpack.c.b16 %v328, %v327
      %v354 = vpack.c.b16 %v330, %v329
      %v355 = vpack.c.b16 %v332, %v331
      %v356 = vpack.c.b16 %v334, %v333
      %v357 = vpack.c.b16 %v336, %v335
      %v358 = vpack.c.b16 %v338, %v337
      %v359 = vpack.c.b16 %v340, %v339
      %v360 = vpack.c.b16 %v342, %v341
      %v361 = vpack.c.b16 %v344, %v343
      %v362 = vpack.c.b16 %v346, %v345
      %v368 = vunpack.c.l.b16 %v197
      %v369 = vunpack.c.l.b16 %v198
      %v370 = vunpack.c.l.b16 %v199
      %v371 = vunpack.c.l.b16 %v200
      %v372 = vunpack.c.l.b16 %v201
      %v373 = vpack.c.b16 %v369, %v368
      %v374 = vpack.c.b16 %v371, %v370
      %v375 = vpack.c.b16 %v372, %v372
      %vm378 = vcmask 326656
      %v380 = vsel %vm378, %v347, 0
      %v383 = vsel %vm378, %v348, 0
      %v386 = vsel %vm378, %v349, 0
      %v389 = vsel %vm378, %v350, 0
      %v392 = vsel %vm378, %v351, 0
      %v395 = vsel %vm378, %v352, 0
      %v398 = vsel %vm378, %v353, 0
      %v401 = vsel %vm378, %v354, 0
      %v404 = vsel %vm378, %v355, 0
      %v407 = vsel %vm378, %v356, 0
      %v410 = vsel %vm378, %v357, 0
      %v413 = vsel %vm378, %v358, 0
      %v416 = vsel %vm378, %v359, 0
      %v419 = vsel %vm378, %v360, 0
      %v422 = vsel %vm378, %v361, 0
      %v425 = vsel %vm378, %v362, 0
      %vm427 = vcmask 1043456
      %v429 = vsel %vm427, %v375, 0
      %431 = vmatprep.subr.bf16.mxu0 0
      %432 = vmatpush1.bf16.msra.mxu0 %v373
      %433 = vmatprep.subr.bf16.mxu0 0
      %434 = vmatpush1.bf16.msra.mxu0 %v374
      %435 = vmatprep.subr.bf16.mxu0 0
      %436 = vmatpush1.bf16.msra.mxu0 %v429
      %437 = vmatprep.subr.bf16.mxu0 0
      %438 = vmatpush1.bf16.msra.mxu0 0
      %439 = vmatprep.subr.bf16.mxu0 0
      %440 = vmatpush1.bf16.msra.mxu0 0
      %441 = vmatprep.subr.bf16.mxu0 0
      %442 = vmatpush1.bf16.msra.mxu0 0
      %443 = vmatprep.subr.bf16.mxu0 0
      %444 = vmatpush1.bf16.msra.mxu0 0
      %445 = vmatprep.subr.bf16.mxu0 0
      %446 = vmatpush1.bf16.msra.mxu0 0
      %447 = vmatprep.subr.bf16.mxu0 0
      %448 = vmatpush1.bf16.msra.mxu0 0
      %449 = vmatprep.subr.bf16.mxu0 0
      %450 = vmatpush1.bf16.msra.mxu0 0
      %451 = vmatprep.subr.bf16.mxu0 0
      %452 = vmatpush1.bf16.msra.mxu0 0
      %453 = vmatprep.subr.bf16.mxu0 0
      %454 = vmatpush1.bf16.msra.mxu0 0
      %455 = vmatprep.subr.bf16.mxu0 0
      %456 = vmatpush1.bf16.msra.mxu0 0
      %457 = vmatprep.subr.bf16.mxu0 0
      %458 = vmatpush1.bf16.msra.mxu0 0
      %459 = vmatprep.subr.bf16.mxu0 0
      %460 = vmatpush1.bf16.msra.mxu0 0
      %461 = vmatprep.subr.bf16.mxu0 0
      %462 = vmatpush1.bf16.msra.mxu0 0
      %463 = vmatprep.mubr.bf16.mxu0 0
      %464 = vmatmul.mubr.bf16.gmra.mrb[0].mxu0 %v380
      %v465 = vpop.f32.mrb[0].mxu0
      %v466 = vadd.f32 %v281, %v465
      %v467 = vpop.f32.mrb[0].mxu0
      %v468 = vpop.f32.mrb[0].mxu0
      %v469 = vadd.f32 %v281, %v468
      %v470 = vpop.f32.mrb[0].mxu0
      %471 = vmatprep.mubr.bf16.mxu0 0
      %472 = vmatmul.mubr.bf16.gmra.mrb[0].mxu0 %v383
      %v473 = vpop.f32.mrb[0].mxu0
      %v474 = vadd.f32 %v281, %v473
      %v475 = vpop.f32.mrb[0].mxu0
      %v476 = vpop.f32.mrb[0].mxu0
      %v477 = vadd.f32 %v281, %v476
      %v478 = vpop.f32.mrb[0].mxu0
      %479 = vmatprep.mubr.bf16.mxu0 0
      %480 = vmatmul.mubr.bf16.gmra.mrb[0].mxu0 %v386
      %v481 = vpop.f32.mrb[0].mxu0
      %v482 = vadd.f32 %v281, %v481
      %v483 = vpop.f32.mrb[0].mxu0
      %v484 = vpop.f32.mrb[0].mxu0
      %v485 = vadd.f32 %v281, %v484
      %v486 = vpop.f32.mrb[0].mxu0
      %487 = vmatprep.mubr.bf16.mxu0 0
      %488 = vmatmul.mubr.bf16.gmra.mrb[0].mxu0 %v389
      %v489 = vpop.f32.mrb[0].mxu0
      %v490 = vadd.f32 %v281, %v489
      %v491 = vpop.f32.mrb[0].mxu0
      %v492 = vpop.f32.mrb[0].mxu0
      %v493 = vadd.f32 %v281, %v492
      %v494 = vpop.f32.mrb[0].mxu0
      %495 = vmatprep.mubr.bf16.mxu0 0
      %496 = vmatmul.mubr.bf16.gmra.mrb[0].mxu0 %v392
      %v497 = vpop.f32.mrb[0].mxu0
      %v498 = vadd.f32 %v281, %v497
      %v499 = vpop.f32.mrb[0].mxu0
      %v500 = vpop.f32.mrb[0].mxu0
      %v501 = vadd.f32 %v281, %v500
      %v502 = vpop.f32.mrb[0].mxu0
      %503 = vmatprep.mubr.bf16.mxu0 0
      %504 = vmatmul.mubr.bf16.gmra.mrb[0].mxu0 %v395
      %v505 = vpop.f32.mrb[0].mxu0
      %v506 = vadd.f32 %v281, %v505
      %v507 = vpop.f32.mrb[0].mxu0
      %v508 = vpop.f32.mrb[0].mxu0
      %v509 = vadd.f32 %v281, %v508
      %v510 = vpop.f32.mrb[0].mxu0
      %511 = vmatprep.mubr.bf16.mxu0 0
      %512 = vmatmul.mubr.bf16.gmra.mrb[0].mxu0 %v398
      %v513 = vpop.f32.mrb[0].mxu0
      %v514 = vadd.f32 %v281, %v513
      %v515 = vpop.f32.mrb[0].mxu0
      %v516 = vpop.f32.mrb[0].mxu0
      %v517 = vadd.f32 %v281, %v516
      %v518 = vpop.f32.mrb[0].mxu0
      %519 = vmatprep.mubr.bf16.mxu0 0
      %520 = vmatmul.mubr.bf16.gmra.mrb[0].mxu0 %v401
      %v521 = vpop.f32.mrb[0].mxu0
      %v522 = vadd.f32 %v281, %v521
      %v523 = vpop.f32.mrb[0].mxu0
      %v524 = vpop.f32.mrb[0].mxu0
      %v525 = vadd.f32 %v281, %v524
      %v526 = vpop.f32.mrb[0].mxu0
      %527 = vmatprep.mubr.bf16.mxu0 0
      %528 = vmatmul.mubr.bf16.gmra.mrb[0].mxu0 %v404
      %v529 = vpop.f32.mrb[0].mxu0
      %v530 = vadd.f32 %v281, %v529
      %v531 = vpop.f32.mrb[0].mxu0
      %v532 = vpop.f32.mrb[0].mxu0
      %v533 = vadd.f32 %v281, %v532
      %v534 = vpop.f32.mrb[0].mxu0
      %535 = vmatprep.mubr.bf16.mxu0 0
      %536 = vmatmul.mubr.bf16.gmra.mrb[0].mxu0 %v407
      %v537 = vpop.f32.mrb[0].mxu0
      %v538 = vadd.f32 %v281, %v537
      %v539 = vpop.f32.mrb[0].mxu0
      %v540 = vpop.f32.mrb[0].mxu0
      %v541 = vadd.f32 %v281, %v540
      %v542 = vpop.f32.mrb[0].mxu0
      %543 = vmatprep.mubr.bf16.mxu0 0
      %544 = vmatmul.mubr.bf16.gmra.mrb[0].mxu0 %v410
      %v545 = vpop.f32.mrb[0].mxu0
      %v546 = vadd.f32 %v281, %v545
      %v547 = vpop.f32.mrb[0].mxu0
      %v548 = vpop.f32.mrb[0].mxu0
      %v549 = vadd.f32 %v281, %v548
      %v550 = vpop.f32.mrb[0].mxu0
      %551 = vmatprep.mubr.bf16.mxu0 0
      %552 = vmatmul.mubr.bf16.gmra.mrb[0].mxu0 %v413
      %v553 = vpop.f32.mrb[0].mxu0
      %v554 = vadd.f32 %v281, %v553
      %v555 = vpop.f32.mrb[0].mxu0
      %v556 = vpop.f32.mrb[0].mxu0
      %v557 = vadd.f32 %v281, %v556
      %v558 = vpop.f32.mrb[0].mxu0
      %559 = vmatprep.mubr.bf16.mxu0 0
      %560 = vmatmul.mubr.bf16.gmra.mrb[0].mxu0 %v416
      %v561 = vpop.f32.mrb[0].mxu0
      %v562 = vadd.f32 %v281, %v561
      %v563 = vpop.f32.mrb[0].mxu0
      %v564 = vpop.f32.mrb[0].mxu0
      %v565 = vadd.f32 %v281, %v564
      %v566 = vpop.f32.mrb[0].mxu0
      %567 = vmatprep.mubr.bf16.mxu0 0
      %568 = vmatmul.mubr.bf16.gmra.mrb[0].mxu0 %v419
      %v569 = vpop.f32.mrb[0].mxu0
      %v570 = vadd.f32 %v281, %v569
      %v571 = vpop.f32.mrb[0].mxu0
      %v572 = vpop.f32.mrb[0].mxu0
      %v573 = vadd.f32 %v281, %v572
      %v574 = vpop.f32.mrb[0].mxu0
      %575 = vmatprep.mubr.bf16.mxu0 0
      %576 = vmatmul.mubr.bf16.gmra.mrb[0].mxu0 %v422
      %v577 = vpop.f32.mrb[0].mxu0
      %v578 = vadd.f32 %v281, %v577
      %v579 = vpop.f32.mrb[0].mxu0
      %v580 = vpop.f32.mrb[0].mxu0
      %v581 = vadd.f32 %v281, %v580
      %v582 = vpop.f32.mrb[0].mxu0
      %583 = vmatprep.mubr.bf16.mxu0 0
      %584 = vmatmul.mubr.bf16.gmra.mrb[0].mxu0 %v425
      %v585 = vpop.f32.mrb[0].mxu0
      %v586 = vadd.f32 %v281, %v585
      %v587 = vpop.f32.mrb[0].mxu0
      %v588 = vpop.f32.mrb[0].mxu0
      %v589 = vadd.f32 %v281, %v588
      %v590 = vpop.f32.mrb[0].mxu0
      %591 = vdwg.mxu0
      %v592 = vmax.f32 %v466, 0.0
      %v593 = vmax.f32 %v469, 0.0
      %v594 = vmax.f32 %v474, 0.0
      %v595 = vmax.f32 %v477, 0.0
      %v596 = vmax.f32 %v482, 0.0
      %v597 = vmax.f32 %v485, 0.0
      %v598 = vmax.f32 %v490, 0.0
      %v599 = vmax.f32 %v493, 0.0
      %v600 = vmax.f32 %v498, 0.0
      %v601 = vmax.f32 %v501, 0.0
      %v602 = vmax.f32 %v506, 0.0
      %v603 = vmax.f32 %v509, 0.0
      %v604 = vmax.f32 %v514, 0.0
      %v605 = vmax.f32 %v517, 0.0
      %v606 = vmax.f32 %v522, 0.0
      %v607 = vmax.f32 %v525, 0.0
      %v608 = vmax.f32 %v530, 0.0
      %v609 = vmax.f32 %v533, 0.0
      %v610 = vmax.f32 %v538, 0.0
      %v611 = vmax.f32 %v541, 0.0
      %v612 = vmax.f32 %v546, 0.0
      %v613 = vmax.f32 %v549, 0.0
      %v614 = vmax.f32 %v554, 0.0
      %v615 = vmax.f32 %v557, 0.0
      %v616 = vmax.f32 %v562, 0.0
      %v617 = vmax.f32 %v565, 0.0
      %v618 = vmax.f32 %v570, 0.0
      %v619 = vmax.f32 %v573, 0.0
      %v620 = vmax.f32 %v578, 0.0
      %v621 = vmax.f32 %v581, 0.0
      %v622 = vmax.f32 %v586, 0.0
      %v623 = vmax.f32 %v589, 0.0
      %v624 = vpack.c.bf16 %v593, %v592
      %v625 = vpack.c.bf16 %v595, %v594
      %v626 = vpack.c.bf16 %v597, %v596
      %v627 = vpack.c.bf16 %v599, %v598
      %v628 = vpack.c.bf16 %v601, %v600
      %v629 = vpack.c.bf16 %v603, %v602
      %v630 = vpack.c.bf16 %v605, %v604
      %v631 = vpack.c.bf16 %v607, %v606
      %v632 = vpack.c.bf16 %v609, %v608
      %v633 = vpack.c.bf16 %v611, %v610
      %v634 = vpack.c.bf16 %v613, %v612
      %v635 = vpack.c.bf16 %v615, %v614
      %v636 = vpack.c.bf16 %v617, %v616
      %v637 = vpack.c.bf16 %v619, %v618
      %v638 = vpack.c.bf16 %v621, %v620
      %v639 = vpack.c.bf16 %v623, %v622
      %v644 = vunpack.c.l.b16 %v202
      %v645 = vunpack.c.l.b16 %v203
      %v646 = vunpack.c.l.b16 %v204
      %v647 = vunpack.c.l.b16 %v205
      %v648 = vpack.c.b16 %v645, %v644
      %v649 = vpack.c.b16 %v647, %v646
      %652 = vrot.lane.b32.xlu0 %v281, 96
      %v653 = vpop.permute.xlu0 %652
      %vm655 = vcmask 261120
      %v657 = vsel %vm655, %v624, 0
      %v660 = vsel %vm655, %v625, 0
      %v663 = vsel %vm655, %v626, 0
      %v666 = vsel %vm655, %v627, 0
      %v669 = vsel %vm655, %v628, 0
      %v672 = vsel %vm655, %v629, 0
      %v675 = vsel %vm655, %v630, 0
      %v678 = vsel %vm655, %v631, 0
      %v681 = vsel %vm655, %v632, 0
      %v684 = vsel %vm655, %v633, 0
      %v687 = vsel %vm655, %v634, 0
      %v690 = vsel %vm655, %v635, 0
      %v693 = vsel %vm655, %v636, 0
      %v696 = vsel %vm655, %v637, 0
      %v699 = vsel %vm655, %v638, 0
      %v702 = vsel %vm655, %v639, 0
      %704 = vmatprep.subr.bf16.mxu0 0
      %705 = vmatpush1.bf16.msra.mxu0 %v648
      %706 = vmatprep.subr.bf16.mxu0 0
      %707 = vmatpush1.bf16.msra.mxu0 %v649
      %708 = vmatprep.subr.bf16.mxu0 0
      %709 = vmatpush1.bf16.msra.mxu0 0
      %710 = vmatprep.subr.bf16.mxu0 0
      %711 = vmatpush1.bf16.msra.mxu0 0
      %712 = vmatprep.subr.bf16.mxu0 0
      %713 = vmatpush1.bf16.msra.mxu0 0
      %714 = vmatprep.subr.bf16.mxu0 0
      %715 = vmatpush1.bf16.msra.mxu0 0
      %716 = vmatprep.subr.bf16.mxu0 0
      %717 = vmatpush1.bf16.msra.mxu0 0
      %718 = vmatprep.subr.bf16.mxu0 0
      %719 = vmatpush1.bf16.msra.mxu0 0
      %720 = vmatprep.subr.bf16.mxu0 0
      %721 = vmatpush1.bf16.msra.mxu0 0
      %722 = vmatprep.subr.bf16.mxu0 0
      %723 = vmatpush1.bf16.msra.mxu0 0
      %724 = vmatprep.subr.bf16.mxu0 0
      %725 = vmatpush1.bf16.msra.mxu0 0
      %726 = vmatprep.subr.bf16.mxu0 0
      %727 = vmatpush1.bf16.msra.mxu0 0
      %728 = vmatprep.subr.bf16.mxu0 0
      %729 = vmatpush1.bf16.msra.mxu0 0
      %730 = vmatprep.subr.bf16.mxu0 0
      %731 = vmatpush1.bf16.msra.mxu0 0
      %732 = vmatprep.subr.bf16.mxu0 0
      %733 = vmatpush1.bf16.msra.mxu0 0
      %734 = vmatprep.subr.bf16.mxu0 0
      %735 = vmatpush1.bf16.msra.mxu0 0
      %736 = vmatprep.mubr.bf16.mxu0 0
      %737 = vmatmul.mubr.bf16.gmra.mrb[0].mxu0 %v657
      %v738 = vpop.f32.mrb[0].mxu0
      %v739 = vadd.f32 %v653, %v738
      %v740 = vpop.f32.mrb[0].mxu0
      %v741 = vpop.f32.mrb[0].mxu0
      %v742 = vadd.f32 %v653, %v741
      %v743 = vpop.f32.mrb[0].mxu0
      %744 = vmatprep.mubr.bf16.mxu0 0
      %745 = vmatmul.mubr.bf16.gmra.mrb[0].mxu0 %v660
      %v746 = vpop.f32.mrb[0].mxu0
      %v747 = vadd.f32 %v653, %v746
      %v748 = vpop.f32.mrb[0].mxu0
      %v749 = vpop.f32.mrb[0].mxu0
      %v750 = vadd.f32 %v653, %v749
      %v751 = vpop.f32.mrb[0].mxu0
      %752 = vmatprep.mubr.bf16.mxu0 0
      %753 = vmatmul.mubr.bf16.gmra.mrb[0].mxu0 %v663
      %v754 = vpop.f32.mrb[0].mxu0
      %v755 = vadd.f32 %v653, %v754
      %v756 = vpop.f32.mrb[0].mxu0
      %v757 = vpop.f32.mrb[0].mxu0
      %v758 = vadd.f32 %v653, %v757
      %v759 = vpop.f32.mrb[0].mxu0
      %760 = vmatprep.mubr.bf16.mxu0 0
      %761 = vmatmul.mubr.bf16.gmra.mrb[0].mxu0 %v666
      %v762 = vpop.f32.mrb[0].mxu0
      %v763 = vadd.f32 %v653, %v762
      %v764 = vpop.f32.mrb[0].mxu0
      %v765 = vpop.f32.mrb[0].mxu0
      %v766 = vadd.f32 %v653, %v765
      %v767 = vpop.f32.mrb[0].mxu0
      %768 = vmatprep.mubr.bf16.mxu0 0
      %769 = vmatmul.mubr.bf16.gmra.mrb[0].mxu0 %v669
      %v770 = vpop.f32.mrb[0].mxu0
      %v771 = vadd.f32 %v653, %v770
      %v772 = vpop.f32.mrb[0].mxu0
      %v773 = vpop.f32.mrb[0].mxu0
      %v774 = vadd.f32 %v653, %v773
      %v775 = vpop.f32.mrb[0].mxu0
      %776 = vmatprep.mubr.bf16.mxu0 0
      %777 = vmatmul.mubr.bf16.gmra.mrb[0].mxu0 %v672
      %v778 = vpop.f32.mrb[0].mxu0
      %v779 = vadd.f32 %v653, %v778
      %v780 = vpop.f32.mrb[0].mxu0
      %v781 = vpop.f32.mrb[0].mxu0
      %v782 = vadd.f32 %v653, %v781
      %v783 = vpop.f32.mrb[0].mxu0
      %784 = vmatprep.mubr.bf16.mxu0 0
      %785 = vmatmul.mubr.bf16.gmra.mrb[0].mxu0 %v675
      %v786 = vpop.f32.mrb[0].mxu0
      %v787 = vadd.f32 %v653, %v786
      %v788 = vpop.f32.mrb[0].mxu0
      %v789 = vpop.f32.mrb[0].mxu0
      %v790 = vadd.f32 %v653, %v789
      %v791 = vpop.f32.mrb[0].mxu0
      %792 = vmatprep.mubr.bf16.mxu0 0
      %793 = vmatmul.mubr.bf16.gmra.mrb[0].mxu0 %v678
      %v794 = vpop.f32.mrb[0].mxu0
      %v795 = vadd.f32 %v653, %v794
      %v796 = vpop.f32.mrb[0].mxu0
      %v797 = vpop.f32.mrb[0].mxu0
      %v798 = vadd.f32 %v653, %v797
      %v799 = vpop.f32.mrb[0].mxu0
      %800 = vmatprep.mubr.bf16.mxu0 0
      %801 = vmatmul.mubr.bf16.gmra.mrb[0].mxu0 %v681
      %v802 = vpop.f32.mrb[0].mxu0
      %v803 = vadd.f32 %v653, %v802
      %v804 = vpop.f32.mrb[0].mxu0
      %v805 = vpop.f32.mrb[0].mxu0
      %v806 = vadd.f32 %v653, %v805
      %v807 = vpop.f32.mrb[0].mxu0
      %808 = vmatprep.mubr.bf16.mxu0 0
      %809 = vmatmul.mubr.bf16.gmra.mrb[0].mxu0 %v684
      %v810 = vpop.f32.mrb[0].mxu0
      %v811 = vadd.f32 %v653, %v810
      %v812 = vpop.f32.mrb[0].mxu0
      %v813 = vpop.f32.mrb[0].mxu0
      %v814 = vadd.f32 %v653, %v813
      %v815 = vpop.f32.mrb[0].mxu0
      %816 = vmatprep.mubr.bf16.mxu0 0
      %817 = vmatmul.mubr.bf16.gmra.mrb[0].mxu0 %v687
      %v818 = vpop.f32.mrb[0].mxu0
      %v819 = vadd.f32 %v653, %v818
      %v820 = vpop.f32.mrb[0].mxu0
      %v821 = vpop.f32.mrb[0].mxu0
      %v822 = vadd.f32 %v653, %v821
      %v823 = vpop.f32.mrb[0].mxu0
      %824 = vmatprep.mubr.bf16.mxu0 0
      %825 = vmatmul.mubr.bf16.gmra.mrb[0].mxu0 %v690
      %v826 = vpop.f32.mrb[0].mxu0
      %v827 = vadd.f32 %v653, %v826
      %v828 = vpop.f32.mrb[0].mxu0
      %v829 = vpop.f32.mrb[0].mxu0
      %v830 = vadd.f32 %v653, %v829
      %v831 = vpop.f32.mrb[0].mxu0
      %832 = vmatprep.mubr.bf16.mxu0 0
      %833 = vmatmul.mubr.bf16.gmra.mrb[0].mxu0 %v693
      %v834 = vpop.f32.mrb[0].mxu0
      %v835 = vadd.f32 %v653, %v834
      %v836 = vpop.f32.mrb[0].mxu0
      %v837 = vpop.f32.mrb[0].mxu0
      %v838 = vadd.f32 %v653, %v837
      %v839 = vpop.f32.mrb[0].mxu0
      %840 = vmatprep.mubr.bf16.mxu0 0
      %841 = vmatmul.mubr.bf16.gmra.mrb[0].mxu0 %v696
      %v842 = vpop.f32.mrb[0].mxu0
      %v843 = vadd.f32 %v653, %v842
      %v844 = vpop.f32.mrb[0].mxu0
      %v845 = vpop.f32.mrb[0].mxu0
      %v846 = vadd.f32 %v653, %v845
      %v847 = vpop.f32.mrb[0].mxu0
      %848 = vmatprep.mubr.bf16.mxu0 0
      %849 = vmatmul.mubr.bf16.gmra.mrb[0].mxu0 %v699
      %v850 = vpop.f32.mrb[0].mxu0
      %v851 = vadd.f32 %v653, %v850
      %v852 = vpop.f32.mrb[0].mxu0
      %v853 = vpop.f32.mrb[0].mxu0
      %v854 = vadd.f32 %v653, %v853
      %v855 = vpop.f32.mrb[0].mxu0
      %856 = vmatprep.mubr.bf16.mxu0 0
      %857 = vmatmul.mubr.bf16.gmra.mrb[0].mxu0 %v702
      %v858 = vpop.f32.mrb[0].mxu0
      %v859 = vadd.f32 %v653, %v858
      %v860 = vpop.f32.mrb[0].mxu0
      %v861 = vpop.f32.mrb[0].mxu0
      %v862 = vadd.f32 %v653, %v861
      %v863 = vpop.f32.mrb[0].mxu0
      %864 = vdwg.mxu0
      %v865 = vpack.c.bf16 %v742, %v739
      %v866 = vpack.c.bf16 %v750, %v747
      %v867 = vpack.c.bf16 %v758, %v755
      %v868 = vpack.c.bf16 %v766, %v763
      %v869 = vpack.c.bf16 %v774, %v771
      %v870 = vpack.c.bf16 %v782, %v779
      %v871 = vpack.c.bf16 %v790, %v787
      %v872 = vpack.c.bf16 %v798, %v795
      %v873 = vpack.c.bf16 %v806, %v803
      %v874 = vpack.c.bf16 %v814, %v811
      %v875 = vpack.c.bf16 %v822, %v819
      %v876 = vpack.c.bf16 %v830, %v827
      %v877 = vpack.c.bf16 %v838, %v835
      %v878 = vpack.c.bf16 %v846, %v843
      %v879 = vpack.c.bf16 %v854, %v851
      %v880 = vpack.c.bf16 %v862, %v859
      %v882 = vlaneseq
      %v883 = vshrl.u32 %v882, 7
      %v884 = vsub.s32 0, %v883
      %v885 = vrot.slane %v240, %v884
      %v886 = vlaneseq
      %v887 = vshrl.u32 %v886, 7
      %v888 = vsub.s32 1, %v887
      %v889 = vrot.slane %v240, %v888
      %v894 = vunpack.c.l.b16 %v223
      %v895 = vunpack.c.l.b16 %v224
      %v896 = vunpack.c.l.b16 %v225
      %v897 = vunpack.c.l.b16 %v226
      %v898 = vpack.c.b16 %v895, %v894
      %v899 = vpack.c.b16 %v897, %v896
      %902 = vrot.lane.b32.xlu0 %v885, 64
      %v903 = vpop.permute.xlu0 %902
      %904 = vrot.lane.b32.xlu0 %v889, 64
      %v905 = vpop.permute.xlu0 %904
      %vm906 = vcmask 523264
      %v907 = vsel %vm906, %v903, %v905
      %v910 = vsel %vm655, %v865, 0
      %v913 = vsel %vm655, %v866, 0
      %v916 = vsel %vm655, %v867, 0
      %v919 = vsel %vm655, %v868, 0
      %v922 = vsel %vm655, %v869, 0
      %v925 = vsel %vm655, %v870, 0
      %v928 = vsel %vm655, %v871, 0
      %v931 = vsel %vm655, %v872, 0
      %v934 = vsel %vm655, %v873, 0
      %v937 = vsel %vm655, %v874, 0
      %v940 = vsel %vm655, %v875, 0
      %v943 = vsel %vm655, %v876, 0
      %v946 = vsel %vm655, %v877, 0
      %v949 = vsel %vm655, %v878, 0
      %v952 = vsel %vm655, %v879, 0
      %v955 = vsel %vm655, %v880, 0
      %957 = vmatprep.subr.bf16.mxu0 0
      %958 = vmatpush1.bf16.msra.mxu0 %v898
      %959 = vmatprep.subr.bf16.mxu0 0
      %960 = vmatpush1.bf16.msra.mxu0 %v899
      %961 = vmatprep.subr.bf16.mxu0 0
      %962 = vmatpush1.bf16.msra.mxu0 0
      %963 = vmatprep.subr.bf16.mxu0 0
      %964 = vmatpush1.bf16.msra.mxu0 0
      %965 = vmatprep.subr.bf16.mxu0 0
      %966 = vmatpush1.bf16.msra.mxu0 0
      %967 = vmatprep.subr.bf16.mxu0 0
      %968 = vmatpush1.bf16.msra.mxu0 0
      %969 = vmatprep.subr.bf16.mxu0 0
      %970 = vmatpush1.bf16.msra.mxu0 0
      %971 = vmatprep.subr.bf16.mxu0 0
      %972 = vmatpush1.bf16.msra.mxu0 0
      %973 = vmatprep.subr.bf16.mxu0 0
      %974 = vmatpush1.bf16.msra.mxu0 0
      %975 = vmatprep.subr.bf16.mxu0 0
      %976 = vmatpush1.bf16.msra.mxu0 0
      %977 = vmatprep.subr.bf16.mxu0 0
      %978 = vmatpush1.bf16.msra.mxu0 0
      %979 = vmatprep.subr.bf16.mxu0 0
      %980 = vmatpush1.bf16.msra.mxu0 0
      %981 = vmatprep.subr.bf16.mxu0 0
      %982 = vmatpush1.bf16.msra.mxu0 0
      %983 = vmatprep.subr.bf16.mxu0 0
      %984 = vmatpush1.bf16.msra.mxu0 0
      %985 = vmatprep.subr.bf16.mxu0 0
      %986 = vmatpush1.bf16.msra.mxu0 0
      %987 = vmatprep.subr.bf16.mxu0 0
      %988 = vmatpush1.bf16.msra.mxu0 0
      %989 = vmatprep.mubr.bf16.mxu0 0
      %990 = vmatmul.mubr.bf16.gmra.mrb[0].mxu0 %v910
      %v991 = vpop.f32.mrb[0].mxu0
      %v992 = vadd.f32 %v907, %v991
      %v993 = vpop.f32.mrb[0].mxu0
      %v994 = vpop.f32.mrb[0].mxu0
      %v995 = vadd.f32 %v907, %v994
      %v996 = vpop.f32.mrb[0].mxu0
      %997 = vmatprep.mubr.bf16.mxu0 0
      %998 = vmatmul.mubr.bf16.gmra.mrb[0].mxu0 %v913
      %v999 = vpop.f32.mrb[0].mxu0
      %v1000 = vadd.f32 %v907, %v999
      %v1001 = vpop.f32.mrb[0].mxu0
      %v1002 = vpop.f32.mrb[0].mxu0
      %v1003 = vadd.f32 %v907, %v1002
      %v1004 = vpop.f32.mrb[0].mxu0
      %1005 = vmatprep.mubr.bf16.mxu0 0
      %1006 = vmatmul.mubr.bf16.gmra.mrb[0].mxu0 %v916
      %v1007 = vpop.f32.mrb[0].mxu0
      %v1008 = vadd.f32 %v907, %v1007
      %v1009 = vpop.f32.mrb[0].mxu0
      %v1010 = vpop.f32.mrb[0].mxu0
      %v1011 = vadd.f32 %v907, %v1010
      %v1012 = vpop.f32.mrb[0].mxu0
      %1013 = vmatprep.mubr.bf16.mxu0 0
      %1014 = vmatmul.mubr.bf16.gmra.mrb[0].mxu0 %v919
      %v1015 = vpop.f32.mrb[0].mxu0
      %v1016 = vadd.f32 %v907, %v1015
      %v1017 = vpop.f32.mrb[0].mxu0
      %v1018 = vpop.f32.mrb[0].mxu0
      %v1019 = vadd.f32 %v907, %v1018
      %v1020 = vpop.f32.mrb[0].mxu0
      %1021 = vmatprep.mubr.bf16.mxu0 0
      %1022 = vmatmul.mubr.bf16.gmra.mrb[0].mxu0 %v922
      %v1023 = vpop.f32.mrb[0].mxu0
      %v1024 = vadd.f32 %v907, %v1023
      %v1025 = vpop.f32.mrb[0].mxu0
      %v1026 = vpop.f32.mrb[0].mxu0
      %v1027 = vadd.f32 %v907, %v1026
      %v1028 = vpop.f32.mrb[0].mxu0
      %1029 = vmatprep.mubr.bf16.mxu0 0
      %1030 = vmatmul.mubr.bf16.gmra.mrb[0].mxu0 %v925
      %v1031 = vpop.f32.mrb[0].mxu0
      %v1032 = vadd.f32 %v907, %v1031
      %v1033 = vpop.f32.mrb[0].mxu0
      %v1034 = vpop.f32.mrb[0].mxu0
      %v1035 = vadd.f32 %v907, %v1034
      %v1036 = vpop.f32.mrb[0].mxu0
      %1037 = vmatprep.mubr.bf16.mxu0 0
      %1038 = vmatmul.mubr.bf16.gmra.mrb[0].mxu0 %v928
      %v1039 = vpop.f32.mrb[0].mxu0
      %v1040 = vadd.f32 %v907, %v1039
      %v1041 = vpop.f32.mrb[0].mxu0
      %v1042 = vpop.f32.mrb[0].mxu0
      %v1043 = vadd.f32 %v907, %v1042
      %v1044 = vpop.f32.mrb[0].mxu0
      %1045 = vmatprep.mubr.bf16.mxu0 0
      %1046 = vmatmul.mubr.bf16.gmra.mrb[0].mxu0 %v931
      %v1047 = vpop.f32.mrb[0].mxu0
      %v1048 = vadd.f32 %v907, %v1047
      %v1049 = vpop.f32.mrb[0].mxu0
      %v1050 = vpop.f32.mrb[0].mxu0
      %v1051 = vadd.f32 %v907, %v1050
      %v1052 = vpop.f32.mrb[0].mxu0
      %1053 = vmatprep.mubr.bf16.mxu0 0
      %1054 = vmatmul.mubr.bf16.gmra.mrb[0].mxu0 %v934
      %v1055 = vpop.f32.mrb[0].mxu0
      %v1056 = vadd.f32 %v907, %v1055
      %v1057 = vpop.f32.mrb[0].mxu0
      %v1058 = vpop.f32.mrb[0].mxu0
      %v1059 = vadd.f32 %v907, %v1058
      %v1060 = vpop.f32.mrb[0].mxu0
      %1061 = vmatprep.mubr.bf16.mxu0 0
      %1062 = vmatmul.mubr.bf16.gmra.mrb[0].mxu0 %v937
      %v1063 = vpop.f32.mrb[0].mxu0
      %v1064 = vadd.f32 %v907, %v1063
      %v1065 = vpop.f32.mrb[0].mxu0
      %v1066 = vpop.f32.mrb[0].mxu0
      %v1067 = vadd.f32 %v907, %v1066
      %v1068 = vpop.f32.mrb[0].mxu0
      %1069 = vmatprep.mubr.bf16.mxu0 0
      %1070 = vmatmul.mubr.bf16.gmra.mrb[0].mxu0 %v940
      %v1071 = vpop.f32.mrb[0].mxu0
      %v1072 = vadd.f32 %v907, %v1071
      %v1073 = vpop.f32.mrb[0].mxu0
      %v1074 = vpop.f32.mrb[0].mxu0
      %v1075 = vadd.f32 %v907, %v1074
      %v1076 = vpop.f32.mrb[0].mxu0
      %1077 = vmatprep.mubr.bf16.mxu0 0
      %1078 = vmatmul.mubr.bf16.gmra.mrb[0].mxu0 %v943
      %v1079 = vpop.f32.mrb[0].mxu0
      %v1080 = vadd.f32 %v907, %v1079
      %v1081 = vpop.f32.mrb[0].mxu0
      %v1082 = vpop.f32.mrb[0].mxu0
      %v1083 = vadd.f32 %v907, %v1082
      %v1084 = vpop.f32.mrb[0].mxu0
      %1085 = vmatprep.mubr.bf16.mxu0 0
      %1086 = vmatmul.mubr.bf16.gmra.mrb[0].mxu0 %v946
      %v1087 = vpop.f32.mrb[0].mxu0
      %v1088 = vadd.f32 %v907, %v1087
      %v1089 = vpop.f32.mrb[0].mxu0
      %v1090 = vpop.f32.mrb[0].mxu0
      %v1091 = vadd.f32 %v907, %v1090
      %v1092 = vpop.f32.mrb[0].mxu0
      %1093 = vmatprep.mubr.bf16.mxu0 0
      %1094 = vmatmul.mubr.bf16.gmra.mrb[0].mxu0 %v949
      %v1095 = vpop.f32.mrb[0].mxu0
      %v1096 = vadd.f32 %v907, %v1095
      %v1097 = vpop.f32.mrb[0].mxu0
      %v1098 = vpop.f32.mrb[0].mxu0
      %v1099 = vadd.f32 %v907, %v1098
      %v1100 = vpop.f32.mrb[0].mxu0
      %1101 = vmatprep.mubr.bf16.mxu0 0
      %1102 = vmatmul.mubr.bf16.gmra.mrb[0].mxu0 %v952
      %v1103 = vpop.f32.mrb[0].mxu0
      %v1104 = vadd.f32 %v907, %v1103
      %v1105 = vpop.f32.mrb[0].mxu0
      %v1106 = vpop.f32.mrb[0].mxu0
      %v1107 = vadd.f32 %v907, %v1106
      %v1108 = vpop.f32.mrb[0].mxu0
      %1109 = vmatprep.mubr.bf16.mxu0 0
      %1110 = vmatmul.mubr.bf16.gmra.mrb[0].mxu0 %v955
      %v1111 = vpop.f32.mrb[0].mxu0
      %v1112 = vadd.f32 %v907, %v1111
      %v1113 = vpop.f32.mrb[0].mxu0
      %v1114 = vpop.f32.mrb[0].mxu0
      %v1115 = vadd.f32 %v907, %v1114
      %v1116 = vpop.f32.mrb[0].mxu0
      %1117 = vdwg.mxu0
      %v1118 = vpack.c.bf16 %v995, %v992
      %v1119 = vpack.c.bf16 %v1003, %v1000
      %v1120 = vpack.c.bf16 %v1011, %v1008
      %v1121 = vpack.c.bf16 %v1019, %v1016
      %v1122 = vpack.c.bf16 %v1027, %v1024
      %v1123 = vpack.c.bf16 %v1035, %v1032
      %v1124 = vpack.c.bf16 %v1043, %v1040
      %v1125 = vpack.c.bf16 %v1051, %v1048
      %v1126 = vpack.c.bf16 %v1059, %v1056
      %v1127 = vpack.c.bf16 %v1067, %v1064
      %v1128 = vpack.c.bf16 %v1075, %v1072
      %v1129 = vpack.c.bf16 %v1083, %v1080
      %v1130 = vpack.c.bf16 %v1091, %v1088
      %v1131 = vpack.c.bf16 %v1099, %v1096
      %v1132 = vpack.c.bf16 %v1107, %v1104
      %v1133 = vpack.c.bf16 %v1115, %v1112
      %1150 = vrot.lane.b32.xlu0 %v1118, 96
      %v1151 = vpop.permute.xlu0 %1150
      %1152 = vrot.lane.b32.xlu0 %v1119, 96
      %v1153 = vpop.permute.xlu0 %1152
      %1154 = vrot.lane.b32.xlu0 %v1120, 96
      %v1155 = vpop.permute.xlu0 %1154
      %1156 = vrot.lane.b32.xlu0 %v1121, 96
      %v1157 = vpop.permute.xlu0 %1156
      %1158 = vrot.lane.b32.xlu0 %v1122, 96
      %v1159 = vpop.permute.xlu0 %1158
      %1160 = vrot.lane.b32.xlu0 %v1123, 96
      %v1161 = vpop.permute.xlu0 %1160
      %1162 = vrot.lane.b32.xlu0 %v1124, 96
      %v1163 = vpop.permute.xlu0 %1162
      %1164 = vrot.lane.b32.xlu0 %v1125, 96
      %v1165 = vpop.permute.xlu0 %1164
      %1166 = vrot.lane.b32.xlu0 %v1126, 96
      %v1167 = vpop.permute.xlu0 %1166
      %1168 = vrot.lane.b32.xlu0 %v1127, 96
      %v1169 = vpop.permute.xlu0 %1168
      %1170 = vrot.lane.b32.xlu0 %v1128, 96
      %v1171 = vpop.permute.xlu0 %1170
      %1172 = vrot.lane.b32.xlu0 %v1129, 96
      %v1173 = vpop.permute.xlu0 %1172
      %1174 = vrot.lane.b32.xlu0 %v1130, 96
      %v1175 = vpop.permute.xlu0 %1174
      %1176 = vrot.lane.b32.xlu0 %v1131, 96
      %v1177 = vpop.permute.xlu0 %1176
      %1178 = vrot.lane.b32.xlu0 %v1132, 96
      %v1179 = vpop.permute.xlu0 %1178
      %1180 = vrot.lane.b32.xlu0 %v1133, 96
      %v1181 = vpop.permute.xlu0 %1180
      %v1183 = vsel %vm655, %v1118, 0
      %v1186 = vsel %vm655, %v1119, 0
      %v1189 = vsel %vm655, %v1120, 0
      %v1192 = vsel %vm655, %v1121, 0
      %v1195 = vsel %vm655, %v1122, 0
      %v1198 = vsel %vm655, %v1123, 0
      %v1201 = vsel %vm655, %v1124, 0
      %v1204 = vsel %vm655, %v1125, 0
      %v1207 = vsel %vm655, %v1126, 0
      %v1210 = vsel %vm655, %v1127, 0
      %v1213 = vsel %vm655, %v1128, 0
      %v1216 = vsel %vm655, %v1129, 0
      %v1219 = vsel %vm655, %v1130, 0
      %v1222 = vsel %vm655, %v1131, 0
      %v1225 = vsel %vm655, %v1132, 0
      %v1228 = vsel %vm655, %v1133, 0
      %v1231 = vsel %vm655, %v1151, 0
      %v1234 = vsel %vm655, %v1153, 0
      %v1237 = vsel %vm655, %v1155, 0
      %v1240 = vsel %vm655, %v1157, 0
      %v1243 = vsel %vm655, %v1159, 0
      %v1246 = vsel %vm655, %v1161, 0
      %v1249 = vsel %vm655, %v1163, 0
      %v1252 = vsel %vm655, %v1165, 0
      %v1255 = vsel %vm655, %v1167, 0
      %v1258 = vsel %vm655, %v1169, 0
      %v1261 = vsel %vm655, %v1171, 0
      %v1264 = vsel %vm655, %v1173, 0
      %v1267 = vsel %vm655, %v1175, 0
      %v1270 = vsel %vm655, %v1177, 0
      %v1273 = vsel %vm655, %v1179, 0
      %v1276 = vsel %vm655, %v1181, 0
      %1278 = vmatprep.subr.bf16.mxu0 0
      %1279 = vmatpush1.bf16.xpose.msra.mxu0 %v1231
      %1280 = vmatprep.subr.bf16.mxu0 0
      %1281 = vmatpush1.bf16.xpose.msra.mxu0 %v1234
      %1282 = vmatprep.subr.bf16.mxu0 0
      %1283 = vmatpush1.bf16.xpose.msra.mxu0 %v1237
      %1284 = vmatprep.subr.bf16.mxu0 0
      %1285 = vmatpush1.bf16.xpose.msra.mxu0 %v1240
      %1286 = vmatprep.subr.bf16.mxu0 0
      %1287 = vmatpush1.bf16.xpose.msra.mxu0 %v1243
      %1288 = vmatprep.subr.bf16.mxu0 0
      %1289 = vmatpush1.bf16.xpose.msra.mxu0 %v1246
      %1290 = vmatprep.subr.bf16.mxu0 0
      %1291 = vmatpush1.bf16.xpose.msra.mxu0 %v1249
      %1292 = vmatprep.subr.bf16.mxu0 0
      %1293 = vmatpush1.bf16.xpose.msra.mxu0 %v1252
      %1294 = vmatprep.subr.bf16.mxu0 0
      %1295 = vmatpush1.bf16.xpose.msra.mxu0 %v1255
      %1296 = vmatprep.subr.bf16.mxu0 0
      %1297 = vmatpush1.bf16.xpose.msra.mxu0 %v1258
      %1298 = vmatprep.subr.bf16.mxu0 0
      %1299 = vmatpush1.bf16.xpose.msra.mxu0 %v1261
      %1300 = vmatprep.subr.bf16.mxu0 0
      %1301 = vmatpush1.bf16.xpose.msra.mxu0 %v1264
      %1302 = vmatprep.subr.bf16.mxu0 0
      %1303 = vmatpush1.bf16.xpose.msra.mxu0 %v1267
      %1304 = vmatprep.subr.bf16.mxu0 0
      %1305 = vmatpush1.bf16.xpose.msra.mxu0 %v1270
      %1306 = vmatprep.subr.bf16.mxu0 0
      %1307 = vmatpush1.bf16.xpose.msra.mxu0 %v1273
      %1308 = vmatprep.subr.bf16.mxu0 0
      %1309 = vmatpush1.bf16.xpose.msra.mxu0 %v1276
      %1310 = vmatprep.mubr.bf16.mxu0 0
      %1311 = vmatmul.mubr.bf16.gmra.mrb[0].mxu0 %v1183
      %v1312 = vpop.f32.mrb[0].mxu0
      %v1313 = vadd.f32 0.0, %v1312
      %v1314 = vpop.f32.mrb[0].mxu0
      %v1315 = vadd.f32 0.0, %v1314
      %v1316 = vpop.f32.mrb[0].mxu0
      %v1317 = vadd.f32 0.0, %v1316
      %v1318 = vpop.f32.mrb[0].mxu0
      %v1319 = vadd.f32 0.0, %v1318
      %1320 = vmatprep.mubr.bf16.mxu0 0
      %1321 = vmatmul.mubr.bf16.gmra.mrb[0].mxu0 %v1186
      %v1322 = vpop.f32.mrb[0].mxu0
      %v1323 = vadd.f32 0.0, %v1322
      %v1324 = vpop.f32.mrb[0].mxu0
      %v1325 = vadd.f32 0.0, %v1324
      %v1326 = vpop.f32.mrb[0].mxu0
      %v1327 = vadd.f32 0.0, %v1326
      %v1328 = vpop.f32.mrb[0].mxu0
      %v1329 = vadd.f32 0.0, %v1328
      %1330 = vmatprep.mubr.bf16.mxu0 0
      %1331 = vmatmul.mubr.bf16.gmra.mrb[0].mxu0 %v1189
      %v1332 = vpop.f32.mrb[0].mxu0
      %v1333 = vadd.f32 0.0, %v1332
      %v1334 = vpop.f32.mrb[0].mxu0
      %v1335 = vadd.f32 0.0, %v1334
      %v1336 = vpop.f32.mrb[0].mxu0
      %v1337 = vadd.f32 0.0, %v1336
      %v1338 = vpop.f32.mrb[0].mxu0
      %v1339 = vadd.f32 0.0, %v1338
      %1340 = vmatprep.mubr.bf16.mxu0 0
      %1341 = vmatmul.mubr.bf16.gmra.mrb[0].mxu0 %v1192
      %v1342 = vpop.f32.mrb[0].mxu0
      %v1343 = vadd.f32 0.0, %v1342
      %v1344 = vpop.f32.mrb[0].mxu0
      %v1345 = vadd.f32 0.0, %v1344
      %v1346 = vpop.f32.mrb[0].mxu0
      %v1347 = vadd.f32 0.0, %v1346
      %v1348 = vpop.f32.mrb[0].mxu0
      %v1349 = vadd.f32 0.0, %v1348
      %1350 = vmatprep.mubr.bf16.mxu0 0
      %1351 = vmatmul.mubr.bf16.gmra.mrb[0].mxu0 %v1195
      %v1352 = vpop.f32.mrb[0].mxu0
      %v1353 = vadd.f32 0.0, %v1352
      %v1354 = vpop.f32.mrb[0].mxu0
      %v1355 = vadd.f32 0.0, %v1354
      %v1356 = vpop.f32.mrb[0].mxu0
      %v1357 = vadd.f32 0.0, %v1356
      %v1358 = vpop.f32.mrb[0].mxu0
      %v1359 = vadd.f32 0.0, %v1358
      %1360 = vmatprep.mubr.bf16.mxu0 0
      %1361 = vmatmul.mubr.bf16.gmra.mrb[0].mxu0 %v1198
      %v1362 = vpop.f32.mrb[0].mxu0
      %v1363 = vadd.f32 0.0, %v1362
      %v1364 = vpop.f32.mrb[0].mxu0
      %v1365 = vadd.f32 0.0, %v1364
      %v1366 = vpop.f32.mrb[0].mxu0
      %v1367 = vadd.f32 0.0, %v1366
      %v1368 = vpop.f32.mrb[0].mxu0
      %v1369 = vadd.f32 0.0, %v1368
      %1370 = vmatprep.mubr.bf16.mxu0 0
      %1371 = vmatmul.mubr.bf16.gmra.mrb[0].mxu0 %v1201
      %v1372 = vpop.f32.mrb[0].mxu0
      %v1373 = vadd.f32 0.0, %v1372
      %v1374 = vpop.f32.mrb[0].mxu0
      %v1375 = vadd.f32 0.0, %v1374
      %v1376 = vpop.f32.mrb[0].mxu0
      %v1377 = vadd.f32 0.0, %v1376
      %v1378 = vpop.f32.mrb[0].mxu0
      %v1379 = vadd.f32 0.0, %v1378
      %1380 = vmatprep.mubr.bf16.mxu0 0
      %1381 = vmatmul.mubr.bf16.gmra.mrb[0].mxu0 %v1204
      %v1382 = vpop.f32.mrb[0].mxu0
      %v1383 = vadd.f32 0.0, %v1382
      %v1384 = vpop.f32.mrb[0].mxu0
      %v1385 = vadd.f32 0.0, %v1384
      %v1386 = vpop.f32.mrb[0].mxu0
      %v1387 = vadd.f32 0.0, %v1386
      %v1388 = vpop.f32.mrb[0].mxu0
      %v1389 = vadd.f32 0.0, %v1388
      %1390 = vmatprep.mubr.bf16.mxu0 0
      %1391 = vmatmul.mubr.bf16.gmra.mrb[0].mxu0 %v1207
      %v1392 = vpop.f32.mrb[0].mxu0
      %v1393 = vadd.f32 0.0, %v1392
      %v1394 = vpop.f32.mrb[0].mxu0
      %v1395 = vadd.f32 0.0, %v1394
      %v1396 = vpop.f32.mrb[0].mxu0
      %v1397 = vadd.f32 0.0, %v1396
      %v1398 = vpop.f32.mrb[0].mxu0
      %v1399 = vadd.f32 0.0, %v1398
      %1400 = vmatprep.mubr.bf16.mxu0 0
      %1401 = vmatmul.mubr.bf16.gmra.mrb[0].mxu0 %v1210
      %v1402 = vpop.f32.mrb[0].mxu0
      %v1403 = vadd.f32 0.0, %v1402
      %v1404 = vpop.f32.mrb[0].mxu0
      %v1405 = vadd.f32 0.0, %v1404
      %v1406 = vpop.f32.mrb[0].mxu0
      %v1407 = vadd.f32 0.0, %v1406
      %v1408 = vpop.f32.mrb[0].mxu0
      %v1409 = vadd.f32 0.0, %v1408
      %1410 = vmatprep.mubr.bf16.mxu0 0
      %1411 = vmatmul.mubr.bf16.gmra.mrb[0].mxu0 %v1213
      %v1412 = vpop.f32.mrb[0].mxu0
      %v1413 = vadd.f32 0.0, %v1412
      %v1414 = vpop.f32.mrb[0].mxu0
      %v1415 = vadd.f32 0.0, %v1414
      %v1416 = vpop.f32.mrb[0].mxu0
      %v1417 = vadd.f32 0.0, %v1416
      %v1418 = vpop.f32.mrb[0].mxu0
      %v1419 = vadd.f32 0.0, %v1418
      %1420 = vmatprep.mubr.bf16.mxu0 0
      %1421 = vmatmul.mubr.bf16.gmra.mrb[0].mxu0 %v1216
      %v1422 = vpop.f32.mrb[0].mxu0
      %v1423 = vadd.f32 0.0, %v1422
      %v1424 = vpop.f32.mrb[0].mxu0
      %v1425 = vadd.f32 0.0, %v1424
      %v1426 = vpop.f32.mrb[0].mxu0
      %v1427 = vadd.f32 0.0, %v1426
      %v1428 = vpop.f32.mrb[0].mxu0
      %v1429 = vadd.f32 0.0, %v1428
      %1430 = vmatprep.mubr.bf16.mxu0 0
      %1431 = vmatmul.mubr.bf16.gmra.mrb[0].mxu0 %v1219
      %v1432 = vpop.f32.mrb[0].mxu0
      %v1433 = vadd.f32 0.0, %v1432
      %v1434 = vpop.f32.mrb[0].mxu0
      %v1435 = vadd.f32 0.0, %v1434
      %v1436 = vpop.f32.mrb[0].mxu0
      %v1437 = vadd.f32 0.0, %v1436
      %v1438 = vpop.f32.mrb[0].mxu0
      %v1439 = vadd.f32 0.0, %v1438
      %1440 = vmatprep.mubr.bf16.mxu0 0
      %1441 = vmatmul.mubr.bf16.gmra.mrb[0].mxu0 %v1222
      %v1442 = vpop.f32.mrb[0].mxu0
      %v1443 = vadd.f32 0.0, %v1442
      %v1444 = vpop.f32.mrb[0].mxu0
      %v1445 = vadd.f32 0.0, %v1444
      %v1446 = vpop.f32.mrb[0].mxu0
      %v1447 = vadd.f32 0.0, %v1446
      %v1448 = vpop.f32.mrb[0].mxu0
      %v1449 = vadd.f32 0.0, %v1448
      %1450 = vmatprep.mubr.bf16.mxu0 0
      %1451 = vmatmul.mubr.bf16.gmra.mrb[0].mxu0 %v1225
      %v1452 = vpop.f32.mrb[0].mxu0
      %v1453 = vadd.f32 0.0, %v1452
      %v1454 = vpop.f32.mrb[0].mxu0
      %v1455 = vadd.f32 0.0, %v1454
      %v1456 = vpop.f32.mrb[0].mxu0
      %v1457 = vadd.f32 0.0, %v1456
      %v1458 = vpop.f32.mrb[0].mxu0
      %v1459 = vadd.f32 0.0, %v1458
      %1460 = vmatprep.mubr.bf16.mxu0 0
      %1461 = vmatmul.mubr.bf16.gmra.mrb[0].mxu0 %v1228
      %v1462 = vpop.f32.mrb[0].mxu0
      %v1463 = vadd.f32 0.0, %v1462
      %v1464 = vpop.f32.mrb[0].mxu0
      %v1465 = vadd.f32 0.0, %v1464
      %v1466 = vpop.f32.mrb[0].mxu0
      %v1467 = vadd.f32 0.0, %v1466
      %v1468 = vpop.f32.mrb[0].mxu0
      %v1469 = vadd.f32 0.0, %v1468
      %1470 = vdwg.mxu0
      %v1471 = vmul.f32 %v1313, 0.17677669
      %v1472 = vmul.f32 %v1315, 0.17677669
      %v1473 = vmul.f32 %v1317, 0.17677669
      %v1474 = vmul.f32 %v1319, 0.17677669
      %v1475 = vmul.f32 %v1323, 0.17677669
      %v1476 = vmul.f32 %v1325, 0.17677669
      %v1477 = vmul.f32 %v1327, 0.17677669
      %v1478 = vmul.f32 %v1329, 0.17677669
      %v1479 = vmul.f32 %v1333, 0.17677669
      %v1480 = vmul.f32 %v1335, 0.17677669
      %v1481 = vmul.f32 %v1337, 0.17677669
      %v1482 = vmul.f32 %v1339, 0.17677669
      %v1483 = vmul.f32 %v1343, 0.17677669
      %v1484 = vmul.f32 %v1345, 0.17677669
      %v1485 = vmul.f32 %v1347, 0.17677669
      %v1486 = vmul.f32 %v1349, 0.17677669
      %v1487 = vmul.f32 %v1353, 0.17677669
      %v1488 = vmul.f32 %v1355, 0.17677669
      %v1489 = vmul.f32 %v1357, 0.17677669
      %v1490 = vmul.f32 %v1359, 0.17677669
      %v1491 = vmul.f32 %v1363, 0.17677669
      %v1492 = vmul.f32 %v1365, 0.17677669
      %v1493 = vmul.f32 %v1367, 0.17677669
      %v1494 = vmul.f32 %v1369, 0.17677669
      %v1495 = vmul.f32 %v1373, 0.17677669
      %v1496 = vmul.f32 %v1375, 0.17677669
      %v1497 = vmul.f32 %v1377, 0.17677669
      %v1498 = vmul.f32 %v1379, 0.17677669
      %v1499 = vmul.f32 %v1383, 0.17677669
      %v1500 = vmul.f32 %v1385, 0.17677669
      %v1501 = vmul.f32 %v1387, 0.17677669
      %v1502 = vmul.f32 %v1389, 0.17677669
      %v1503 = vmul.f32 %v1393, 0.17677669
      %v1504 = vmul.f32 %v1395, 0.17677669
      %v1505 = vmul.f32 %v1397, 0.17677669
      %v1506 = vmul.f32 %v1399, 0.17677669
      %v1507 = vmul.f32 %v1403, 0.17677669
      %v1508 = vmul.f32 %v1405, 0.17677669
      %v1509 = vmul.f32 %v1407, 0.17677669
      %v1510 = vmul.f32 %v1409, 0.17677669
      %v1511 = vmul.f32 %v1413, 0.17677669
      %v1512 = vmul.f32 %v1415, 0.17677669
      %v1513 = vmul.f32 %v1417, 0.17677669
      %v1514 = vmul.f32 %v1419, 0.17677669
      %v1515 = vmul.f32 %v1423, 0.17677669
      %v1516 = vmul.f32 %v1425, 0.17677669
      %v1517 = vmul.f32 %v1427, 0.17677669
      %v1518 = vmul.f32 %v1429, 0.17677669
      %v1519 = vmul.f32 %v1433, 0.17677669
      %v1520 = vmul.f32 %v1435, 0.17677669
      %v1521 = vmul.f32 %v1437, 0.17677669
      %v1522 = vmul.f32 %v1439, 0.17677669
      %v1523 = vmul.f32 %v1443, 0.17677669
      %v1524 = vmul.f32 %v1445, 0.17677669
      %v1525 = vmul.f32 %v1447, 0.17677669
      %v1526 = vmul.f32 %v1449, 0.17677669
      %v1527 = vmul.f32 %v1453, 0.17677669
      %v1528 = vmul.f32 %v1455, 0.17677669
      %v1529 = vmul.f32 %v1457, 0.17677669
      %v1530 = vmul.f32 %v1459, 0.17677669
      %v1531 = vmul.f32 %v1463, 0.17677669
      %v1532 = vmul.f32 %v1465, 0.17677669
      %v1533 = vmul.f32 %v1467, 0.17677669
      %v1534 = vmul.f32 %v1469, 0.17677669
      %v1535 = vmax.f32 %v1471, %v1472
      %1536 = vmax.xlane.f32.xlu0 %v1535
      %v1537 = vpop.xlane.xlu0 %1536
      %v1538 = vmax.f32 %v1473, %v1474
      %1539 = vmax.xlane.f32.xlu0 %v1538
      %v1540 = vpop.xlane.xlu0 %1539
      %v1541 = vmax.f32 %v1475, %v1476
      %1542 = vmax.xlane.f32.xlu0 %v1541
      %v1543 = vpop.xlane.xlu0 %1542
      %v1544 = vmax.f32 %v1477, %v1478
      %1545 = vmax.xlane.f32.xlu0 %v1544
      %v1546 = vpop.xlane.xlu0 %1545
      %v1547 = vmax.f32 %v1479, %v1480
      %1548 = vmax.xlane.f32.xlu0 %v1547
      %v1549 = vpop.xlane.xlu0 %1548
      %v1550 = vmax.f32 %v1481, %v1482
      %1551 = vmax.xlane.f32.xlu0 %v1550
      %v1552 = vpop.xlane.xlu0 %1551
      %v1553 = vmax.f32 %v1483, %v1484
      %1554 = vmax.xlane.f32.xlu0 %v1553
      %v1555 = vpop.xlane.xlu0 %1554
      %v1556 = vmax.f32 %v1485, %v1486
      %1557 = vmax.xlane.f32.xlu0 %v1556
      %v1558 = vpop.xlane.xlu0 %1557
      %v1559 = vmax.f32 %v1487, %v1488
      %1560 = vmax.xlane.f32.xlu0 %v1559
      %v1561 = vpop.xlane.xlu0 %1560
      %v1562 = vmax.f32 %v1489, %v1490
      %1563 = vmax.xlane.f32.xlu0 %v1562
      %v1564 = vpop.xlane.xlu0 %1563
      %v1565 = vmax.f32 %v1491, %v1492
      %1566 = vmax.xlane.f32.xlu0 %v1565
      %v1567 = vpop.xlane.xlu0 %1566
      %v1568 = vmax.f32 %v1493, %v1494
      %1569 = vmax.xlane.f32.xlu0 %v1568
      %v1570 = vpop.xlane.xlu0 %1569
      %v1571 = vmax.f32 %v1495, %v1496
      %1572 = vmax.xlane.f32.xlu0 %v1571
      %v1573 = vpop.xlane.xlu0 %1572
      %v1574 = vmax.f32 %v1497, %v1498
      %1575 = vmax.xlane.f32.xlu0 %v1574
      %v1576 = vpop.xlane.xlu0 %1575
      %v1577 = vmax.f32 %v1499, %v1500
      %1578 = vmax.xlane.f32.xlu0 %v1577
      %v1579 = vpop.xlane.xlu0 %1578
      %v1580 = vmax.f32 %v1501, %v1502
      %1581 = vmax.xlane.f32.xlu0 %v1580
      %v1582 = vpop.xlane.xlu0 %1581
      %v1583 = vmax.f32 %v1503, %v1504
      %1584 = vmax.xlane.f32.xlu0 %v1583
      %v1585 = vpop.xlane.xlu0 %1584
      %v1586 = vmax.f32 %v1505, %v1506
      %1587 = vmax.xlane.f32.xlu0 %v1586
      %v1588 = vpop.xlane.xlu0 %1587
      %v1589 = vmax.f32 %v1507, %v1508
      %1590 = vmax.xlane.f32.xlu0 %v1589
      %v1591 = vpop.xlane.xlu0 %1590
      %v1592 = vmax.f32 %v1509, %v1510
      %1593 = vmax.xlane.f32.xlu0 %v1592
      %v1594 = vpop.xlane.xlu0 %1593
      %v1595 = vmax.f32 %v1511, %v1512
      %1596 = vmax.xlane.f32.xlu0 %v1595
      %v1597 = vpop.xlane.xlu0 %1596
      %v1598 = vmax.f32 %v1513, %v1514
      %1599 = vmax.xlane.f32.xlu0 %v1598
      %v1600 = vpop.xlane.xlu0 %1599
      %v1601 = vmax.f32 %v1515, %v1516
      %1602 = vmax.xlane.f32.xlu0 %v1601
      %v1603 = vpop.xlane.xlu0 %1602
      %v1604 = vmax.f32 %v1517, %v1518
      %1605 = vmax.xlane.f32.xlu0 %v1604
      %v1606 = vpop.xlane.xlu0 %1605
      %v1607 = vmax.f32 %v1519, %v1520
      %1608 = vmax.xlane.f32.xlu0 %v1607
      %v1609 = vpop.xlane.xlu0 %1608
      %v1610 = vmax.f32 %v1521, %v1522
      %1611 = vmax.xlane.f32.xlu0 %v1610
      %v1612 = vpop.xlane.xlu0 %1611
      %v1613 = vmax.f32 %v1523, %v1524
      %1614 = vmax.xlane.f32.xlu0 %v1613
      %v1615 = vpop.xlane.xlu0 %1614
      %v1616 = vmax.f32 %v1525, %v1526
      %1617 = vmax.xlane.f32.xlu0 %v1616
      %v1618 = vpop.xlane.xlu0 %1617
      %v1619 = vmax.f32 %v1527, %v1528
      %1620 = vmax.xlane.f32.xlu0 %v1619
      %v1621 = vpop.xlane.xlu0 %1620
      %v1622 = vmax.f32 %v1529, %v1530
      %1623 = vmax.xlane.f32.xlu0 %v1622
      %v1624 = vpop.xlane.xlu0 %1623
      %v1625 = vmax.f32 %v1531, %v1532
      %1626 = vmax.xlane.f32.xlu0 %v1625
      %v1627 = vpop.xlane.xlu0 %1626
      %v1628 = vmax.f32 %v1533, %v1534
      %1629 = vmax.xlane.f32.xlu0 %v1628
      %v1630 = vpop.xlane.xlu0 %1629
      %v1631 = vsub.f32 %v1471, %v1537
      %v1632 = vsub.f32 %v1472, %v1537
      %v1633 = vsub.f32 %v1473, %v1540
      %v1634 = vsub.f32 %v1474, %v1540
      %v1635 = vsub.f32 %v1475, %v1543
      %v1636 = vsub.f32 %v1476, %v1543
      %v1637 = vsub.f32 %v1477, %v1546
      %v1638 = vsub.f32 %v1478, %v1546
      %v1639 = vsub.f32 %v1479, %v1549
      %v1640 = vsub.f32 %v1480, %v1549
      %v1641 = vsub.f32 %v1481, %v1552
      %v1642 = vsub.f32 %v1482, %v1552
      %v1643 = vsub.f32 %v1483, %v1555
      %v1644 = vsub.f32 %v1484, %v1555
      %v1645 = vsub.f32 %v1485, %v1558
      %v1646 = vsub.f32 %v1486, %v1558
      %v1647 = vsub.f32 %v1487, %v1561
      %v1648 = vsub.f32 %v1488, %v1561
      %v1649 = vsub.f32 %v1489, %v1564
      %v1650 = vsub.f32 %v1490, %v1564
      %v1651 = vsub.f32 %v1491, %v1567
      %v1652 = vsub.f32 %v1492, %v1567
      %v1653 = vsub.f32 %v1493, %v1570
      %v1654 = vsub.f32 %v1494, %v1570
      %v1655 = vsub.f32 %v1495, %v1573
      %v1656 = vsub.f32 %v1496, %v1573
      %v1657 = vsub.f32 %v1497, %v1576
      %v1658 = vsub.f32 %v1498, %v1576
      %v1659 = vsub.f32 %v1499, %v1579
      %v1660 = vsub.f32 %v1500, %v1579
      %v1661 = vsub.f32 %v1501, %v1582
      %v1662 = vsub.f32 %v1502, %v1582
      %v1663 = vsub.f32 %v1503, %v1585
      %v1664 = vsub.f32 %v1504, %v1585
      %v1665 = vsub.f32 %v1505, %v1588
      %v1666 = vsub.f32 %v1506, %v1588
      %v1667 = vsub.f32 %v1507, %v1591
      %v1668 = vsub.f32 %v1508, %v1591
      %v1669 = vsub.f32 %v1509, %v1594
      %v1670 = vsub.f32 %v1510, %v1594
      %v1671 = vsub.f32 %v1511, %v1597
      %v1672 = vsub.f32 %v1512, %v1597
      %v1673 = vsub.f32 %v1513, %v1600
      %v1674 = vsub.f32 %v1514, %v1600
      %v1675 = vsub.f32 %v1515, %v1603
      %v1676 = vsub.f32 %v1516, %v1603
      %v1677 = vsub.f32 %v1517, %v1606
      %v1678 = vsub.f32 %v1518, %v1606
      %v1679 = vsub.f32 %v1519, %v1609
      %v1680 = vsub.f32 %v1520, %v1609
      %v1681 = vsub.f32 %v1521, %v1612
      %v1682 = vsub.f32 %v1522, %v1612
      %v1683 = vsub.f32 %v1523, %v1615
      %v1684 = vsub.f32 %v1524, %v1615
      %v1685 = vsub.f32 %v1525, %v1618
      %v1686 = vsub.f32 %v1526, %v1618
      %v1687 = vsub.f32 %v1527, %v1621
      %v1688 = vsub.f32 %v1528, %v1621
      %v1689 = vsub.f32 %v1529, %v1624
      %v1690 = vsub.f32 %v1530, %v1624
      %v1691 = vsub.f32 %v1531, %v1627
      %v1692 = vsub.f32 %v1532, %v1627
      %v1693 = vsub.f32 %v1533, %v1630
      %v1694 = vsub.f32 %v1534, %v1630
      %v1695 = vmul.f32 %v1631, 1.442695
      %v1696 = vpow.pop %v1695
      %v1697 = vmul.f32 %v1632, 1.442695
      %v1698 = vpow.pop %v1697
      %v1699 = vmul.f32 %v1633, 1.442695
      %v1700 = vpow.pop %v1699
      %v1701 = vmul.f32 %v1634, 1.442695
      %v1702 = vpow.pop %v1701
      %v1703 = vmul.f32 %v1635, 1.442695
      %v1704 = vpow.pop %v1703
      %v1705 = vmul.f32 %v1636, 1.442695
      %v1706 = vpow.pop %v1705
      %v1707 = vmul.f32 %v1637, 1.442695
      %v1708 = vpow.pop %v1707
      %v1709 = vmul.f32 %v1638, 1.442695
      %v1710 = vpow.pop %v1709
      %v1711 = vmul.f32 %v1639, 1.442695
      %v1712 = vpow.pop %v1711
      %v1713 = vmul.f32 %v1640, 1.442695
      %v1714 = vpow.pop %v1713
      %v1715 = vmul.f32 %v1641, 1.442695
      %v1716 = vpow.pop %v1715
      %v1717 = vmul.f32 %v1642, 1.442695
      %v1718 = vpow.pop %v1717
      %v1719 = vmul.f32 %v1643, 1.442695
      %v1720 = vpow.pop %v1719
      %v1721 = vmul.f32 %v1644, 1.442695
      %v1722 = vpow.pop %v1721
      %v1723 = vmul.f32 %v1645, 1.442695
      %v1724 = vpow.pop %v1723
      %v1725 = vmul.f32 %v1646, 1.442695
      %v1726 = vpow.pop %v1725
      %v1727 = vmul.f32 %v1647, 1.442695
      %v1728 = vpow.pop %v1727
      %v1729 = vmul.f32 %v1648, 1.442695
      %v1730 = vpow.pop %v1729
      %v1731 = vmul.f32 %v1649, 1.442695
      %v1732 = vpow.pop %v1731
      %v1733 = vmul.f32 %v1650, 1.442695
      %v1734 = vpow.pop %v1733
      %v1735 = vmul.f32 %v1651, 1.442695
      %v1736 = vpow.pop %v1735
      %v1737 = vmul.f32 %v1652, 1.442695
      %v1738 = vpow.pop %v1737
      %v1739 = vmul.f32 %v1653, 1.442695
      %v1740 = vpow.pop %v1739
      %v1741 = vmul.f32 %v1654, 1.442695
      %v1742 = vpow.pop %v1741
      %v1743 = vmul.f32 %v1655, 1.442695
      %v1744 = vpow.pop %v1743
      %v1745 = vmul.f32 %v1656, 1.442695
      %v1746 = vpow.pop %v1745
      %v1747 = vmul.f32 %v1657, 1.442695
      %v1748 = vpow.pop %v1747
      %v1749 = vmul.f32 %v1658, 1.442695
      %v1750 = vpow.pop %v1749
      %v1751 = vmul.f32 %v1659, 1.442695
      %v1752 = vpow.pop %v1751
      %v1753 = vmul.f32 %v1660, 1.442695
      %v1754 = vpow.pop %v1753
      %v1755 = vmul.f32 %v1661, 1.442695
      %v1756 = vpow.pop %v1755
      %v1757 = vmul.f32 %v1662, 1.442695
      %v1758 = vpow.pop %v1757
      %v1759 = vmul.f32 %v1663, 1.442695
      %v1760 = vpow.pop %v1759
      %v1761 = vmul.f32 %v1664, 1.442695
      %v1762 = vpow.pop %v1761
      %v1763 = vmul.f32 %v1665, 1.442695
      %v1764 = vpow.pop %v1763
      %v1765 = vmul.f32 %v1666, 1.442695
      %v1766 = vpow.pop %v1765
      %v1767 = vmul.f32 %v1667, 1.442695
      %v1768 = vpow.pop %v1767
      %v1769 = vmul.f32 %v1668, 1.442695
      %v1770 = vpow.pop %v1769
      %v1771 = vmul.f32 %v1669, 1.442695
      %v1772 = vpow.pop %v1771
      %v1773 = vmul.f32 %v1670, 1.442695
      %v1774 = vpow.pop %v1773
      %v1775 = vmul.f32 %v1671, 1.442695
      %v1776 = vpow.pop %v1775
      %v1777 = vmul.f32 %v1672, 1.442695
      %v1778 = vpow.pop %v1777
      %v1779 = vmul.f32 %v1673, 1.442695
      %v1780 = vpow.pop %v1779
      %v1781 = vmul.f32 %v1674, 1.442695
      %v1782 = vpow.pop %v1781
      %v1783 = vmul.f32 %v1675, 1.442695
      %v1784 = vpow.pop %v1783
      %v1785 = vmul.f32 %v1676, 1.442695
      %v1786 = vpow.pop %v1785
      %v1787 = vmul.f32 %v1677, 1.442695
      %v1788 = vpow.pop %v1787
      %v1789 = vmul.f32 %v1678, 1.442695
      %v1790 = vpow.pop %v1789
      %v1791 = vmul.f32 %v1679, 1.442695
      %v1792 = vpow.pop %v1791
      %v1793 = vmul.f32 %v1680, 1.442695
      %v1794 = vpow.pop %v1793
      %v1795 = vmul.f32 %v1681, 1.442695
      %v1796 = vpow.pop %v1795
      %v1797 = vmul.f32 %v1682, 1.442695
      %v1798 = vpow.pop %v1797
      %v1799 = vmul.f32 %v1683, 1.442695
      %v1800 = vpow.pop %v1799
      %v1801 = vmul.f32 %v1684, 1.442695
      %v1802 = vpow.pop %v1801
      %v1803 = vmul.f32 %v1685, 1.442695
      %v1804 = vpow.pop %v1803
      %v1805 = vmul.f32 %v1686, 1.442695
      %v1806 = vpow.pop %v1805
      %v1807 = vmul.f32 %v1687, 1.442695
      %v1808 = vpow.pop %v1807
      %v1809 = vmul.f32 %v1688, 1.442695
      %v1810 = vpow.pop %v1809
      %v1811 = vmul.f32 %v1689, 1.442695
      %v1812 = vpow.pop %v1811
      %v1813 = vmul.f32 %v1690, 1.442695
      %v1814 = vpow.pop %v1813
      %v1815 = vmul.f32 %v1691, 1.442695
      %v1816 = vpow.pop %v1815
      %v1817 = vmul.f32 %v1692, 1.442695
      %v1818 = vpow.pop %v1817
      %v1819 = vmul.f32 %v1693, 1.442695
      %v1820 = vpow.pop %v1819
      %v1821 = vmul.f32 %v1694, 1.442695
      %v1822 = vpow.pop %v1821
      %v1823 = vadd.f32 %v1696, %v1698
      %1824 = vadd.xlane.f32.xlu0 %v1823
      %v1825 = vpop.xlane.xlu0 %1824
      %v1826 = vadd.f32 %v1700, %v1702
      %1827 = vadd.xlane.f32.xlu0 %v1826
      %v1828 = vpop.xlane.xlu0 %1827
      %v1829 = vadd.f32 %v1704, %v1706
      %1830 = vadd.xlane.f32.xlu0 %v1829
      %v1831 = vpop.xlane.xlu0 %1830
      %v1832 = vadd.f32 %v1708, %v1710
      %1833 = vadd.xlane.f32.xlu0 %v1832
      %v1834 = vpop.xlane.xlu0 %1833
      %v1835 = vadd.f32 %v1712, %v1714
      %1836 = vadd.xlane.f32.xlu0 %v1835
      %v1837 = vpop.xlane.xlu0 %1836
      %v1838 = vadd.f32 %v1716, %v1718
      %1839 = vadd.xlane.f32.xlu0 %v1838
      %v1840 = vpop.xlane.xlu0 %1839
      %v1841 = vadd.f32 %v1720, %v1722
      %1842 = vadd.xlane.f32.xlu0 %v1841
      %v1843 = vpop.xlane.xlu0 %1842
      %v1844 = vadd.f32 %v1724, %v1726
      %1845 = vadd.xlane.f32.xlu0 %v1844
      %v1846 = vpop.xlane.xlu0 %1845
      %v1847 = vadd.f32 %v1728, %v1730
      %1848 = vadd.xlane.f32.xlu0 %v1847
      %v1849 = vpop.xlane.xlu0 %1848
      %v1850 = vadd.f32 %v1732, %v1734
      %1851 = vadd.xlane.f32.xlu0 %v1850
      %v1852 = vpop.xlane.xlu0 %1851
      %v1853 = vadd.f32 %v1736, %v1738
      %1854 = vadd.xlane.f32.xlu0 %v1853
      %v1855 = vpop.xlane.xlu0 %1854
      %v1856 = vadd.f32 %v1740, %v1742
      %1857 = vadd.xlane.f32.xlu0 %v1856
      %v1858 = vpop.xlane.xlu0 %1857
      %v1859 = vadd.f32 %v1744, %v1746
      %1860 = vadd.xlane.f32.xlu0 %v1859
      %v1861 = vpop.xlane.xlu0 %1860
      %v1862 = vadd.f32 %v1748, %v1750
      %1863 = vadd.xlane.f32.xlu0 %v1862
      %v1864 = vpop.xlane.xlu0 %1863
      %v1865 = vadd.f32 %v1752, %v1754
      %1866 = vadd.xlane.f32.xlu0 %v1865
      %v1867 = vpop.xlane.xlu0 %1866
      %v1868 = vadd.f32 %v1756, %v1758
      %1869 = vadd.xlane.f32.xlu0 %v1868
      %v1870 = vpop.xlane.xlu0 %1869
      %v1871 = vadd.f32 %v1760, %v1762
      %1872 = vadd.xlane.f32.xlu0 %v1871
      %v1873 = vpop.xlane.xlu0 %1872
      %v1874 = vadd.f32 %v1764, %v1766
      %1875 = vadd.xlane.f32.xlu0 %v1874
      %v1876 = vpop.xlane.xlu0 %1875
      %v1877 = vadd.f32 %v1768, %v1770
      %1878 = vadd.xlane.f32.xlu0 %v1877
      %v1879 = vpop.xlane.xlu0 %1878
      %v1880 = vadd.f32 %v1772, %v1774
      %1881 = vadd.xlane.f32.xlu0 %v1880
      %v1882 = vpop.xlane.xlu0 %1881
      %v1883 = vadd.f32 %v1776, %v1778
      %1884 = vadd.xlane.f32.xlu0 %v1883
      %v1885 = vpop.xlane.xlu0 %1884
      %v1886 = vadd.f32 %v1780, %v1782
      %1887 = vadd.xlane.f32.xlu0 %v1886
      %v1888 = vpop.xlane.xlu0 %1887
      %v1889 = vadd.f32 %v1784, %v1786
      %1890 = vadd.xlane.f32.xlu0 %v1889
      %v1891 = vpop.xlane.xlu0 %1890
      %v1892 = vadd.f32 %v1788, %v1790
      %1893 = vadd.xlane.f32.xlu0 %v1892
      %v1894 = vpop.xlane.xlu0 %1893
      %v1895 = vadd.f32 %v1792, %v1794
      %1896 = vadd.xlane.f32.xlu0 %v1895
      %v1897 = vpop.xlane.xlu0 %1896
      %v1898 = vadd.f32 %v1796, %v1798
      %1899 = vadd.xlane.f32.xlu0 %v1898
      %v1900 = vpop.xlane.xlu0 %1899
      %v1901 = vadd.f32 %v1800, %v1802
      %1902 = vadd.xlane.f32.xlu0 %v1901
      %v1903 = vpop.xlane.xlu0 %1902
      %v1904 = vadd.f32 %v1804, %v1806
      %1905 = vadd.xlane.f32.xlu0 %v1904
      %v1906 = vpop.xlane.xlu0 %1905
      %v1907 = vadd.f32 %v1808, %v1810
      %1908 = vadd.xlane.f32.xlu0 %v1907
      %v1909 = vpop.xlane.xlu0 %1908
      %v1910 = vadd.f32 %v1812, %v1814
      %1911 = vadd.xlane.f32.xlu0 %v1910
      %v1912 = vpop.xlane.xlu0 %1911
      %v1913 = vadd.f32 %v1816, %v1818
      %1914 = vadd.xlane.f32.xlu0 %v1913
      %v1915 = vpop.xlane.xlu0 %1914
      %v1916 = vadd.f32 %v1820, %v1822
      %1917 = vadd.xlane.f32.xlu0 %v1916
      %v1918 = vpop.xlane.xlu0 %1917
      %v1919 = vpack.c.bf16 %v1700, %v1696
      %v1920 = vpack.c.bf16 %v1702, %v1698
      %v1921 = vpack.c.bf16 %v1708, %v1704
      %v1922 = vpack.c.bf16 %v1710, %v1706
      %v1923 = vpack.c.bf16 %v1716, %v1712
      %v1924 = vpack.c.bf16 %v1718, %v1714
      %v1925 = vpack.c.bf16 %v1724, %v1720
      %v1926 = vpack.c.bf16 %v1726, %v1722
      %v1927 = vpack.c.bf16 %v1732, %v1728
      %v1928 = vpack.c.bf16 %v1734, %v1730
      %v1929 = vpack.c.bf16 %v1740, %v1736
      %v1930 = vpack.c.bf16 %v1742, %v1738
      %v1931 = vpack.c.bf16 %v1748, %v1744
      %v1932 = vpack.c.bf16 %v1750, %v1746
      %v1933 = vpack.c.bf16 %v1756, %v1752
      %v1934 = vpack.c.bf16 %v1758, %v1754
      %v1935 = vpack.c.bf16 %v1764, %v1760
      %v1936 = vpack.c.bf16 %v1766, %v1762
      %v1937 = vpack.c.bf16 %v1772, %v1768
      %v1938 = vpack.c.bf16 %v1774, %v1770
      %v1939 = vpack.c.bf16 %v1780, %v1776
      %v1940 = vpack.c.bf16 %v1782, %v1778
      %v1941 = vpack.c.bf16 %v1788, %v1784
      %v1942 = vpack.c.bf16 %v1790, %v1786
      %v1943 = vpack.c.bf16 %v1796, %v1792
      %v1944 = vpack.c.bf16 %v1798, %v1794
      %v1945 = vpack.c.bf16 %v1804, %v1800
      %v1946 = vpack.c.bf16 %v1806, %v1802
      %v1947 = vpack.c.bf16 %v1812, %v1808
      %v1948 = vpack.c.bf16 %v1814, %v1810
      %v1949 = vpack.c.bf16 %v1820, %v1816
      %v1950 = vpack.c.bf16 %v1822, %v1818
      %1951 = vrot.lane.b32.xlu0 %v1118, 64
      %v1952 = vpop.permute.xlu0 %1951
      %1953 = vrot.lane.b32.xlu0 %v1119, 64
      %v1954 = vpop.permute.xlu0 %1953
      %1955 = vrot.lane.b32.xlu0 %v1120, 64
      %v1956 = vpop.permute.xlu0 %1955
      %1957 = vrot.lane.b32.xlu0 %v1121, 64
      %v1958 = vpop.permute.xlu0 %1957
      %1959 = vrot.lane.b32.xlu0 %v1122, 64
      %v1960 = vpop.permute.xlu0 %1959
      %1961 = vrot.lane.b32.xlu0 %v1123, 64
      %v1962 = vpop.permute.xlu0 %1961
      %1963 = vrot.lane.b32.xlu0 %v1124, 64
      %v1964 = vpop.permute.xlu0 %1963
      %1965 = vrot.lane.b32.xlu0 %v1125, 64
      %v1966 = vpop.permute.xlu0 %1965
      %1967 = vrot.lane.b32.xlu0 %v1126, 64
      %v1968 = vpop.permute.xlu0 %1967
      %1969 = vrot.lane.b32.xlu0 %v1127, 64
      %v1970 = vpop.permute.xlu0 %1969
      %1971 = vrot.lane.b32.xlu0 %v1128, 64
      %v1972 = vpop.permute.xlu0 %1971
      %1973 = vrot.lane.b32.xlu0 %v1129, 64
      %v1974 = vpop.permute.xlu0 %1973
      %1975 = vrot.lane.b32.xlu0 %v1130, 64
      %v1976 = vpop.permute.xlu0 %1975
      %1977 = vrot.lane.b32.xlu0 %v1131, 64
      %v1978 = vpop.permute.xlu0 %1977
      %1979 = vrot.lane.b32.xlu0 %v1132, 64
      %v1980 = vpop.permute.xlu0 %1979
      %1981 = vrot.lane.b32.xlu0 %v1133, 64
      %v1982 = vpop.permute.xlu0 %1981
      %1999 = vmatprep.subr.bf16.mxu0 0
      %2000 = vmatpush1.bf16.msra.mxu0 %v1952
      %2001 = vmatprep.subr.bf16.mxu0 0
      %2002 = vmatpush1.bf16.msra.mxu0 %v1954
      %2003 = vmatprep.subr.bf16.mxu0 0
      %2004 = vmatpush1.bf16.msra.mxu0 %v1956
      %2005 = vmatprep.subr.bf16.mxu0 0
      %2006 = vmatpush1.bf16.msra.mxu0 %v1958
      %2007 = vmatprep.subr.bf16.mxu0 0
      %2008 = vmatpush1.bf16.msra.mxu0 %v1960
      %2009 = vmatprep.subr.bf16.mxu0 0
      %2010 = vmatpush1.bf16.msra.mxu0 %v1962
      %2011 = vmatprep.subr.bf16.mxu0 0
      %2012 = vmatpush1.bf16.msra.mxu0 %v1964
      %2013 = vmatprep.subr.bf16.mxu0 0
      %2014 = vmatpush1.bf16.msra.mxu0 %v1966
      %2015 = vmatprep.subr.bf16.mxu0 0
      %2016 = vmatpush1.bf16.msra.mxu0 %v1968
      %2017 = vmatprep.subr.bf16.mxu0 0
      %2018 = vmatpush1.bf16.msra.mxu0 %v1970
      %2019 = vmatprep.subr.bf16.mxu0 0
      %2020 = vmatpush1.bf16.msra.mxu0 %v1972
      %2021 = vmatprep.subr.bf16.mxu0 0
      %2022 = vmatpush1.bf16.msra.mxu0 %v1974
      %2023 = vmatprep.subr.bf16.mxu0 0
      %2024 = vmatpush1.bf16.msra.mxu0 %v1976
      %2025 = vmatprep.subr.bf16.mxu0 0
      %2026 = vmatpush1.bf16.msra.mxu0 %v1978
      %2027 = vmatprep.subr.bf16.mxu0 0
      %2028 = vmatpush1.bf16.msra.mxu0 %v1980
      %2029 = vmatprep.subr.bf16.mxu0 0
      %2030 = vmatpush1.bf16.msra.mxu0 %v1982
      %2031 = vmatprep.mubr.bf16.mxu0 %v1920
      %2032 = vmatmul.mubr.bf16.gmra.mrb[0].mxu0 %v1919
      %v2033 = vpop.f32.mrb[0].mxu0
      %v2034 = vadd.f32 0.0, %v2033
      %v2035 = vpop.f32.mrb[0].mxu0
      %v2036 = vpop.f32.mrb[0].mxu0
      %v2037 = vadd.f32 0.0, %v2036
      %v2038 = vpop.f32.mrb[0].mxu0
      %2039 = vmatprep.mubr.bf16.mxu0 %v1922
      %2040 = vmatmul.mubr.bf16.gmra.mrb[0].mxu0 %v1921
      %v2041 = vpop.f32.mrb[0].mxu0
      %v2042 = vadd.f32 0.0, %v2041
      %v2043 = vpop.f32.mrb[0].mxu0
      %v2044 = vpop.f32.mrb[0].mxu0
      %v2045 = vadd.f32 0.0, %v2044
      %v2046 = vpop.f32.mrb[0].mxu0
      %2047 = vmatprep.mubr.bf16.mxu0 %v1924
      %2048 = vmatmul.mubr.bf16.gmra.mrb[0].mxu0 %v1923
      %v2049 = vpop.f32.mrb[0].mxu0
      %v2050 = vadd.f32 0.0, %v2049
      %v2051 = vpop.f32.mrb[0].mxu0
      %v2052 = vpop.f32.mrb[0].mxu0
      %v2053 = vadd.f32 0.0, %v2052
      %v2054 = vpop.f32.mrb[0].mxu0
      %2055 = vmatprep.mubr.bf16.mxu0 %v1926
      %2056 = vmatmul.mubr.bf16.gmra.mrb[0].mxu0 %v1925
      %v2057 = vpop.f32.mrb[0].mxu0
      %v2058 = vadd.f32 0.0, %v2057
      %v2059 = vpop.f32.mrb[0].mxu0
      %v2060 = vpop.f32.mrb[0].mxu0
      %v2061 = vadd.f32 0.0, %v2060
      %v2062 = vpop.f32.mrb[0].mxu0
      %2063 = vmatprep.mubr.bf16.mxu0 %v1928
      %2064 = vmatmul.mubr.bf16.gmra.mrb[0].mxu0 %v1927
      %v2065 = vpop.f32.mrb[0].mxu0
      %v2066 = vadd.f32 0.0, %v2065
      %v2067 = vpop.f32.mrb[0].mxu0
      %v2068 = vpop.f32.mrb[0].mxu0
      %v2069 = vadd.f32 0.0, %v2068
      %v2070 = vpop.f32.mrb[0].mxu0
      %2071 = vmatprep.mubr.bf16.mxu0 %v1930
      %2072 = vmatmul.mubr.bf16.gmra.mrb[0].mxu0 %v1929
      %v2073 = vpop.f32.mrb[0].mxu0
      %v2074 = vadd.f32 0.0, %v2073
      %v2075 = vpop.f32.mrb[0].mxu0
      %v2076 = vpop.f32.mrb[0].mxu0
      %v2077 = vadd.f32 0.0, %v2076
      %v2078 = vpop.f32.mrb[0].mxu0
      %2079 = vmatprep.mubr.bf16.mxu0 %v1932
      %2080 = vmatmul.mubr.bf16.gmra.mrb[0].mxu0 %v1931
      %v2081 = vpop.f32.mrb[0].mxu0
      %v2082 = vadd.f32 0.0, %v2081
      %v2083 = vpop.f32.mrb[0].mxu0
      %v2084 = vpop.f32.mrb[0].mxu0
      %v2085 = vadd.f32 0.0, %v2084
      %v2086 = vpop.f32.mrb[0].mxu0
      %2087 = vmatprep.mubr.bf16.mxu0 %v1934
      %2088 = vmatmul.mubr.bf16.gmra.mrb[0].mxu0 %v1933
      %v2089 = vpop.f32.mrb[0].mxu0
      %v2090 = vadd.f32 0.0, %v2089
      %v2091 = vpop.f32.mrb[0].mxu0
      %v2092 = vpop.f32.mrb[0].mxu0
      %v2093 = vadd.f32 0.0, %v2092
      %v2094 = vpop.f32.mrb[0].mxu0
      %2095 = vmatprep.mubr.bf16.mxu0 %v1936
      %2096 = vmatmul.mubr.bf16.gmra.mrb[0].mxu0 %v1935
      %v2097 = vpop.f32.mrb[0].mxu0
      %v2098 = vadd.f32 0.0, %v2097
      %v2099 = vpop.f32.mrb[0].mxu0
      %v2100 = vpop.f32.mrb[0].mxu0
      %v2101 = vadd.f32 0.0, %v2100
      %v2102 = vpop.f32.mrb[0].mxu0
      %2103 = vmatprep.mubr.bf16.mxu0 %v1938
      %2104 = vmatmul.mubr.bf16.gmra.mrb[0].mxu0 %v1937
      %v2105 = vpop.f32.mrb[0].mxu0
      %v2106 = vadd.f32 0.0, %v2105
      %v2107 = vpop.f32.mrb[0].mxu0
      %v2108 = vpop.f32.mrb[0].mxu0
      %v2109 = vadd.f32 0.0, %v2108
      %v2110 = vpop.f32.mrb[0].mxu0
      %2111 = vmatprep.mubr.bf16.mxu0 %v1940
      %2112 = vmatmul.mubr.bf16.gmra.mrb[0].mxu0 %v1939
      %v2113 = vpop.f32.mrb[0].mxu0
      %v2114 = vadd.f32 0.0, %v2113
      %v2115 = vpop.f32.mrb[0].mxu0
      %v2116 = vpop.f32.mrb[0].mxu0
      %v2117 = vadd.f32 0.0, %v2116
      %v2118 = vpop.f32.mrb[0].mxu0
      %2119 = vmatprep.mubr.bf16.mxu0 %v1942
      %2120 = vmatmul.mubr.bf16.gmra.mrb[0].mxu0 %v1941
      %v2121 = vpop.f32.mrb[0].mxu0
      %v2122 = vadd.f32 0.0, %v2121
      %v2123 = vpop.f32.mrb[0].mxu0
      %v2124 = vpop.f32.mrb[0].mxu0
      %v2125 = vadd.f32 0.0, %v2124
      %v2126 = vpop.f32.mrb[0].mxu0
      %2127 = vmatprep.mubr.bf16.mxu0 %v1944
      %2128 = vmatmul.mubr.bf16.gmra.mrb[0].mxu0 %v1943
      %v2129 = vpop.f32.mrb[0].mxu0
      %v2130 = vadd.f32 0.0, %v2129
      %v2131 = vpop.f32.mrb[0].mxu0
      %v2132 = vpop.f32.mrb[0].mxu0
      %v2133 = vadd.f32 0.0, %v2132
      %v2134 = vpop.f32.mrb[0].mxu0
      %2135 = vmatprep.mubr.bf16.mxu0 %v1946
      %2136 = vmatmul.mubr.bf16.gmra.mrb[0].mxu0 %v1945
      %v2137 = vpop.f32.mrb[0].mxu0
      %v2138 = vadd.f32 0.0, %v2137
      %v2139 = vpop.f32.mrb[0].mxu0
      %v2140 = vpop.f32.mrb[0].mxu0
      %v2141 = vadd.f32 0.0, %v2140
      %v2142 = vpop.f32.mrb[0].mxu0
      %2143 = vmatprep.mubr.bf16.mxu0 %v1948
      %2144 = vmatmul.mubr.bf16.gmra.mrb[0].mxu0 %v1947
      %v2145 = vpop.f32.mrb[0].mxu0
      %v2146 = vadd.f32 0.0, %v2145
      %v2147 = vpop.f32.mrb[0].mxu0
      %v2148 = vpop.f32.mrb[0].mxu0
      %v2149 = vadd.f32 0.0, %v2148
      %v2150 = vpop.f32.mrb[0].mxu0
      %2151 = vmatprep.mubr.bf16.mxu0 %v1950
      %2152 = vmatmul.mubr.bf16.gmra.mrb[0].mxu0 %v1949
      %v2153 = vpop.f32.mrb[0].mxu0
      %v2154 = vadd.f32 0.0, %v2153
      %v2155 = vpop.f32.mrb[0].mxu0
      %v2156 = vpop.f32.mrb[0].mxu0
      %v2157 = vadd.f32 0.0, %v2156
      %v2158 = vpop.f32.mrb[0].mxu0
      %2159 = vdwg.mxu0
      %v2160 = vrcp.pop %v1825
      %v2161 = vrcp.pop %v1828
      %v2162 = vrcp.pop %v1831
      %v2163 = vrcp.pop %v1834
      %v2164 = vrcp.pop %v1837
      %v2165 = vrcp.pop %v1840
      %v2166 = vrcp.pop %v1843
      %v2167 = vrcp.pop %v1846
      %v2168 = vrcp.pop %v1849
      %v2169 = vrcp.pop %v1852
      %v2170 = vrcp.pop %v1855
      %v2171 = vrcp.pop %v1858
      %v2172 = vrcp.pop %v1861
      %v2173 = vrcp.pop %v1864
      %v2174 = vrcp.pop %v1867
      %v2175 = vrcp.pop %v1870
      %v2176 = vrcp.pop %v1873
      %v2177 = vrcp.pop %v1876
      %v2178 = vrcp.pop %v1879
      %v2179 = vrcp.pop %v1882
      %v2180 = vrcp.pop %v1885
      %v2181 = vrcp.pop %v1888
      %v2182 = vrcp.pop %v1891
      %v2183 = vrcp.pop %v1894
      %v2184 = vrcp.pop %v1897
      %v2185 = vrcp.pop %v1900
      %v2186 = vrcp.pop %v1903
      %v2187 = vrcp.pop %v1906
      %v2188 = vrcp.pop %v1909
      %v2189 = vrcp.pop %v1912
      %v2190 = vrcp.pop %v1915
      %v2191 = vrcp.pop %v1918
      %v2192 = vmul.f32 %v2034, %v2160
      %v2193 = vmul.f32 %v2037, %v2161
      %v2194 = vmul.f32 %v2042, %v2162
      %v2195 = vmul.f32 %v2045, %v2163
      %v2196 = vmul.f32 %v2050, %v2164
      %v2197 = vmul.f32 %v2053, %v2165
      %v2198 = vmul.f32 %v2058, %v2166
      %v2199 = vmul.f32 %v2061, %v2167
      %v2200 = vmul.f32 %v2066, %v2168
      %v2201 = vmul.f32 %v2069, %v2169
      %v2202 = vmul.f32 %v2074, %v2170
      %v2203 = vmul.f32 %v2077, %v2171
      %v2204 = vmul.f32 %v2082, %v2172
      %v2205 = vmul.f32 %v2085, %v2173
      %v2206 = vmul.f32 %v2090, %v2174
      %v2207 = vmul.f32 %v2093, %v2175
      %v2208 = vmul.f32 %v2098, %v2176
      %v2209 = vmul.f32 %v2101, %v2177
      %v2210 = vmul.f32 %v2106, %v2178
      %v2211 = vmul.f32 %v2109, %v2179
      %v2212 = vmul.f32 %v2114, %v2180
      %v2213 = vmul.f32 %v2117, %v2181
      %v2214 = vmul.f32 %v2122, %v2182
      %v2215 = vmul.f32 %v2125, %v2183
      %v2216 = vmul.f32 %v2130, %v2184
      %v2217 = vmul.f32 %v2133, %v2185
      %v2218 = vmul.f32 %v2138, %v2186
      %v2219 = vmul.f32 %v2141, %v2187
      %v2220 = vmul.f32 %v2146, %v2188
      %v2221 = vmul.f32 %v2149, %v2189
      %v2222 = vmul.f32 %v2154, %v2190
      %v2223 = vmul.f32 %v2157, %v2191
      %v2224 = vadd.f32 %v992, %v2192
      %v2225 = vadd.f32 %v995, %v2193
      %v2226 = vadd.f32 %v1000, %v2194
      %v2227 = vadd.f32 %v1003, %v2195
      %v2228 = vadd.f32 %v1008, %v2196
      %v2229 = vadd.f32 %v1011, %v2197
      %v2230 = vadd.f32 %v1016, %v2198
      %v2231 = vadd.f32 %v1019, %v2199
      %v2232 = vadd.f32 %v1024, %v2200
      %v2233 = vadd.f32 %v1027, %v2201
      %v2234 = vadd.f32 %v1032, %v2202
      %v2235 = vadd.f32 %v1035, %v2203
      %v2236 = vadd.f32 %v1040, %v2204
      %v2237 = vadd.f32 %v1043, %v2205
      %v2238 = vadd.f32 %v1048, %v2206
      %v2239 = vadd.f32 %v1051, %v2207
      %v2240 = vadd.f32 %v1056, %v2208
      %v2241 = vadd.f32 %v1059, %v2209
      %v2242 = vadd.f32 %v1064, %v2210
      %v2243 = vadd.f32 %v1067, %v2211
      %v2244 = vadd.f32 %v1072, %v2212
      %v2245 = vadd.f32 %v1075, %v2213
      %v2246 = vadd.f32 %v1080, %v2214
      %v2247 = vadd.f32 %v1083, %v2215
      %v2248 = vadd.f32 %v1088, %v2216
      %v2249 = vadd.f32 %v1091, %v2217
      %v2250 = vadd.f32 %v1096, %v2218
      %v2251 = vadd.f32 %v1099, %v2219
      %v2252 = vadd.f32 %v1104, %v2220
      %v2253 = vadd.f32 %v1107, %v2221
      %v2254 = vadd.f32 %v1112, %v2222
      %v2255 = vadd.f32 %v1115, %v2223
      %v2256 = vpack.c.bf16 %v2225, %v2224
      %v2257 = vpack.c.bf16 %v2227, %v2226
      %v2258 = vpack.c.bf16 %v2229, %v2228
      %v2259 = vpack.c.bf16 %v2231, %v2230
      %v2260 = vpack.c.bf16 %v2233, %v2232
      %v2261 = vpack.c.bf16 %v2235, %v2234
      %v2262 = vpack.c.bf16 %v2237, %v2236
      %v2263 = vpack.c.bf16 %v2239, %v2238
      %v2264 = vpack.c.bf16 %v2241, %v2240
      %v2265 = vpack.c.bf16 %v2243, %v2242
      %v2266 = vpack.c.bf16 %v2245, %v2244
      %v2267 = vpack.c.bf16 %v2247, %v2246
      %v2268 = vpack.c.bf16 %v2249, %v2248
      %v2269 = vpack.c.bf16 %v2251, %v2250
      %v2270 = vpack.c.bf16 %v2253, %v2252
      %v2271 = vpack.c.bf16 %v2255, %v2254
      %v2273 = vlaneseq
      %v2274 = vshrl.u32 %v2273, 7
      %v2275 = vsub.s32 0, %v2274
      %v2276 = vrot.slane %v241, %v2275
      %v2277 = vlaneseq
      %v2278 = vshrl.u32 %v2277, 7
      %v2279 = vsub.s32 1, %v2278
      %v2280 = vrot.slane %v241, %v2279
      %v2285 = vunpack.c.l.b16 %v227
      %v2286 = vunpack.c.h.b16 %v227
      %v2287 = vunpack.c.l.b16 %v228
      %v2288 = vunpack.c.h.b16 %v228
      %v2289 = vunpack.c.l.b16 %v229
      %v2290 = vunpack.c.h.b16 %v229
      %v2291 = vunpack.c.l.b16 %v230
      %v2292 = vunpack.c.h.b16 %v230
      %v2293 = vpack.c.b16 %v2287, %v2285
      %v2294 = vpack.c.b16 %v2288, %v2286
      %v2295 = vpack.c.b16 %v2291, %v2289
      %v2296 = vpack.c.b16 %v2292, %v2290
      %2297 = vrot.lane.b32.xlu0 %v2293, 32
      %v2298 = vpop.permute.xlu0 %2297
      %2299 = vrot.lane.b32.xlu0 %v2294, 32
      %v2300 = vpop.permute.xlu0 %2299
      %2301 = vrot.lane.b32.xlu0 %v2295, 32
      %v2302 = vpop.permute.xlu0 %2301
      %2303 = vrot.lane.b32.xlu0 %v2296, 32
      %v2304 = vpop.permute.xlu0 %2303
      %vm2305 = vcmask 261120
      %v2306 = vsel %vm2305, %v2298, %v2300
      %v2307 = vsel %vm2305, %v2302, %v2304
      %2310 = vrot.lane.b32.xlu0 %v2276, 96
      %v2311 = vpop.permute.xlu0 %2310
      %2312 = vrot.lane.b32.xlu0 %v2280, 96
      %v2313 = vpop.permute.xlu0 %2312
      %vm2314 = vcmask 785408
      %v2315 = vsel %vm2314, %v2311, %v2313
      %v2318 = vsel %vm655, %v2256, 0
      %v2321 = vsel %vm655, %v2257, 0
      %v2324 = vsel %vm655, %v2258, 0
      %v2327 = vsel %vm655, %v2259, 0
      %v2330 = vsel %vm655, %v2260, 0
      %v2333 = vsel %vm655, %v2261, 0
      %v2336 = vsel %vm655, %v2262, 0
      %v2339 = vsel %vm655, %v2263, 0
      %v2342 = vsel %vm655, %v2264, 0
      %v2345 = vsel %vm655, %v2265, 0
      %v2348 = vsel %vm655, %v2266, 0
      %v2351 = vsel %vm655, %v2267, 0
      %v2354 = vsel %vm655, %v2268, 0
      %v2357 = vsel %vm655, %v2269, 0
      %v2360 = vsel %vm655, %v2270, 0
      %v2363 = vsel %vm655, %v2271, 0
      %2365 = vmatprep.subr.bf16.mxu0 0
      %2366 = vmatpush1.bf16.msra.mxu0 %v2306
      %2367 = vmatprep.subr.bf16.mxu0 0
      %2368 = vmatpush1.bf16.msra.mxu0 %v2307
      %2369 = vmatprep.subr.bf16.mxu0 0
      %2370 = vmatpush1.bf16.msra.mxu0 0
      %2371 = vmatprep.subr.bf16.mxu0 0
      %2372 = vmatpush1.bf16.msra.mxu0 0
      %2373 = vmatprep.subr.bf16.mxu0 0
      %2374 = vmatpush1.bf16.msra.mxu0 0
      %2375 = vmatprep.subr.bf16.mxu0 0
      %2376 = vmatpush1.bf16.msra.mxu0 0
      %2377 = vmatprep.subr.bf16.mxu0 0
      %2378 = vmatpush1.bf16.msra.mxu0 0
      %2379 = vmatprep.subr.bf16.mxu0 0
      %2380 = vmatpush1.bf16.msra.mxu0 0
      %2381 = vmatprep.subr.bf16.mxu0 0
      %2382 = vmatpush1.bf16.msra.mxu0 0
      %2383 = vmatprep.subr.bf16.mxu0 0
      %2384 = vmatpush1.bf16.msra.mxu0 0
      %2385 = vmatprep.subr.bf16.mxu0 0
      %2386 = vmatpush1.bf16.msra.mxu0 0
      %2387 = vmatprep.subr.bf16.mxu0 0
      %2388 = vmatpush1.bf16.msra.mxu0 0
      %2389 = vmatprep.subr.bf16.mxu0 0
      %2390 = vmatpush1.bf16.msra.mxu0 0
      %2391 = vmatprep.subr.bf16.mxu0 0
      %2392 = vmatpush1.bf16.msra.mxu0 0
      %2393 = vmatprep.subr.bf16.mxu0 0
      %2394 = vmatpush1.bf16.msra.mxu0 0
      %2395 = vmatprep.subr.bf16.mxu0 0
      %2396 = vmatpush1.bf16.msra.mxu0 0
      %2397 = vmatprep.mubr.bf16.mxu0 0
      %2398 = vmatmul.mubr.bf16.gmra.mrb[0].mxu0 %v2318
      %v2399 = vpop.f32.mrb[0].mxu0
      %v2400 = vadd.f32 %v2315, %v2399
      %v2401 = vpop.f32.mrb[0].mxu0
      %v2402 = vpop.f32.mrb[0].mxu0
      %v2403 = vadd.f32 %v2315, %v2402
      %v2404 = vpop.f32.mrb[0].mxu0
      %2405 = vmatprep.mubr.bf16.mxu0 0
      %2406 = vmatmul.mubr.bf16.gmra.mrb[0].mxu0 %v2321
      %v2407 = vpop.f32.mrb[0].mxu0
      %v2408 = vadd.f32 %v2315, %v2407
      %v2409 = vpop.f32.mrb[0].mxu0
      %v2410 = vpop.f32.mrb[0].mxu0
      %v2411 = vadd.f32 %v2315, %v2410
      %v2412 = vpop.f32.mrb[0].mxu0
      %2413 = vmatprep.mubr.bf16.mxu0 0
      %2414 = vmatmul.mubr.bf16.gmra.mrb[0].mxu0 %v2324
      %v2415 = vpop.f32.mrb[0].mxu0
      %v2416 = vadd.f32 %v2315, %v2415
      %v2417 = vpop.f32.mrb[0].mxu0
      %v2418 = vpop.f32.mrb[0].mxu0
      %v2419 = vadd.f32 %v2315, %v2418
      %v2420 = vpop.f32.mrb[0].mxu0
      %2421 = vmatprep.mubr.bf16.mxu0 0
      %2422 = vmatmul.mubr.bf16.gmra.mrb[0].mxu0 %v2327
      %v2423 = vpop.f32.mrb[0].mxu0
      %v2424 = vadd.f32 %v2315, %v2423
      %v2425 = vpop.f32.mrb[0].mxu0
      %v2426 = vpop.f32.mrb[0].mxu0
      %v2427 = vadd.f32 %v2315, %v2426
      %v2428 = vpop.f32.mrb[0].mxu0
      %2429 = vmatprep.mubr.bf16.mxu0 0
      %2430 = vmatmul.mubr.bf16.gmra.mrb[0].mxu0 %v2330
      %v2431 = vpop.f32.mrb[0].mxu0
      %v2432 = vadd.f32 %v2315, %v2431
      %v2433 = vpop.f32.mrb[0].mxu0
      %v2434 = vpop.f32.mrb[0].mxu0
      %v2435 = vadd.f32 %v2315, %v2434
      %v2436 = vpop.f32.mrb[0].mxu0
      %2437 = vmatprep.mubr.bf16.mxu0 0
      %2438 = vmatmul.mubr.bf16.gmra.mrb[0].mxu0 %v2333
      %v2439 = vpop.f32.mrb[0].mxu0
      %v2440 = vadd.f32 %v2315, %v2439
      %v2441 = vpop.f32.mrb[0].mxu0
      %v2442 = vpop.f32.mrb[0].mxu0
      %v2443 = vadd.f32 %v2315, %v2442
      %v2444 = vpop.f32.mrb[0].mxu0
      %2445 = vmatprep.mubr.bf16.mxu0 0
      %2446 = vmatmul.mubr.bf16.gmra.mrb[0].mxu0 %v2336
      %v2447 = vpop.f32.mrb[0].mxu0
      %v2448 = vadd.f32 %v2315, %v2447
      %v2449 = vpop.f32.mrb[0].mxu0
      %v2450 = vpop.f32.mrb[0].mxu0
      %v2451 = vadd.f32 %v2315, %v2450
      %v2452 = vpop.f32.mrb[0].mxu0
      %2453 = vmatprep.mubr.bf16.mxu0 0
      %2454 = vmatmul.mubr.bf16.gmra.mrb[0].mxu0 %v2339
      %v2455 = vpop.f32.mrb[0].mxu0
      %v2456 = vadd.f32 %v2315, %v2455
      %v2457 = vpop.f32.mrb[0].mxu0
      %v2458 = vpop.f32.mrb[0].mxu0
      %v2459 = vadd.f32 %v2315, %v2458
      %v2460 = vpop.f32.mrb[0].mxu0
      %2461 = vmatprep.mubr.bf16.mxu0 0
      %2462 = vmatmul.mubr.bf16.gmra.mrb[0].mxu0 %v2342
      %v2463 = vpop.f32.mrb[0].mxu0
      %v2464 = vadd.f32 %v2315, %v2463
      %v2465 = vpop.f32.mrb[0].mxu0
      %v2466 = vpop.f32.mrb[0].mxu0
      %v2467 = vadd.f32 %v2315, %v2466
      %v2468 = vpop.f32.mrb[0].mxu0
      %2469 = vmatprep.mubr.bf16.mxu0 0
      %2470 = vmatmul.mubr.bf16.gmra.mrb[0].mxu0 %v2345
      %v2471 = vpop.f32.mrb[0].mxu0
      %v2472 = vadd.f32 %v2315, %v2471
      %v2473 = vpop.f32.mrb[0].mxu0
      %v2474 = vpop.f32.mrb[0].mxu0
      %v2475 = vadd.f32 %v2315, %v2474
      %v2476 = vpop.f32.mrb[0].mxu0
      %2477 = vmatprep.mubr.bf16.mxu0 0
      %2478 = vmatmul.mubr.bf16.gmra.mrb[0].mxu0 %v2348
      %v2479 = vpop.f32.mrb[0].mxu0
      %v2480 = vadd.f32 %v2315, %v2479
      %v2481 = vpop.f32.mrb[0].mxu0
      %v2482 = vpop.f32.mrb[0].mxu0
      %v2483 = vadd.f32 %v2315, %v2482
      %v2484 = vpop.f32.mrb[0].mxu0
      %2485 = vmatprep.mubr.bf16.mxu0 0
      %2486 = vmatmul.mubr.bf16.gmra.mrb[0].mxu0 %v2351
      %v2487 = vpop.f32.mrb[0].mxu0
      %v2488 = vadd.f32 %v2315, %v2487
      %v2489 = vpop.f32.mrb[0].mxu0
      %v2490 = vpop.f32.mrb[0].mxu0
      %v2491 = vadd.f32 %v2315, %v2490
      %v2492 = vpop.f32.mrb[0].mxu0
      %2493 = vmatprep.mubr.bf16.mxu0 0
      %2494 = vmatmul.mubr.bf16.gmra.mrb[0].mxu0 %v2354
      %v2495 = vpop.f32.mrb[0].mxu0
      %v2496 = vadd.f32 %v2315, %v2495
      %v2497 = vpop.f32.mrb[0].mxu0
      %v2498 = vpop.f32.mrb[0].mxu0
      %v2499 = vadd.f32 %v2315, %v2498
      %v2500 = vpop.f32.mrb[0].mxu0
      %2501 = vmatprep.mubr.bf16.mxu0 0
      %2502 = vmatmul.mubr.bf16.gmra.mrb[0].mxu0 %v2357
      %v2503 = vpop.f32.mrb[0].mxu0
      %v2504 = vadd.f32 %v2315, %v2503
      %v2505 = vpop.f32.mrb[0].mxu0
      %v2506 = vpop.f32.mrb[0].mxu0
      %v2507 = vadd.f32 %v2315, %v2506
      %v2508 = vpop.f32.mrb[0].mxu0
      %2509 = vmatprep.mubr.bf16.mxu0 0
      %2510 = vmatmul.mubr.bf16.gmra.mrb[0].mxu0 %v2360
      %v2511 = vpop.f32.mrb[0].mxu0
      %v2512 = vadd.f32 %v2315, %v2511
      %v2513 = vpop.f32.mrb[0].mxu0
      %v2514 = vpop.f32.mrb[0].mxu0
      %v2515 = vadd.f32 %v2315, %v2514
      %v2516 = vpop.f32.mrb[0].mxu0
      %2517 = vmatprep.mubr.bf16.mxu0 0
      %2518 = vmatmul.mubr.bf16.gmra.mrb[0].mxu0 %v2363
      %v2519 = vpop.f32.mrb[0].mxu0
      %v2520 = vadd.f32 %v2315, %v2519
      %v2521 = vpop.f32.mrb[0].mxu0
      %v2522 = vpop.f32.mrb[0].mxu0
      %v2523 = vadd.f32 %v2315, %v2522
      %v2524 = vpop.f32.mrb[0].mxu0
      %2525 = vdwg.mxu0
      %v2526 = vmax.f32 %v2400, 0.0
      %v2527 = vmax.f32 %v2403, 0.0
      %v2528 = vmax.f32 %v2408, 0.0
      %v2529 = vmax.f32 %v2411, 0.0
      %v2530 = vmax.f32 %v2416, 0.0
      %v2531 = vmax.f32 %v2419, 0.0
      %v2532 = vmax.f32 %v2424, 0.0
      %v2533 = vmax.f32 %v2427, 0.0
      %v2534 = vmax.f32 %v2432, 0.0
      %v2535 = vmax.f32 %v2435, 0.0
      %v2536 = vmax.f32 %v2440, 0.0
      %v2537 = vmax.f32 %v2443, 0.0
      %v2538 = vmax.f32 %v2448, 0.0
      %v2539 = vmax.f32 %v2451, 0.0
      %v2540 = vmax.f32 %v2456, 0.0
      %v2541 = vmax.f32 %v2459, 0.0
      %v2542 = vmax.f32 %v2464, 0.0
      %v2543 = vmax.f32 %v2467, 0.0
      %v2544 = vmax.f32 %v2472, 0.0
      %v2545 = vmax.f32 %v2475, 0.0
      %v2546 = vmax.f32 %v2480, 0.0
      %v2547 = vmax.f32 %v2483, 0.0
      %v2548 = vmax.f32 %v2488, 0.0
      %v2549 = vmax.f32 %v2491, 0.0
      %v2550 = vmax.f32 %v2496, 0.0
      %v2551 = vmax.f32 %v2499, 0.0
      %v2552 = vmax.f32 %v2504, 0.0
      %v2553 = vmax.f32 %v2507, 0.0
      %v2554 = vmax.f32 %v2512, 0.0
      %v2555 = vmax.f32 %v2515, 0.0
      %v2556 = vmax.f32 %v2520, 0.0
      %v2557 = vmax.f32 %v2523, 0.0
      %v2558 = vpack.c.bf16 %v2527, %v2526
      %v2559 = vpack.c.bf16 %v2529, %v2528
      %v2560 = vpack.c.bf16 %v2531, %v2530
      %v2561 = vpack.c.bf16 %v2533, %v2532
      %v2562 = vpack.c.bf16 %v2535, %v2534
      %v2563 = vpack.c.bf16 %v2537, %v2536
      %v2564 = vpack.c.bf16 %v2539, %v2538
      %v2565 = vpack.c.bf16 %v2541, %v2540
      %v2566 = vpack.c.bf16 %v2543, %v2542
      %v2567 = vpack.c.bf16 %v2545, %v2544
      %v2568 = vpack.c.bf16 %v2547, %v2546
      %v2569 = vpack.c.bf16 %v2549, %v2548
      %v2570 = vpack.c.bf16 %v2551, %v2550
      %v2571 = vpack.c.bf16 %v2553, %v2552
      %v2572 = vpack.c.bf16 %v2555, %v2554
      %v2573 = vpack.c.bf16 %v2557, %v2556
      %v2590 = vunpack.c.l.b16 %v206
      %v2591 = vunpack.c.l.b16 %v207
      %v2592 = vunpack.c.l.b16 %v208
      %v2593 = vunpack.c.l.b16 %v209
      %v2594 = vunpack.c.l.b16 %v210
      %v2595 = vunpack.c.l.b16 %v211
      %v2596 = vunpack.c.l.b16 %v212
      %v2597 = vunpack.c.l.b16 %v213
      %v2598 = vunpack.c.l.b16 %v214
      %v2599 = vunpack.c.l.b16 %v215
      %v2600 = vunpack.c.l.b16 %v216
      %v2601 = vunpack.c.l.b16 %v217
      %v2602 = vunpack.c.l.b16 %v218
      %v2603 = vunpack.c.l.b16 %v219
      %v2604 = vunpack.c.l.b16 %v220
      %v2605 = vunpack.c.l.b16 %v221
      %v2606 = vpack.c.b16 %v2591, %v2590
      %v2607 = vpack.c.b16 %v2593, %v2592
      %v2608 = vpack.c.b16 %v2595, %v2594
      %v2609 = vpack.c.b16 %v2597, %v2596
      %v2610 = vpack.c.b16 %v2599, %v2598
      %v2611 = vpack.c.b16 %v2601, %v2600
      %v2612 = vpack.c.b16 %v2603, %v2602
      %v2613 = vpack.c.b16 %v2605, %v2604
      %2622 = vmatprep.subr.bf16.mxu0 0
      %2623 = vmatpush1.bf16.msra.mxu0 %v2606
      %2624 = vmatprep.subr.bf16.mxu0 0
      %2625 = vmatpush1.bf16.msra.mxu0 %v2607
      %2626 = vmatprep.subr.bf16.mxu0 0
      %2627 = vmatpush1.bf16.msra.mxu0 %v2608
      %2628 = vmatprep.subr.bf16.mxu0 0
      %2629 = vmatpush1.bf16.msra.mxu0 %v2609
      %2630 = vmatprep.subr.bf16.mxu0 0
      %2631 = vmatpush1.bf16.msra.mxu0 %v2610
      %2632 = vmatprep.subr.bf16.mxu0 0
      %2633 = vmatpush1.bf16.msra.mxu0 %v2611
      %2634 = vmatprep.subr.bf16.mxu0 0
      %2635 = vmatpush1.bf16.msra.mxu0 %v2612
      %2636 = vmatprep.subr.bf16.mxu0 0
      %2637 = vmatpush1.bf16.msra.mxu0 %v2613
      %2638 = vmatprep.subr.bf16.mxu0 0
      %2639 = vmatpush1.bf16.msra.mxu0 0
      %2640 = vmatprep.subr.bf16.mxu0 0
      %2641 = vmatpush1.bf16.msra.mxu0 0
      %2642 = vmatprep.subr.bf16.mxu0 0
      %2643 = vmatpush1.bf16.msra.mxu0 0
      %2644 = vmatprep.subr.bf16.mxu0 0
      %2645 = vmatpush1.bf16.msra.mxu0 0
      %2646 = vmatprep.subr.bf16.mxu0 0
      %2647 = vmatpush1.bf16.msra.mxu0 0
      %2648 = vmatprep.subr.bf16.mxu0 0
      %2649 = vmatpush1.bf16.msra.mxu0 0
      %2650 = vmatprep.subr.bf16.mxu0 0
      %2651 = vmatpush1.bf16.msra.mxu0 0
      %2652 = vmatprep.subr.bf16.mxu0 0
      %2653 = vmatpush1.bf16.msra.mxu0 0
      %2654 = vmatprep.mubr.bf16.mxu0 0
      %2655 = vmatmul.mubr.bf16.gmra.mrb[0].mxu0 %v2558
      %v2656 = vpop.f32.mrb[0].mxu0
      %v2657 = vadd.f32 0.0, %v2656
      %v2658 = vpop.f32.mrb[0].mxu0
      %v2659 = vpop.f32.mrb[0].mxu0
      %v2660 = vadd.f32 0.0, %v2659
      %v2661 = vpop.f32.mrb[0].mxu0
      %2662 = vmatprep.mubr.bf16.mxu0 0
      %2663 = vmatmul.mubr.bf16.gmra.mrb[0].mxu0 %v2559
      %v2664 = vpop.f32.mrb[0].mxu0
      %v2665 = vadd.f32 0.0, %v2664
      %v2666 = vpop.f32.mrb[0].mxu0
      %v2667 = vpop.f32.mrb[0].mxu0
      %v2668 = vadd.f32 0.0, %v2667
      %v2669 = vpop.f32.mrb[0].mxu0
      %2670 = vmatprep.mubr.bf16.mxu0 0
      %2671 = vmatmul.mubr.bf16.gmra.mrb[0].mxu0 %v2560
      %v2672 = vpop.f32.mrb[0].mxu0
      %v2673 = vadd.f32 0.0, %v2672
      %v2674 = vpop.f32.mrb[0].mxu0
      %v2675 = vpop.f32.mrb[0].mxu0
      %v2676 = vadd.f32 0.0, %v2675
      %v2677 = vpop.f32.mrb[0].mxu0
      %2678 = vmatprep.mubr.bf16.mxu0 0
      %2679 = vmatmul.mubr.bf16.gmra.mrb[0].mxu0 %v2561
      %v2680 = vpop.f32.mrb[0].mxu0
      %v2681 = vadd.f32 0.0, %v2680
      %v2682 = vpop.f32.mrb[0].mxu0
      %v2683 = vpop.f32.mrb[0].mxu0
      %v2684 = vadd.f32 0.0, %v2683
      %v2685 = vpop.f32.mrb[0].mxu0
      %2686 = vmatprep.mubr.bf16.mxu0 0
      %2687 = vmatmul.mubr.bf16.gmra.mrb[0].mxu0 %v2562
      %v2688 = vpop.f32.mrb[0].mxu0
      %v2689 = vadd.f32 0.0, %v2688
      %v2690 = vpop.f32.mrb[0].mxu0
      %v2691 = vpop.f32.mrb[0].mxu0
      %v2692 = vadd.f32 0.0, %v2691
      %v2693 = vpop.f32.mrb[0].mxu0
      %2694 = vmatprep.mubr.bf16.mxu0 0
      %2695 = vmatmul.mubr.bf16.gmra.mrb[0].mxu0 %v2563
      %v2696 = vpop.f32.mrb[0].mxu0
      %v2697 = vadd.f32 0.0, %v2696
      %v2698 = vpop.f32.mrb[0].mxu0
      %v2699 = vpop.f32.mrb[0].mxu0
      %v2700 = vadd.f32 0.0, %v2699
      %v2701 = vpop.f32.mrb[0].mxu0
      %2702 = vmatprep.mubr.bf16.mxu0 0
      %2703 = vmatmul.mubr.bf16.gmra.mrb[0].mxu0 %v2564
      %v2704 = vpop.f32.mrb[0].mxu0
      %v2705 = vadd.f32 0.0, %v2704
      %v2706 = vpop.f32.mrb[0].mxu0
      %v2707 = vpop.f32.mrb[0].mxu0
      %v2708 = vadd.f32 0.0, %v2707
      %v2709 = vpop.f32.mrb[0].mxu0
      %2710 = vmatprep.mubr.bf16.mxu0 0
      %2711 = vmatmul.mubr.bf16.gmra.mrb[0].mxu0 %v2565
      %v2712 = vpop.f32.mrb[0].mxu0
      %v2713 = vadd.f32 0.0, %v2712
      %v2714 = vpop.f32.mrb[0].mxu0
      %v2715 = vpop.f32.mrb[0].mxu0
      %v2716 = vadd.f32 0.0, %v2715
      %v2717 = vpop.f32.mrb[0].mxu0
      %2718 = vmatprep.mubr.bf16.mxu0 0
      %2719 = vmatmul.mubr.bf16.gmra.mrb[0].mxu0 %v2566
      %v2720 = vpop.f32.mrb[0].mxu0
      %v2721 = vadd.f32 0.0, %v2720
      %v2722 = vpop.f32.mrb[0].mxu0
      %v2723 = vpop.f32.mrb[0].mxu0
      %v2724 = vadd.f32 0.0, %v2723
      %v2725 = vpop.f32.mrb[0].mxu0
      %2726 = vmatprep.mubr.bf16.mxu0 0
      %2727 = vmatmul.mubr.bf16.gmra.mrb[0].mxu0 %v2567
      %v2728 = vpop.f32.mrb[0].mxu0
      %v2729 = vadd.f32 0.0, %v2728
      %v2730 = vpop.f32.mrb[0].mxu0
      %v2731 = vpop.f32.mrb[0].mxu0
      %v2732 = vadd.f32 0.0, %v2731
      %v2733 = vpop.f32.mrb[0].mxu0
      %2734 = vmatprep.mubr.bf16.mxu0 0
      %2735 = vmatmul.mubr.bf16.gmra.mrb[0].mxu0 %v2568
      %v2736 = vpop.f32.mrb[0].mxu0
      %v2737 = vadd.f32 0.0, %v2736
      %v2738 = vpop.f32.mrb[0].mxu0
      %v2739 = vpop.f32.mrb[0].mxu0
      %v2740 = vadd.f32 0.0, %v2739
      %v2741 = vpop.f32.mrb[0].mxu0
      %2742 = vmatprep.mubr.bf16.mxu0 0
      %2743 = vmatmul.mubr.bf16.gmra.mrb[0].mxu0 %v2569
      %v2744 = vpop.f32.mrb[0].mxu0
      %v2745 = vadd.f32 0.0, %v2744
      %v2746 = vpop.f32.mrb[0].mxu0
      %v2747 = vpop.f32.mrb[0].mxu0
      %v2748 = vadd.f32 0.0, %v2747
      %v2749 = vpop.f32.mrb[0].mxu0
      %2750 = vmatprep.mubr.bf16.mxu0 0
      %2751 = vmatmul.mubr.bf16.gmra.mrb[0].mxu0 %v2570
      %v2752 = vpop.f32.mrb[0].mxu0
      %v2753 = vadd.f32 0.0, %v2752
      %v2754 = vpop.f32.mrb[0].mxu0
      %v2755 = vpop.f32.mrb[0].mxu0
      %v2756 = vadd.f32 0.0, %v2755
      %v2757 = vpop.f32.mrb[0].mxu0
      %2758 = vmatprep.mubr.bf16.mxu0 0
      %2759 = vmatmul.mubr.bf16.gmra.mrb[0].mxu0 %v2571
      %v2760 = vpop.f32.mrb[0].mxu0
      %v2761 = vadd.f32 0.0, %v2760
      %v2762 = vpop.f32.mrb[0].mxu0
      %v2763 = vpop.f32.mrb[0].mxu0
      %v2764 = vadd.f32 0.0, %v2763
      %v2765 = vpop.f32.mrb[0].mxu0
      %2766 = vmatprep.mubr.bf16.mxu0 0
      %2767 = vmatmul.mubr.bf16.gmra.mrb[0].mxu0 %v2572
      %v2768 = vpop.f32.mrb[0].mxu0
      %v2769 = vadd.f32 0.0, %v2768
      %v2770 = vpop.f32.mrb[0].mxu0
      %v2771 = vpop.f32.mrb[0].mxu0
      %v2772 = vadd.f32 0.0, %v2771
      %v2773 = vpop.f32.mrb[0].mxu0
      %2774 = vmatprep.mubr.bf16.mxu0 0
      %2775 = vmatmul.mubr.bf16.gmra.mrb[0].mxu0 %v2573
      %v2776 = vpop.f32.mrb[0].mxu0
      %v2777 = vadd.f32 0.0, %v2776
      %v2778 = vpop.f32.mrb[0].mxu0
      %v2779 = vpop.f32.mrb[0].mxu0
      %v2780 = vadd.f32 0.0, %v2779
      %v2781 = vpop.f32.mrb[0].mxu0
      %2782 = vdwg.mxu0
      %v2783 = vadd.f32 %v2224, %v2657
      %v2784 = vadd.f32 %v2225, %v2660
      %v2785 = vadd.f32 %v2226, %v2665
      %v2786 = vadd.f32 %v2227, %v2668
      %v2787 = vadd.f32 %v2228, %v2673
      %v2788 = vadd.f32 %v2229, %v2676
      %v2789 = vadd.f32 %v2230, %v2681
      %v2790 = vadd.f32 %v2231, %v2684
      %v2791 = vadd.f32 %v2232, %v2689
      %v2792 = vadd.f32 %v2233, %v2692
      %v2793 = vadd.f32 %v2234, %v2697
      %v2794 = vadd.f32 %v2235, %v2700
      %v2795 = vadd.f32 %v2236, %v2705
      %v2796 = vadd.f32 %v2237, %v2708
      %v2797 = vadd.f32 %v2238, %v2713
      %v2798 = vadd.f32 %v2239, %v2716
      %v2799 = vadd.f32 %v2240, %v2721
      %v2800 = vadd.f32 %v2241, %v2724
      %v2801 = vadd.f32 %v2242, %v2729
      %v2802 = vadd.f32 %v2243, %v2732
      %v2803 = vadd.f32 %v2244, %v2737
      %v2804 = vadd.f32 %v2245, %v2740
      %v2805 = vadd.f32 %v2246, %v2745
      %v2806 = vadd.f32 %v2247, %v2748
      %v2807 = vadd.f32 %v2248, %v2753
      %v2808 = vadd.f32 %v2249, %v2756
      %v2809 = vadd.f32 %v2250, %v2761
      %v2810 = vadd.f32 %v2251, %v2764
      %v2811 = vadd.f32 %v2252, %v2769
      %v2812 = vadd.f32 %v2253, %v2772
      %v2813 = vadd.f32 %v2254, %v2777
      %v2814 = vadd.f32 %v2255, %v2780
      %v2816 = vlaneseq
      %v2817 = vshrl.u32 %v2816, 7
      %v2818 = vsub.s32 0, %v2817
      %v2819 = vrot.slane %v242, %v2818
      %2820 = vrot.lane.b32.xlu0 %v2819, 96
      %v2821 = vpop.permute.xlu0 %2820
      %v2823 = vadd.f32 %v2783, %v2821
      %v2824 = vadd.f32 %v2784, %v2821
      %v2825 = vadd.f32 %v2785, %v2821
      %v2826 = vadd.f32 %v2786, %v2821
      %v2827 = vadd.f32 %v2787, %v2821
      %v2828 = vadd.f32 %v2788, %v2821
      %v2829 = vadd.f32 %v2789, %v2821
      %v2830 = vadd.f32 %v2790, %v2821
      %v2831 = vadd.f32 %v2791, %v2821
      %v2832 = vadd.f32 %v2792, %v2821
      %v2833 = vadd.f32 %v2793, %v2821
      %v2834 = vadd.f32 %v2794, %v2821
      %v2835 = vadd.f32 %v2795, %v2821
      %v2836 = vadd.f32 %v2796, %v2821
      %v2837 = vadd.f32 %v2797, %v2821
      %v2838 = vadd.f32 %v2798, %v2821
      %v2839 = vadd.f32 %v2799, %v2821
      %v2840 = vadd.f32 %v2800, %v2821
      %v2841 = vadd.f32 %v2801, %v2821
      %v2842 = vadd.f32 %v2802, %v2821
      %v2843 = vadd.f32 %v2803, %v2821
      %v2844 = vadd.f32 %v2804, %v2821
      %v2845 = vadd.f32 %v2805, %v2821
      %v2846 = vadd.f32 %v2806, %v2821
      %v2847 = vadd.f32 %v2807, %v2821
      %v2848 = vadd.f32 %v2808, %v2821
      %v2849 = vadd.f32 %v2809, %v2821
      %v2850 = vadd.f32 %v2810, %v2821
      %v2851 = vadd.f32 %v2811, %v2821
      %v2852 = vadd.f32 %v2812, %v2821
      %v2853 = vadd.f32 %v2813, %v2821
      %v2854 = vadd.f32 %v2814, %v2821
      %v2859 = vunpack.c.l.b16 %v231
      %v2860 = vunpack.c.l.b16 %v232
      %v2861 = vunpack.c.l.b16 %v233
      %v2862 = vunpack.c.l.b16 %v234
      %v2863 = vpack.c.b16 %v2860, %v2859
      %v2864 = vpack.c.b16 %v2862, %v2861
      %2865 = vrot.lane.b32.xlu0 %v2863, 32
      %v2866 = vpop.permute.xlu0 %2865
      %2867 = vrot.lane.b32.xlu0 %v2864, 32
      %v2868 = vpop.permute.xlu0 %2867
      %2871 = vrot.lane.b32.xlu0 %v2819, 64
      %v2872 = vpop.permute.xlu0 %2871
      %v2875 = vsel %vm655, %v222, 0
      %2877 = vmatprep.subr.bf16.mxu0 0
      %2878 = vmatpush1.bf16.msra.mxu0 %v2866
      %2879 = vmatprep.subr.bf16.mxu0 0
      %2880 = vmatpush1.bf16.msra.mxu0 %v2868
      %2881 = vmatprep.subr.bf16.mxu0 0
      %2882 = vmatpush1.bf16.msra.mxu0 0
      %2883 = vmatprep.subr.bf16.mxu0 0
      %2884 = vmatpush1.bf16.msra.mxu0 0
      %2885 = vmatprep.subr.bf16.mxu0 0
      %2886 = vmatpush1.bf16.msra.mxu0 0
      %2887 = vmatprep.subr.bf16.mxu0 0
      %2888 = vmatpush1.bf16.msra.mxu0 0
      %2889 = vmatprep.subr.bf16.mxu0 0
      %2890 = vmatpush1.bf16.msra.mxu0 0
      %2891 = vmatprep.subr.bf16.mxu0 0
      %2892 = vmatpush1.bf16.msra.mxu0 0
      %2893 = vmatprep.subr.bf16.mxu0 0
      %2894 = vmatpush1.bf16.msra.mxu0 0
      %2895 = vmatprep.subr.bf16.mxu0 0
      %2896 = vmatpush1.bf16.msra.mxu0 0
      %2897 = vmatprep.subr.bf16.mxu0 0
      %2898 = vmatpush1.bf16.msra.mxu0 0
      %2899 = vmatprep.subr.bf16.mxu0 0
      %2900 = vmatpush1.bf16.msra.mxu0 0
      %2901 = vmatprep.subr.bf16.mxu0 0
      %2902 = vmatpush1.bf16.msra.mxu0 0
      %2903 = vmatprep.subr.bf16.mxu0 0
      %2904 = vmatpush1.bf16.msra.mxu0 0
      %2905 = vmatprep.subr.bf16.mxu0 0
      %2906 = vmatpush1.bf16.msra.mxu0 0
      %2907 = vmatprep.subr.bf16.mxu0 0
      %2908 = vmatpush1.bf16.msra.mxu0 0
      %2909 = vmatprep.mubr.bf16.mxu0 0
      %2910 = vmatmul.mubr.bf16.gmra.mrb[0].mxu0 %v2875
      %v2911 = vpop.f32.mrb[0].mxu0
      %v2912 = vadd.f32 %v2872, %v2911
      %v2913 = vpop.f32.mrb[0].mxu0
      %v2914 = vpop.f32.mrb[0].mxu0
      %v2915 = vpop.f32.mrb[0].mxu0
      %2916 = vdwg.mxu0
      %v2917 = vpack.c.bf16 %v2824, %v2823
      %v2918 = vpack.c.bf16 %v2826, %v2825
      %v2919 = vpack.c.bf16 %v2828, %v2827
      %v2920 = vpack.c.bf16 %v2830, %v2829
      %v2921 = vpack.c.bf16 %v2832, %v2831
      %v2922 = vpack.c.bf16 %v2834, %v2833
      %v2923 = vpack.c.bf16 %v2836, %v2835
      %v2924 = vpack.c.bf16 %v2838, %v2837
      %v2925 = vpack.c.bf16 %v2840, %v2839
      %v2926 = vpack.c.bf16 %v2842, %v2841
      %v2927 = vpack.c.bf16 %v2844, %v2843
      %v2928 = vpack.c.bf16 %v2846, %v2845
      %v2929 = vpack.c.bf16 %v2848, %v2847
      %v2930 = vpack.c.bf16 %v2850, %v2849
      %v2931 = vpack.c.bf16 %v2852, %v2851
      %v2932 = vpack.c.bf16 %v2854, %v2853
      %v2934 = vlaneseq
      %v2935 = vshrl.u32 %v2934, 7
      %v2936 = vsub.s32 0, %v2935
      %v2937 = vrot.slane %v243, %v2936
      %v2938 = vlaneseq
      %v2939 = vshrl.u32 %v2938, 7
      %v2940 = vsub.s32 1, %v2939
      %v2941 = vrot.slane %v243, %v2940
      %v2946 = vunpack.c.l.b16 %v235
      %v2947 = vunpack.c.l.b16 %v236
      %v2948 = vunpack.c.l.b16 %v237
      %v2949 = vunpack.c.l.b16 %v238
      %v2950 = vpack.c.b16 %v2947, %v2946
      %v2951 = vpack.c.b16 %v2949, %v2948
      %2954 = vrot.lane.b32.xlu0 %v2937, 32
      %v2955 = vpop.permute.xlu0 %2954
      %2956 = vrot.lane.b32.xlu0 %v2941, 32
      %v2957 = vpop.permute.xlu0 %2956
      %v2958 = vsel %vm655, %v2955, %v2957
      %v2961 = vsel %vm655, %v2917, 0
      %v2964 = vsel %vm655, %v2918, 0
      %v2967 = vsel %vm655, %v2919, 0
      %v2970 = vsel %vm655, %v2920, 0
      %v2973 = vsel %vm655, %v2921, 0
      %v2976 = vsel %vm655, %v2922, 0
      %v2979 = vsel %vm655, %v2923, 0
      %v2982 = vsel %vm655, %v2924, 0
      %v2985 = vsel %vm655, %v2925, 0
      %v2988 = vsel %vm655, %v2926, 0
      %v2991 = vsel %vm655, %v2927, 0
      %v2994 = vsel %vm655, %v2928, 0
      %v2997 = vsel %vm655, %v2929, 0
      %v3000 = vsel %vm655, %v2930, 0
      %v3003 = vsel %vm655, %v2931, 0
      %v3006 = vsel %vm655, %v2932, 0
      %3008 = vmatprep.subr.bf16.mxu0 0
      %3009 = vmatpush1.bf16.msra.mxu0 %v2950
      %3010 = vmatprep.subr.bf16.mxu0 0
      %3011 = vmatpush1.bf16.msra.mxu0 %v2951
      %3012 = vmatprep.subr.bf16.mxu0 0
      %3013 = vmatpush1.bf16.msra.mxu0 0
      %3014 = vmatprep.subr.bf16.mxu0 0
      %3015 = vmatpush1.bf16.msra.mxu0 0
      %3016 = vmatprep.subr.bf16.mxu0 0
      %3017 = vmatpush1.bf16.msra.mxu0 0
      %3018 = vmatprep.subr.bf16.mxu0 0
      %3019 = vmatpush1.bf16.msra.mxu0 0
      %3020 = vmatprep.subr.bf16.mxu0 0
      %3021 = vmatpush1.bf16.msra.mxu0 0
      %3022 = vmatprep.subr.bf16.mxu0 0
      %3023 = vmatpush1.bf16.msra.mxu0 0
      %3024 = vmatprep.subr.bf16.mxu0 0
      %3025 = vmatpush1.bf16.msra.mxu0 0
      %3026 = vmatprep.subr.bf16.mxu0 0
      %3027 = vmatpush1.bf16.msra.mxu0 0
      %3028 = vmatprep.subr.bf16.mxu0 0
      %3029 = vmatpush1.bf16.msra.mxu0 0
      %3030 = vmatprep.subr.bf16.mxu0 0
      %3031 = vmatpush1.bf16.msra.mxu0 0
      %3032 = vmatprep.subr.bf16.mxu0 0
      %3033 = vmatpush1.bf16.msra.mxu0 0
      %3034 = vmatprep.subr.bf16.mxu0 0
      %3035 = vmatpush1.bf16.msra.mxu0 0
      %3036 = vmatprep.subr.bf16.mxu0 0
      %3037 = vmatpush1.bf16.msra.mxu0 0
      %3038 = vmatprep.subr.bf16.mxu0 0
      %3039 = vmatpush1.bf16.msra.mxu0 0
      %3040 = vmatprep.mubr.bf16.mxu0 0
      %3041 = vmatmul.mubr.bf16.gmra.mrb[0].mxu0 %v2961
      %v3042 = vpop.f32.mrb[0].mxu0
      %v3043 = vadd.f32 %v2958, %v3042
      %v3044 = vpop.f32.mrb[0].mxu0
      %v3045 = vpop.f32.mrb[0].mxu0
      %v3046 = vadd.f32 %v2958, %v3045
      %v3047 = vpop.f32.mrb[0].mxu0
      %3048 = vmatprep.mubr.bf16.mxu0 0
      %3049 = vmatmul.mubr.bf16.gmra.mrb[0].mxu0 %v2964
      %v3050 = vpop.f32.mrb[0].mxu0
      %v3051 = vadd.f32 %v2958, %v3050
      %v3052 = vpop.f32.mrb[0].mxu0
      %v3053 = vpop.f32.mrb[0].mxu0
      %v3054 = vadd.f32 %v2958, %v3053
      %v3055 = vpop.f32.mrb[0].mxu0
      %3056 = vmatprep.mubr.bf16.mxu0 0
      %3057 = vmatmul.mubr.bf16.gmra.mrb[0].mxu0 %v2967
      %v3058 = vpop.f32.mrb[0].mxu0
      %v3059 = vadd.f32 %v2958, %v3058
      %v3060 = vpop.f32.mrb[0].mxu0
      %v3061 = vpop.f32.mrb[0].mxu0
      %v3062 = vadd.f32 %v2958, %v3061
      %v3063 = vpop.f32.mrb[0].mxu0
      %3064 = vmatprep.mubr.bf16.mxu0 0
      %3065 = vmatmul.mubr.bf16.gmra.mrb[0].mxu0 %v2970
      %v3066 = vpop.f32.mrb[0].mxu0
      %v3067 = vadd.f32 %v2958, %v3066
      %v3068 = vpop.f32.mrb[0].mxu0
      %v3069 = vpop.f32.mrb[0].mxu0
      %v3070 = vadd.f32 %v2958, %v3069
      %v3071 = vpop.f32.mrb[0].mxu0
      %3072 = vmatprep.mubr.bf16.mxu0 0
      %3073 = vmatmul.mubr.bf16.gmra.mrb[0].mxu0 %v2973
      %v3074 = vpop.f32.mrb[0].mxu0
      %v3075 = vadd.f32 %v2958, %v3074
      %v3076 = vpop.f32.mrb[0].mxu0
      %v3077 = vpop.f32.mrb[0].mxu0
      %v3078 = vadd.f32 %v2958, %v3077
      %v3079 = vpop.f32.mrb[0].mxu0
      %3080 = vmatprep.mubr.bf16.mxu0 0
      %3081 = vmatmul.mubr.bf16.gmra.mrb[0].mxu0 %v2976
      %v3082 = vpop.f32.mrb[0].mxu0
      %v3083 = vadd.f32 %v2958, %v3082
      %v3084 = vpop.f32.mrb[0].mxu0
      %v3085 = vpop.f32.mrb[0].mxu0
      %v3086 = vadd.f32 %v2958, %v3085
      %v3087 = vpop.f32.mrb[0].mxu0
      %3088 = vmatprep.mubr.bf16.mxu0 0
      %3089 = vmatmul.mubr.bf16.gmra.mrb[0].mxu0 %v2979
      %v3090 = vpop.f32.mrb[0].mxu0
      %v3091 = vadd.f32 %v2958, %v3090
      %v3092 = vpop.f32.mrb[0].mxu0
      %v3093 = vpop.f32.mrb[0].mxu0
      %v3094 = vadd.f32 %v2958, %v3093
      %v3095 = vpop.f32.mrb[0].mxu0
      %3096 = vmatprep.mubr.bf16.mxu0 0
      %3097 = vmatmul.mubr.bf16.gmra.mrb[0].mxu0 %v2982
      %v3098 = vpop.f32.mrb[0].mxu0
      %v3099 = vadd.f32 %v2958, %v3098
      %v3100 = vpop.f32.mrb[0].mxu0
      %v3101 = vpop.f32.mrb[0].mxu0
      %v3102 = vadd.f32 %v2958, %v3101
      %v3103 = vpop.f32.mrb[0].mxu0
      %3104 = vmatprep.mubr.bf16.mxu0 0
      %3105 = vmatmul.mubr.bf16.gmra.mrb[0].mxu0 %v2985
      %v3106 = vpop.f32.mrb[0].mxu0
      %v3107 = vadd.f32 %v2958, %v3106
      %v3108 = vpop.f32.mrb[0].mxu0
      %v3109 = vpop.f32.mrb[0].mxu0
      %v3110 = vadd.f32 %v2958, %v3109
      %v3111 = vpop.f32.mrb[0].mxu0
      %3112 = vmatprep.mubr.bf16.mxu0 0
      %3113 = vmatmul.mubr.bf16.gmra.mrb[0].mxu0 %v2988
      %v3114 = vpop.f32.mrb[0].mxu0
      %v3115 = vadd.f32 %v2958, %v3114
      %v3116 = vpop.f32.mrb[0].mxu0
      %v3117 = vpop.f32.mrb[0].mxu0
      %v3118 = vadd.f32 %v2958, %v3117
      %v3119 = vpop.f32.mrb[0].mxu0
      %3120 = vmatprep.mubr.bf16.mxu0 0
      %3121 = vmatmul.mubr.bf16.gmra.mrb[0].mxu0 %v2991
      %v3122 = vpop.f32.mrb[0].mxu0
      %v3123 = vadd.f32 %v2958, %v3122
      %v3124 = vpop.f32.mrb[0].mxu0
      %v3125 = vpop.f32.mrb[0].mxu0
      %v3126 = vadd.f32 %v2958, %v3125
      %v3127 = vpop.f32.mrb[0].mxu0
      %3128 = vmatprep.mubr.bf16.mxu0 0
      %3129 = vmatmul.mubr.bf16.gmra.mrb[0].mxu0 %v2994
      %v3130 = vpop.f32.mrb[0].mxu0
      %v3131 = vadd.f32 %v2958, %v3130
      %v3132 = vpop.f32.mrb[0].mxu0
      %v3133 = vpop.f32.mrb[0].mxu0
      %v3134 = vadd.f32 %v2958, %v3133
      %v3135 = vpop.f32.mrb[0].mxu0
      %3136 = vmatprep.mubr.bf16.mxu0 0
      %3137 = vmatmul.mubr.bf16.gmra.mrb[0].mxu0 %v2997
      %v3138 = vpop.f32.mrb[0].mxu0
      %v3139 = vadd.f32 %v2958, %v3138
      %v3140 = vpop.f32.mrb[0].mxu0
      %v3141 = vpop.f32.mrb[0].mxu0
      %v3142 = vadd.f32 %v2958, %v3141
      %v3143 = vpop.f32.mrb[0].mxu0
      %3144 = vmatprep.mubr.bf16.mxu0 0
      %3145 = vmatmul.mubr.bf16.gmra.mrb[0].mxu0 %v3000
      %v3146 = vpop.f32.mrb[0].mxu0
      %v3147 = vadd.f32 %v2958, %v3146
      %v3148 = vpop.f32.mrb[0].mxu0
      %v3149 = vpop.f32.mrb[0].mxu0
      %v3150 = vadd.f32 %v2958, %v3149
      %v3151 = vpop.f32.mrb[0].mxu0
      %3152 = vmatprep.mubr.bf16.mxu0 0
      %3153 = vmatmul.mubr.bf16.gmra.mrb[0].mxu0 %v3003
      %v3154 = vpop.f32.mrb[0].mxu0
      %v3155 = vadd.f32 %v2958, %v3154
      %v3156 = vpop.f32.mrb[0].mxu0
      %v3157 = vpop.f32.mrb[0].mxu0
      %v3158 = vadd.f32 %v2958, %v3157
      %v3159 = vpop.f32.mrb[0].mxu0
      %3160 = vmatprep.mubr.bf16.mxu0 0
      %3161 = vmatmul.mubr.bf16.gmra.mrb[0].mxu0 %v3006
      %v3162 = vpop.f32.mrb[0].mxu0
      %v3163 = vadd.f32 %v2958, %v3162
      %v3164 = vpop.f32.mrb[0].mxu0
      %v3165 = vpop.f32.mrb[0].mxu0
      %v3166 = vadd.f32 %v2958, %v3165
      %v3167 = vpop.f32.mrb[0].mxu0
      %3168 = vdwg.mxu0
      %v3169 = vpack.c.bf16 %v2912, %v2912
      %v3170 = vpack.c.bf16 %v3046, %v3043
      %v3171 = vpack.c.bf16 %v3054, %v3051
      %v3172 = vpack.c.bf16 %v3062, %v3059
      %v3173 = vpack.c.bf16 %v3070, %v3067
      %v3174 = vpack.c.bf16 %v3078, %v3075
      %v3175 = vpack.c.bf16 %v3086, %v3083
      %v3176 = vpack.c.bf16 %v3094, %v3091
      %v3177 = vpack.c.bf16 %v3102, %v3099
      %v3178 = vpack.c.bf16 %v3110, %v3107
      %v3179 = vpack.c.bf16 %v3118, %v3115
      %v3180 = vpack.c.bf16 %v3126, %v3123
      %v3181 = vpack.c.bf16 %v3134, %v3131
      %v3182 = vpack.c.bf16 %v3142, %v3139
      %v3183 = vpack.c.bf16 %v3150, %v3147
      %v3184 = vpack.c.bf16 %v3158, %v3155
      %v3185 = vpack.c.bf16 %v3166, %v3163
      %v3187 = vsel %vm655, %v3169, 0
      %v3190 = vsel %vm655, %v3170, 0
      %v3193 = vsel %vm655, %v3171, 0
      %v3196 = vsel %vm655, %v3172, 0
      %v3199 = vsel %vm655, %v3173, 0
      %v3202 = vsel %vm655, %v3174, 0
      %v3205 = vsel %vm655, %v3175, 0
      %v3208 = vsel %vm655, %v3176, 0
      %v3211 = vsel %vm655, %v3177, 0
      %v3214 = vsel %vm655, %v3178, 0
      %v3217 = vsel %vm655, %v3179, 0
      %v3220 = vsel %vm655, %v3180, 0
      %v3223 = vsel %vm655, %v3181, 0
      %v3226 = vsel %vm655, %v3182, 0
      %v3229 = vsel %vm655, %v3183, 0
      %v3232 = vsel %vm655, %v3184, 0
      %v3235 = vsel %vm655, %v3185, 0
      %3237 = vmatprep.subr.bf16.mxu0 0
      %3238 = vmatpush1.bf16.xpose.msra.mxu0 %v3190
      %3239 = vmatprep.subr.bf16.mxu0 0
      %3240 = vmatpush1.bf16.xpose.msra.mxu0 %v3193
      %3241 = vmatprep.subr.bf16.mxu0 0
      %3242 = vmatpush1.bf16.xpose.msra.mxu0 %v3196
      %3243 = vmatprep.subr.bf16.mxu0 0
      %3244 = vmatpush1.bf16.xpose.msra.mxu0 %v3199
      %3245 = vmatprep.subr.bf16.mxu0 0
      %3246 = vmatpush1.bf16.xpose.msra.mxu0 %v3202
      %3247 = vmatprep.subr.bf16.mxu0 0
      %3248 = vmatpush1.bf16.xpose.msra.mxu0 %v3205
      %3249 = vmatprep.subr.bf16.mxu0 0
      %3250 = vmatpush1.bf16.xpose.msra.mxu0 %v3208
      %3251 = vmatprep.subr.bf16.mxu0 0
      %3252 = vmatpush1.bf16.xpose.msra.mxu0 %v3211
      %3253 = vmatprep.subr.bf16.mxu0 0
      %3254 = vmatpush1.bf16.xpose.msra.mxu0 %v3214
      %3255 = vmatprep.subr.bf16.mxu0 0
      %3256 = vmatpush1.bf16.xpose.msra.mxu0 %v3217
      %3257 = vmatprep.subr.bf16.mxu0 0
      %3258 = vmatpush1.bf16.xpose.msra.mxu0 %v3220
      %3259 = vmatprep.subr.bf16.mxu0 0
      %3260 = vmatpush1.bf16.xpose.msra.mxu0 %v3223
      %3261 = vmatprep.subr.bf16.mxu0 0
      %3262 = vmatpush1.bf16.xpose.msra.mxu0 %v3226
      %3263 = vmatprep.subr.bf16.mxu0 0
      %3264 = vmatpush1.bf16.xpose.msra.mxu0 %v3229
      %3265 = vmatprep.subr.bf16.mxu0 0
      %3266 = vmatpush1.bf16.xpose.msra.mxu0 %v3232
      %3267 = vmatprep.subr.bf16.mxu0 0
      %3268 = vmatpush1.bf16.xpose.msra.mxu0 %v3235
      %3269 = vmatprep.mubr.bf16.mxu0 0
      %3270 = vmatmul.mubr.bf16.gmra.mrb[0].mxu0 %v3187
      %v3271 = vpop.f32.mrb[0].mxu0
      %v3272 = vadd.f32 0.0, %v3271
      %v3273 = vpop.f32.mrb[0].mxu0
      %v3274 = vadd.f32 0.0, %v3273
      %v3275 = vpop.f32.mrb[0].mxu0
      %v3276 = vpop.f32.mrb[0].mxu0
      %3277 = vdwg.mxu0
      %v3278 = vmul.f32 %v3272, 0.17677669
      %v3279 = vmul.f32 %v3274, 0.17677669
      %v3280 = vmax.f32 %v3278, %v3279
      %3281 = vmax.xlane.f32.xlu0 %v3280
      %v3282 = vpop.xlane.xlu0 %3281
      %v3283 = vsub.f32 %v3278, %v3282
      %v3284 = vsub.f32 %v3279, %v3282
      %v3285 = vmul.f32 %v3283, 1.442695
      %v3286 = vpow.pop %v3285
      %v3287 = vmul.f32 %v3284, 1.442695
      %v3288 = vpow.pop %v3287
      %v3289 = vadd.f32 %v3286, %v3288
      %3290 = vadd.xlane.f32.xlu0 %v3289
      %v3291 = vpop.xlane.xlu0 %3290
      %v3292 = vpack.c.bf16 %v3286, %v3286
      %v3293 = vpack.c.bf16 %v3288, %v3288
      %3310 = vrot.lane.b32.xlu0 %v3170, 96
      %v3311 = vpop.permute.xlu0 %3310
      %3312 = vrot.lane.b32.xlu0 %v3171, 96
      %v3313 = vpop.permute.xlu0 %3312
      %3314 = vrot.lane.b32.xlu0 %v3172, 96
      %v3315 = vpop.permute.xlu0 %3314
      %3316 = vrot.lane.b32.xlu0 %v3173, 96
      %v3317 = vpop.permute.xlu0 %3316
      %3318 = vrot.lane.b32.xlu0 %v3174, 96
      %v3319 = vpop.permute.xlu0 %3318
      %3320 = vrot.lane.b32.xlu0 %v3175, 96
      %v3321 = vpop.permute.xlu0 %3320
      %3322 = vrot.lane.b32.xlu0 %v3176, 96
      %v3323 = vpop.permute.xlu0 %3322
      %3324 = vrot.lane.b32.xlu0 %v3177, 96
      %v3325 = vpop.permute.xlu0 %3324
      %3326 = vrot.lane.b32.xlu0 %v3178, 96
      %v3327 = vpop.permute.xlu0 %3326
      %3328 = vrot.lane.b32.xlu0 %v3179, 96
      %v3329 = vpop.permute.xlu0 %3328
      %3330 = vrot.lane.b32.xlu0 %v3180, 96
      %v3331 = vpop.permute.xlu0 %3330
      %3332 = vrot.lane.b32.xlu0 %v3181, 96
      %v3333 = vpop.permute.xlu0 %3332
      %3334 = vrot.lane.b32.xlu0 %v3182, 96
      %v3335 = vpop.permute.xlu0 %3334
      %3336 = vrot.lane.b32.xlu0 %v3183, 96
      %v3337 = vpop.permute.xlu0 %3336
      %3338 = vrot.lane.b32.xlu0 %v3184, 96
      %v3339 = vpop.permute.xlu0 %3338
      %3340 = vrot.lane.b32.xlu0 %v3185, 96
      %v3341 = vpop.permute.xlu0 %3340
      %3358 = vmatprep.subr.bf16.mxu0 0
      %3359 = vmatpush1.bf16.msra.mxu0 %v3311
      %3360 = vmatprep.subr.bf16.mxu0 0
      %3361 = vmatpush1.bf16.msra.mxu0 %v3313
      %3362 = vmatprep.subr.bf16.mxu0 0
      %3363 = vmatpush1.bf16.msra.mxu0 %v3315
      %3364 = vmatprep.subr.bf16.mxu0 0
      %3365 = vmatpush1.bf16.msra.mxu0 %v3317
      %3366 = vmatprep.subr.bf16.mxu0 0
      %3367 = vmatpush1.bf16.msra.mxu0 %v3319
      %3368 = vmatprep.subr.bf16.mxu0 0
      %3369 = vmatpush1.bf16.msra.mxu0 %v3321
      %3370 = vmatprep.subr.bf16.mxu0 0
      %3371 = vmatpush1.bf16.msra.mxu0 %v3323
      %3372 = vmatprep.subr.bf16.mxu0 0
      %3373 = vmatpush1.bf16.msra.mxu0 %v3325
      %3374 = vmatprep.subr.bf16.mxu0 0
      %3375 = vmatpush1.bf16.msra.mxu0 %v3327
      %3376 = vmatprep.subr.bf16.mxu0 0
      %3377 = vmatpush1.bf16.msra.mxu0 %v3329
      %3378 = vmatprep.subr.bf16.mxu0 0
      %3379 = vmatpush1.bf16.msra.mxu0 %v3331
      %3380 = vmatprep.subr.bf16.mxu0 0
      %3381 = vmatpush1.bf16.msra.mxu0 %v3333
      %3382 = vmatprep.subr.bf16.mxu0 0
      %3383 = vmatpush1.bf16.msra.mxu0 %v3335
      %3384 = vmatprep.subr.bf16.mxu0 0
      %3385 = vmatpush1.bf16.msra.mxu0 %v3337
      %3386 = vmatprep.subr.bf16.mxu0 0
      %3387 = vmatpush1.bf16.msra.mxu0 %v3339
      %3388 = vmatprep.subr.bf16.mxu0 0
      %3389 = vmatpush1.bf16.msra.mxu0 %v3341
      %3390 = vmatprep.mubr.bf16.mxu0 %v3293
      %3391 = vmatmul.mubr.bf16.gmra.mrb[0].mxu0 %v3292
      %v3392 = vpop.f32.mrb[0].mxu0
      %v3393 = vadd.f32 0.0, %v3392
      %v3394 = vpop.f32.mrb[0].mxu0
      %v3395 = vpop.f32.mrb[0].mxu0
      %v3396 = vpop.f32.mrb[0].mxu0
      %3397 = vdwg.mxu0
      %v3398 = vrcp.pop %v3291
      %v3399 = vmul.f32 %v3393, %v3398
      %v3400 = vadd.f32 %v2912, %v3399
      %v3401 = vpack.c.bf16 %v3400, %v3400
      %v3403 = vlaneseq
      %v3404 = vshrl.u32 %v3403, 7
      %v3405 = vsub.s32 0, %v3404
      %v3406 = vrot.slane %v244, %v3405
      %3407 = vrot.lane.b32.xlu0 %v2950, 64
      %v3408 = vpop.permute.xlu0 %3407
      %3409 = vrot.lane.b32.xlu0 %v2951, 64
      %v3410 = vpop.permute.xlu0 %3409
      %3413 = vrot.lane.b32.xlu0 %v3406, 96
      %v3414 = vpop.permute.xlu0 %3413
      %v3417 = vsel %vm655, %v3401, 0
      %3419 = vmatprep.subr.bf16.mxu0 0
      %3420 = vmatpush1.bf16.msra.mxu0 %v3408
      %3421 = vmatprep.subr.bf16.mxu0 0
      %3422 = vmatpush1.bf16.msra.mxu0 %v3410
      %3423 = vmatprep.subr.bf16.mxu0 0
      %3424 = vmatpush1.bf16.msra.mxu0 0
      %3425 = vmatprep.subr.bf16.mxu0 0
      %3426 = vmatpush1.bf16.msra.mxu0 0
      %3427 = vmatprep.subr.bf16.mxu0 0
      %3428 = vmatpush1.bf16.msra.mxu0 0
      %3429 = vmatprep.subr.bf16.mxu0 0
      %3430 = vmatpush1.bf16.msra.mxu0 0
      %3431 = vmatprep.subr.bf16.mxu0 0
      %3432 = vmatpush1.bf16.msra.mxu0 0
      %3433 = vmatprep.subr.bf16.mxu0 0
      %3434 = vmatpush1.bf16.msra.mxu0 0
      %3435 = vmatprep.subr.bf16.mxu0 0
      %3436 = vmatpush1.bf16.msra.mxu0 0
      %3437 = vmatprep.subr.bf16.mxu0 0
      %3438 = vmatpush1.bf16.msra.mxu0 0
      %3439 = vmatprep.subr.bf16.mxu0 0
      %3440 = vmatpush1.bf16.msra.mxu0 0
      %3441 = vmatprep.subr.bf16.mxu0 0
      %3442 = vmatpush1.bf16.msra.mxu0 0
      %3443 = vmatprep.subr.bf16.mxu0 0
      %3444 = vmatpush1.bf16.msra.mxu0 0
      %3445 = vmatprep.subr.bf16.mxu0 0
      %3446 = vmatpush1.bf16.msra.mxu0 0
      %3447 = vmatprep.subr.bf16.mxu0 0
      %3448 = vmatpush1.bf16.msra.mxu0 0
      %3449 = vmatprep.subr.bf16.mxu0 0
      %3450 = vmatpush1.bf16.msra.mxu0 0
      %3451 = vmatprep.mubr.bf16.mxu0 0
      %3452 = vmatmul.mubr.bf16.gmra.mrb[0].mxu0 %v3417
      %v3453 = vpop.f32.mrb[0].mxu0
      %v3454 = vadd.f32 %v3414, %v3453
      %v3455 = vpop.f32.mrb[0].mxu0
      %v3456 = vpop.f32.mrb[0].mxu0
      %v3457 = vpop.f32.mrb[0].mxu0
      %3458 = vdwg.mxu0
      %v3459 = vlaneseq
      %v3460 = vand.u32 %v3459, 127
      %vm3461 = vcmp.ge.s32.totalorder %v3460, 4
      %v3462 = vxor.u32 %v3454, 2147483648
      %v3463 = vmul.f32 %v3462, 1.442695
      %v3464 = vpow.pop %v3463
      %v3465 = vadd.f32 %v3464, 1.0
      %v3466 = vrcp.pop %v3465
      %v3467 = vmul.f32 1.0, %v3466
      %v3468 = vsel %vm3461, %v3467, %v3454
      %vm3469 = vcmask 64512
      %3470 = vst.msk [vmem:[%s195] sm:$0xff] %vm3469, %v3468
      %p3471 = scmp.lt.s32.totalorder %s15, 1
      %s3472 = scalar_select %p3471, %s15, 1
      %s3473 = smul.addr %s3472, 8
      %s3474 = scalar_lea.vmem %s4, %s3473
      // Predicated region
      $region37: #{rtdetr_forward.1} parent=35 // pred_check
        %p3475 = pneg %p122
      $region38: #{rtdetr_forward.1} parent=35 // pred_check_branch
        %3477 = sbr.rel (%p3475) target = $region40
      $region39: #{rtdetr_forward.1} parent=35 // pred_region
        _
      $region40: #{rtdetr_forward.1} parent=35 // pred_fallthru
        _
    $region36: #{rtdetr_forward.1} parent=5 // pred_fallthru
      _
    %p3478 = scmp.le.s32.totalorder 2, %s10
    // Predicated region
    $region41: #{rtdetr_forward.1} parent=5 // pred_check
      %p3479 = pneg %p3478
    $region42: #{rtdetr_forward.1} parent=5 // pred_check_branch
      %3481 = sbr.rel (%p3479) target = $region44
    $region43: #{rtdetr_forward.1} parent=5 // pred_region
      %s3482 = ssub.s32 %s10, 2
      // Predicated region
      $region45: #{rtdetr_forward.1} parent=43 // pred_check
        %p3483 = pneg %p128
      $region46: #{rtdetr_forward.1} parent=43 // pred_check_branch
        %3485 = sbr.rel (%p3483) target = $region48
      $region47: #{rtdetr_forward.1} parent=43 // pred_region
        %p3486 = scmp.lt.s32.totalorder %s16, 1
        %s3487 = scalar_select %p3486, %s16, 1
        %s3488 = smul.addr %s3487, 8
        %s3489 = scalar_lea.vmem %s4, %s3488
      $region48: #{rtdetr_forward.1} parent=43 // pred_fallthru
        _
    $region44: #{rtdetr_forward.1} parent=5 // pred_fallthru
      _
  $region6: #{rtdetr_forward.1} parent=0 // loop_footer
    %s14 = sadd.s32 1, %s10
  $region7: #{rtdetr_forward.1} parent=0 // loop_footer_branch
    %9 = sbr.rel target = $region3
  $region8: #{rtdetr_forward.1} parent=0 // loop_exit
    _

</llo_original>
